<compile_context>
chip_gen: v6e
topology: v6e:2x2x1
jax: 0.10.0
libtpu: 0.0.40
codegen_flags: <defaults>
</compile_context>

<pallas_src>
import functools

import jax
import jax.numpy as jnp
from jax.experimental import pallas as pl
from jax.experimental.pallas import tpu as pltpu


# ----------------------------- fused classifier kernel -----------------------------
def _classifier_kernel(title_ref, text_ref,
                       t_wih_ref, t_whh_ref, t_gib_ref, t_bhn_ref,
                       x_wih_ref, x_whh_ref, x_gib_ref, x_bhn_ref,
                       fc_w_ref, fc_b_ref,
                       out_ref, *, batch, title_len, text_len, hp):
    B, Hp = batch, hp

    # Hoisted input projections: ONE fused (T*B, E) @ (E, 3*Hp) MXU matmul per encoder,
    # plus a single broadcast bias add over the whole slab.
    gi_t = (jnp.dot(title_ref[...], t_wih_ref[...], preferred_element_type=jnp.float32)
            + t_gib_ref[...])                                           # (Tt*B, 3*Hp)
    gi_x = (jnp.dot(text_ref[...], x_wih_ref[...], preferred_element_type=jnp.float32)
            + x_gib_ref[...])                                           # (Tx*B, 3*Hp)

    whh_t = t_whh_ref[...]                                              # (Hp, 3*Hp)
    whh_x = x_whh_ref[...]
    # Hoisted bias broadcasts (traced once, reused across the unrolled loop).
    bhn_t = jnp.broadcast_to(t_bhn_ref[...], (B, Hp))
    bhn_x = jnp.broadcast_to(x_bhn_ref[...], (B, Hp))

    def gru_step_t0(gi, bhn):
        # t = 0: h0 == 0, so the h @ W_hh terms vanish.
        r = jax.nn.sigmoid(gi[:, 0:Hp])
        z = jax.nn.sigmoid(gi[:, Hp:2 * Hp])
        n = jnp.tanh(gi[:, 2 * Hp:3 * Hp] + r * bhn)
        return (1.0 - z) * n

    def gru_step(h, gi, whh, bhn):
        # Single fused recurrent matmul; per-gate extracts are whole-vreg lane slices.
        gh = jnp.dot(h, whh, preferred_element_type=jnp.float32)        # (B, 3*Hp)
        r = jax.nn.sigmoid(gi[:, 0:Hp] + gh[:, 0:Hp])
        z = jax.nn.sigmoid(gi[:, Hp:2 * Hp] + gh[:, Hp:2 * Hp])
        n = jnp.tanh(gi[:, 2 * Hp:3 * Hp] + r * (gh[:, 2 * Hp:3 * Hp] + bhn))
        return (1.0 - z) * n + z * h

    h_t = gru_step_t0(gi_t[0:B, :], bhn_t)
    h_x = gru_step_t0(gi_x[0:B, :], bhn_x)

    # Interleaved recurrences over the shared timestep range (independent chains).
    shared = min(title_len, text_len)
    for t in range(1, shared):
        lo, hi = t * B, (t + 1) * B
        h_t = gru_step(h_t, gi_t[lo:hi, :], whh_t, bhn_t)
        h_x = gru_step(h_x, gi_x[lo:hi, :], whh_x, bhn_x)
    for t in range(shared, title_len):
        h_t = gru_step(h_t, gi_t[t * B:(t + 1) * B, :], whh_t, bhn_t)
    for t in range(shared, text_len):
        h_x = gru_step(h_x, gi_x[t * B:(t + 1) * B, :], whh_x, bhn_x)

    # Fused concat + Linear(2H, 1): VPU multiply + lane reduce.
    # (Dropout before the FC is identity at inference; padded h lanes are exactly 0.)
    logit = (jnp.sum(h_t * fc_w_ref[0:1, :], axis=-1, keepdims=True)
             + jnp.sum(h_x * fc_w_ref[1:2, :], axis=-1, keepdims=True)
             + fc_b_ref[...])                                           # (B, 1)
    out_ref[...] = logit


# ----------------------------- parameter prep -----------------------------
def _prep_gru_params(w_ih, w_hh, b_ih, b_hh, H, Hp):
    """Split PyTorch GRU weights per gate (r, z, n), transpose for x @ W, fuse the gates
    along the lane axis, and zero-pad H -> Hp so gate slices land on vreg boundaries."""
    w_ih = jnp.asarray(w_ih, jnp.float32)    # (3H, E)
    w_hh = jnp.asarray(w_hh, jnp.float32)    # (3H, H)
    b_ih = jnp.asarray(b_ih, jnp.float32)    # (3H,)
    b_hh = jnp.asarray(b_hh, jnp.float32)    # (3H,)
    E = w_ih.shape[1]
    pad_h = Hp - H

    wi = w_ih.reshape(3, H, E)               # gate order (r, z, n)
    wh = w_hh.reshape(3, H, H)
    bi = b_ih.reshape(3, H)
    bh = b_hh.reshape(3, H)

    # Fused input weights: (E, 3*Hp), gate columns [r | z | n], padded cols are zero.
    wih_fused = jnp.concatenate(
        [jnp.pad(wi[g].T, ((0, 0), (0, pad_h))) for g in range(3)], axis=1)
    # Fused recurrent weights: (Hp, 3*Hp); padded rows (for padded h lanes) and padded
    # gate columns are zero.
    whh_fused = jnp.concatenate(
        [jnp.pad(wh[g].T, ((0, pad_h), (0, pad_h))) for g in range(3)], axis=1)

    pad_b = lambda b: jnp.pad(b, (0, pad_h))
    # gi bias: [b_ir+b_hr | b_iz+b_hz | b_in]; b_hn must stay inside the r*(...) term.
    gi_bias = jnp.concatenate(
        [pad_b(bi[0] + bh[0]), pad_b(bi[1] + bh[1]), pad_b(bi[2])])[None, :]   # (1, 3*Hp)
    b_hn = pad_b(bh[2])[None, :]                                               # (1, Hp)
    return wih_fused, whh_fused, gi_bias, b_hn


# ----------------------------- wrapper -----------------------------
def fake_news_rnn_classifier(params, title_input, text_input):
    emb = jnp.asarray(params["embedding"], jnp.float32)   # (V, E)
    B, Tt = title_input.shape
    _, Tx = text_input.shape
    assert Tt >= 1 and Tx >= 1, "empty sequences are not supported"
    E = emb.shape[1]
    H = params["title_w_hh"].shape[1]
    Hp = ((H + 127) // 128) * 128                          # lane-aligned hidden width

    # Embedding lookup (gather) stays in XLA glue.  Transposing the *indices* first makes
    # the gather emit time-major data directly; the flatten to (T*B, E) is contiguous.
    title_tm = jnp.take(emb, title_input.T, axis=0).reshape(Tt * B, E)   # (Tt*B, E)
    text_tm = jnp.take(emb, text_input.T, axis=0).reshape(Tx * B, E)     # (Tx*B, E)

    t_wih, t_whh, t_gib, t_bhn = _prep_gru_params(
        params["title_w_ih"], params["title_w_hh"],
        params["title_b_ih"], params["title_b_hh"], H, Hp)
    x_wih, x_whh, x_gib, x_bhn = _prep_gru_params(
        params["text_w_ih"], params["text_w_hh"],
        params["text_b_ih"], params["text_b_hh"], H, Hp)

    # row 0 -> title half, row 1 -> text half of the concat; padded lanes zero.
    fc_w = jnp.pad(jnp.asarray(params["fc_w"], jnp.float32).reshape(2, H),
                   ((0, 0), (0, Hp - H)))
    fc_b = jnp.asarray(params["fc_b"], jnp.float32).reshape(1, 1)

    vmem = pl.BlockSpec(memory_space=pltpu.MemorySpace.VMEM)
    kernel = functools.partial(_classifier_kernel, batch=B,
                               title_len=Tt, text_len=Tx, hp=Hp)

    out = pl.pallas_call(
        kernel,
        out_shape=jax.ShapeDtypeStruct((B, 1), jnp.float32),
        in_specs=[vmem] * 12,
        out_specs=vmem,
    )(title_tm, text_tm,
      t_wih, t_whh, t_gib, t_bhn,
      x_wih, x_whh, x_gib, x_bhn,
      fc_w, fc_b)
    return out[:, 0]                                       # squeeze(1) -> (B,)


# ----------------------------- pure-JAX reference (sanity check) -----------------------------
def _gru_ref(emb_seq, w_ih, w_hh, b_ih, b_hh):
    B, T, E = emb_seq.shape
    H = w_hh.shape[1]

    def step(h, x):
        gi = x @ w_ih.T + b_ih
        gh = h @ w_hh.T + b_hh
        r = jax.nn.sigmoid(gi[:, :H] + gh[:, :H])
        z = jax.nn.sigmoid(gi[:, H:2 * H] + gh[:, H:2 * H])
        n = jnp.tanh(gi[:, 2 * H:] + r * gh[:, 2 * H:])
        return (1.0 - z) * n + z * h, None

    h0 = jnp.zeros((B, H), jnp.float32)
    h_last, _ = jax.lax.scan(step, h0, jnp.transpose(emb_seq, (1, 0, 2)))
    return h_last


def _forward_ref(params, title_input, text_input):
    emb = params["embedding"]
    ht = _gru_ref(jnp.take(emb, title_input, axis=0),
                  params["title_w_ih"], params["title_w_hh"],
                  params["title_b_ih"], params["title_b_hh"])
    hx = _gru_ref(jnp.take(emb, text_input, axis=0),
                  params["text_w_ih"], params["text_w_hh"],
                  params["text_b_ih"], params["text_b_hh"])
    combined = jnp.concatenate([ht, hx], axis=1)
    return (combined @ params["fc_w"].T + params["fc_b"])[:, 0]


# ----------------------------- parameter init -----------------------------
def init_params(key, vocab_size=50, embedding_dim=32, hidden_size=32):
    ks = jax.random.split(key, 12)
    k = 1.0 / jnp.sqrt(hidden_size)
    kf = 1.0 / jnp.sqrt(2 * hidden_size)
    u = lambda key, shape, bound: jax.random.uniform(key, shape, jnp.float32, -bound, bound)
    return {
        "embedding": jax.random.normal(ks[0], (vocab_size, embedding_dim), jnp.float32),
        "title_w_ih": u(ks[1], (3 * hidden_size, embedding_dim), k),
        "title_w_hh": u(ks[2], (3 * hidden_size, hidden_size), k),
        "title_b_ih": u(ks[3], (3 * hidden_size,), k),
        "title_b_hh": u(ks[4], (3 * hidden_size,), k),
        "text_w_ih": u(ks[5], (3 * hidden_size, embedding_dim), k),
        "text_w_hh": u(ks[6], (3 * hidden_size, hidden_size), k),
        "text_b_ih": u(ks[7], (3 * hidden_size,), k),
        "text_b_hh": u(ks[8], (3 * hidden_size,), k),
        "fc_w": u(ks[9], (1, 2 * hidden_size), kf),
        "fc_b": u(ks[10], (1,), kf),
    }


if __name__ == "__main__":
    key = jax.random.PRNGKey(0)
    vocab_size, embedding_dim, hidden_size = 50, 32, 32
    batch, title_len, text_len = 2, 8, 12

    params = init_params(key, vocab_size, embedding_dim, hidden_size)
    k1, k2 = jax.random.split(jax.random.PRNGKey(1))
    title_input = jax.random.randint(k1, (batch, title_len), 0, vocab_size, jnp.int32)
    text_input = jax.random.randint(k2, (batch, text_len), 0, vocab_size, jnp.int32)

    logits = jax.block_until_ready(
        jax.jit(fake_news_rnn_classifier)(params, title_input, text_input)
    )
    ref = jax.block_until_ready(_forward_ref(params, title_input, text_input))

    assert logits.shape == (batch,)
    assert jnp.allclose(logits, ref, atol=1e-4, rtol=1e-4), (logits, ref)
    print("KERNEL_OK")
</pallas_src>

<mosaic_0001>
module attributes {stable_mosaic.version = 11 : i64} {
  func.func @_classifier_kernel(%arg0: memref<16x32xf32, #tpu.memory_space<vmem>>, %arg1: memref<24x32xf32, #tpu.memory_space<vmem>>, %arg2: memref<32x384xf32, #tpu.memory_space<vmem>>, %arg3: memref<128x384xf32, #tpu.memory_space<vmem>>, %arg4: memref<1x384xf32, #tpu.memory_space<vmem>>, %arg5: memref<1x128xf32, #tpu.memory_space<vmem>>, %arg6: memref<32x384xf32, #tpu.memory_space<vmem>>, %arg7: memref<128x384xf32, #tpu.memory_space<vmem>>, %arg8: memref<1x384xf32, #tpu.memory_space<vmem>>, %arg9: memref<1x128xf32, #tpu.memory_space<vmem>>, %arg10: memref<2x128xf32, #tpu.memory_space<vmem>>, %arg11: memref<1x1xf32, #tpu.memory_space<vmem>>, %arg12: memref<2x1xf32, #tpu.memory_space<vmem>>) attributes {dimension_semantics = [], scalar_prefetch = 0 : i64, scratch_operands = 0 : i64, tpu.core_type = #tpu.core_type<tc>} {
    %c0 = arith.constant 0 : index
    %c0_0 = arith.constant 0 : index
    %0 = vector.load %arg0[%c0, %c0_0] : memref<16x32xf32, #tpu.memory_space<vmem>>, vector<16x32xf32>
    %c0_1 = arith.constant 0 : index
    %c0_2 = arith.constant 0 : index
    %1 = vector.load %arg2[%c0_1, %c0_2] : memref<32x384xf32, #tpu.memory_space<vmem>>, vector<32x384xf32>
    %cst = arith.constant dense<0.000000e+00> : vector<16x384xf32>
    %2 = tpu.matmul %0, %1, %cst {dimension_numbers = #tpu.dot_dimension_numbers<[1], [0], [0], [1], [0, 0, 1, 1], [], []>} : vector<16x32xf32>, vector<32x384xf32>, vector<16x384xf32> -> vector<16x384xf32>
    %c0_3 = arith.constant 0 : index
    %c0_4 = arith.constant 0 : index
    %3 = vector.load %arg4[%c0_3, %c0_4] : memref<1x384xf32, #tpu.memory_space<vmem>>, vector<1x384xf32>
    %4 = vector.broadcast %3 : vector<1x384xf32> to vector<16x384xf32>
    %5 = arith.addf %2, %4 : vector<16x384xf32>
    %c0_5 = arith.constant 0 : index
    %c0_6 = arith.constant 0 : index
    %6 = vector.load %arg1[%c0_5, %c0_6] : memref<24x32xf32, #tpu.memory_space<vmem>>, vector<24x32xf32>
    %c0_7 = arith.constant 0 : index
    %c0_8 = arith.constant 0 : index
    %7 = vector.load %arg6[%c0_7, %c0_8] : memref<32x384xf32, #tpu.memory_space<vmem>>, vector<32x384xf32>
    %cst_9 = arith.constant dense<0.000000e+00> : vector<24x384xf32>
    %8 = tpu.matmul %6, %7, %cst_9 {dimension_numbers = #tpu.dot_dimension_numbers<[1], [0], [0], [1], [0, 0, 1, 1], [], []>} : vector<24x32xf32>, vector<32x384xf32>, vector<24x384xf32> -> vector<24x384xf32>
    %c0_10 = arith.constant 0 : index
    %c0_11 = arith.constant 0 : index
    %9 = vector.load %arg8[%c0_10, %c0_11] : memref<1x384xf32, #tpu.memory_space<vmem>>, vector<1x384xf32>
    %10 = vector.broadcast %9 : vector<1x384xf32> to vector<24x384xf32>
    %11 = arith.addf %8, %10 : vector<24x384xf32>
    %c0_12 = arith.constant 0 : index
    %c0_13 = arith.constant 0 : index
    %12 = vector.load %arg3[%c0_12, %c0_13] : memref<128x384xf32, #tpu.memory_space<vmem>>, vector<128x384xf32>
    %c0_14 = arith.constant 0 : index
    %c0_15 = arith.constant 0 : index
    %13 = vector.load %arg7[%c0_14, %c0_15] : memref<128x384xf32, #tpu.memory_space<vmem>>, vector<128x384xf32>
    %c0_16 = arith.constant 0 : index
    %c0_17 = arith.constant 0 : index
    %14 = vector.load %arg5[%c0_16, %c0_17] : memref<1x128xf32, #tpu.memory_space<vmem>>, vector<1x128xf32>
    %15 = vector.shape_cast %14 : vector<1x128xf32> to vector<1x128xf32>
    %16 = vector.broadcast %15 : vector<1x128xf32> to vector<2x128xf32>
    %c0_18 = arith.constant 0 : index
    %c0_19 = arith.constant 0 : index
    %17 = vector.load %arg9[%c0_18, %c0_19] : memref<1x128xf32, #tpu.memory_space<vmem>>, vector<1x128xf32>
    %18 = vector.shape_cast %17 : vector<1x128xf32> to vector<1x128xf32>
    %19 = vector.broadcast %18 : vector<1x128xf32> to vector<2x128xf32>
    %20 = vector.extract_strided_slice %5 {offsets = [0, 0], sizes = [2, 384], strides = [1, 1]} : vector<16x384xf32> to vector<2x384xf32>
    %21 = vector.extract_strided_slice %20 {offsets = [0, 0], sizes = [2, 128], strides = [1, 1]} : vector<2x384xf32> to vector<2x128xf32>
    %22 = arith.negf %21 : vector<2x128xf32>
    %23 = math.exp %22 : vector<2x128xf32>
    %cst_20 = arith.constant 1.000000e+00 : f32
    %24 = vector.broadcast %cst_20 : f32 to vector<2x128xf32>
    %25 = arith.addf %24, %23 : vector<2x128xf32>
    %26 = arith.divf %24, %25 : vector<2x128xf32>
    %27 = vector.extract_strided_slice %20 {offsets = [0, 128], sizes = [2, 128], strides = [1, 1]} : vector<2x384xf32> to vector<2x128xf32>
    %28 = arith.negf %27 : vector<2x128xf32>
    %29 = math.exp %28 : vector<2x128xf32>
    %cst_21 = arith.constant 1.000000e+00 : f32
    %30 = vector.broadcast %cst_21 : f32 to vector<2x128xf32>
    %31 = arith.addf %30, %29 : vector<2x128xf32>
    %32 = arith.divf %30, %31 : vector<2x128xf32>
    %33 = vector.extract_strided_slice %20 {offsets = [0, 256], sizes = [2, 128], strides = [1, 1]} : vector<2x384xf32> to vector<2x128xf32>
    %34 = arith.mulf %26, %16 : vector<2x128xf32>
    %35 = arith.addf %33, %34 : vector<2x128xf32>
    %36 = math.tanh %35 : vector<2x128xf32>
    %cst_22 = arith.constant 1.000000e+00 : f32
    %37 = vector.broadcast %cst_22 : f32 to vector<2x128xf32>
    %38 = arith.subf %37, %32 : vector<2x128xf32>
    %39 = arith.mulf %38, %36 : vector<2x128xf32>
    %40 = vector.extract_strided_slice %11 {offsets = [0, 0], sizes = [2, 384], strides = [1, 1]} : vector<24x384xf32> to vector<2x384xf32>
    %41 = vector.extract_strided_slice %40 {offsets = [0, 0], sizes = [2, 128], strides = [1, 1]} : vector<2x384xf32> to vector<2x128xf32>
    %42 = arith.negf %41 : vector<2x128xf32>
    %43 = math.exp %42 : vector<2x128xf32>
    %cst_23 = arith.constant 1.000000e+00 : f32
    %44 = vector.broadcast %cst_23 : f32 to vector<2x128xf32>
    %45 = arith.addf %44, %43 : vector<2x128xf32>
    %46 = arith.divf %44, %45 : vector<2x128xf32>
    %47 = vector.extract_strided_slice %40 {offsets = [0, 128], sizes = [2, 128], strides = [1, 1]} : vector<2x384xf32> to vector<2x128xf32>
    %48 = arith.negf %47 : vector<2x128xf32>
    %49 = math.exp %48 : vector<2x128xf32>
    %cst_24 = arith.constant 1.000000e+00 : f32
    %50 = vector.broadcast %cst_24 : f32 to vector<2x128xf32>
    %51 = arith.addf %50, %49 : vector<2x128xf32>
    %52 = arith.divf %50, %51 : vector<2x128xf32>
    %53 = vector.extract_strided_slice %40 {offsets = [0, 256], sizes = [2, 128], strides = [1, 1]} : vector<2x384xf32> to vector<2x128xf32>
    %54 = arith.mulf %46, %19 : vector<2x128xf32>
    %55 = arith.addf %53, %54 : vector<2x128xf32>
    %56 = math.tanh %55 : vector<2x128xf32>
    %cst_25 = arith.constant 1.000000e+00 : f32
    %57 = vector.broadcast %cst_25 : f32 to vector<2x128xf32>
    %58 = arith.subf %57, %52 : vector<2x128xf32>
    %59 = arith.mulf %58, %56 : vector<2x128xf32>
    %60 = vector.extract_strided_slice %5 {offsets = [2, 0], sizes = [2, 384], strides = [1, 1]} : vector<16x384xf32> to vector<2x384xf32>
    %cst_26 = arith.constant dense<0.000000e+00> : vector<2x384xf32>
    %61 = tpu.matmul %39, %12, %cst_26 {dimension_numbers = #tpu.dot_dimension_numbers<[1], [0], [0], [1], [0, 0, 1, 1], [], []>} : vector<2x128xf32>, vector<128x384xf32>, vector<2x384xf32> -> vector<2x384xf32>
    %62 = vector.extract_strided_slice %60 {offsets = [0, 0], sizes = [2, 128], strides = [1, 1]} : vector<2x384xf32> to vector<2x128xf32>
    %63 = vector.extract_strided_slice %61 {offsets = [0, 0], sizes = [2, 128], strides = [1, 1]} : vector<2x384xf32> to vector<2x128xf32>
    %64 = arith.addf %62, %63 : vector<2x128xf32>
    %65 = arith.negf %64 : vector<2x128xf32>
    %66 = math.exp %65 : vector<2x128xf32>
    %cst_27 = arith.constant 1.000000e+00 : f32
    %67 = vector.broadcast %cst_27 : f32 to vector<2x128xf32>
    %68 = arith.addf %67, %66 : vector<2x128xf32>
    %69 = arith.divf %67, %68 : vector<2x128xf32>
    %70 = vector.extract_strided_slice %60 {offsets = [0, 128], sizes = [2, 128], strides = [1, 1]} : vector<2x384xf32> to vector<2x128xf32>
    %71 = vector.extract_strided_slice %61 {offsets = [0, 128], sizes = [2, 128], strides = [1, 1]} : vector<2x384xf32> to vector<2x128xf32>
    %72 = arith.addf %70, %71 : vector<2x128xf32>
    %73 = arith.negf %72 : vector<2x128xf32>
    %74 = math.exp %73 : vector<2x128xf32>
    %cst_28 = arith.constant 1.000000e+00 : f32
    %75 = vector.broadcast %cst_28 : f32 to vector<2x128xf32>
    %76 = arith.addf %75, %74 : vector<2x128xf32>
    %77 = arith.divf %75, %76 : vector<2x128xf32>
    %78 = vector.extract_strided_slice %60 {offsets = [0, 256], sizes = [2, 128], strides = [1, 1]} : vector<2x384xf32> to vector<2x128xf32>
    %79 = vector.extract_strided_slice %61 {offsets = [0, 256], sizes = [2, 128], strides = [1, 1]} : vector<2x384xf32> to vector<2x128xf32>
    %80 = arith.addf %79, %16 : vector<2x128xf32>
    %81 = arith.mulf %69, %80 : vector<2x128xf32>
    %82 = arith.addf %78, %81 : vector<2x128xf32>
    %83 = math.tanh %82 : vector<2x128xf32>
    %cst_29 = arith.constant 1.000000e+00 : f32
    %84 = vector.broadcast %cst_29 : f32 to vector<2x128xf32>
    %85 = arith.subf %84, %77 : vector<2x128xf32>
    %86 = arith.mulf %85, %83 : vector<2x128xf32>
    %87 = arith.mulf %77, %39 : vector<2x128xf32>
    %88 = arith.addf %86, %87 : vector<2x128xf32>
    %89 = vector.extract_strided_slice %11 {offsets = [2, 0], sizes = [2, 384], strides = [1, 1]} : vector<24x384xf32> to vector<2x384xf32>
    %cst_30 = arith.constant dense<0.000000e+00> : vector<2x384xf32>
    %90 = tpu.matmul %59, %13, %cst_30 {dimension_numbers = #tpu.dot_dimension_numbers<[1], [0], [0], [1], [0, 0, 1, 1], [], []>} : vector<2x128xf32>, vector<128x384xf32>, vector<2x384xf32> -> vector<2x384xf32>
    %91 = vector.extract_strided_slice %89 {offsets = [0, 0], sizes = [2, 128], strides = [1, 1]} : vector<2x384xf32> to vector<2x128xf32>
    %92 = vector.extract_strided_slice %90 {offsets = [0, 0], sizes = [2, 128], strides = [1, 1]} : vector<2x384xf32> to vector<2x128xf32>
    %93 = arith.addf %91, %92 : vector<2x128xf32>
    %94 = arith.negf %93 : vector<2x128xf32>
    %95 = math.exp %94 : vector<2x128xf32>
    %cst_31 = arith.constant 1.000000e+00 : f32
    %96 = vector.broadcast %cst_31 : f32 to vector<2x128xf32>
    %97 = arith.addf %96, %95 : vector<2x128xf32>
    %98 = arith.divf %96, %97 : vector<2x128xf32>
    %99 = vector.extract_strided_slice %89 {offsets = [0, 128], sizes = [2, 128], strides = [1, 1]} : vector<2x384xf32> to vector<2x128xf32>
    %100 = vector.extract_strided_slice %90 {offsets = [0, 128], sizes = [2, 128], strides = [1, 1]} : vector<2x384xf32> to vector<2x128xf32>
    %101 = arith.addf %99, %100 : vector<2x128xf32>
    %102 = arith.negf %101 : vector<2x128xf32>
    %103 = math.exp %102 : vector<2x128xf32>
    %cst_32 = arith.constant 1.000000e+00 : f32
    %104 = vector.broadcast %cst_32 : f32 to vector<2x128xf32>
    %105 = arith.addf %104, %103 : vector<2x128xf32>
    %106 = arith.divf %104, %105 : vector<2x128xf32>
    %107 = vector.extract_strided_slice %89 {offsets = [0, 256], sizes = [2, 128], strides = [1, 1]} : vector<2x384xf32> to vector<2x128xf32>
    %108 = vector.extract_strided_slice %90 {offsets = [0, 256], sizes = [2, 128], strides = [1, 1]} : vector<2x384xf32> to vector<2x128xf32>
    %109 = arith.addf %108, %19 : vector<2x128xf32>
    %110 = arith.mulf %98, %109 : vector<2x128xf32>
    %111 = arith.addf %107, %110 : vector<2x128xf32>
    %112 = math.tanh %111 : vector<2x128xf32>
    %cst_33 = arith.constant 1.000000e+00 : f32
    %113 = vector.broadcast %cst_33 : f32 to vector<2x128xf32>
    %114 = arith.subf %113, %106 : vector<2x128xf32>
    %115 = arith.mulf %114, %112 : vector<2x128xf32>
    %116 = arith.mulf %106, %59 : vector<2x128xf32>
    %117 = arith.addf %115, %116 : vector<2x128xf32>
    %118 = vector.extract_strided_slice %5 {offsets = [4, 0], sizes = [2, 384], strides = [1, 1]} : vector<16x384xf32> to vector<2x384xf32>
    %cst_34 = arith.constant dense<0.000000e+00> : vector<2x384xf32>
    %119 = tpu.matmul %88, %12, %cst_34 {dimension_numbers = #tpu.dot_dimension_numbers<[1], [0], [0], [1], [0, 0, 1, 1], [], []>} : vector<2x128xf32>, vector<128x384xf32>, vector<2x384xf32> -> vector<2x384xf32>
    %120 = vector.extract_strided_slice %118 {offsets = [0, 0], sizes = [2, 128], strides = [1, 1]} : vector<2x384xf32> to vector<2x128xf32>
    %121 = vector.extract_strided_slice %119 {offsets = [0, 0], sizes = [2, 128], strides = [1, 1]} : vector<2x384xf32> to vector<2x128xf32>
    %122 = arith.addf %120, %121 : vector<2x128xf32>
    %123 = arith.negf %122 : vector<2x128xf32>
    %124 = math.exp %123 : vector<2x128xf32>
    %cst_35 = arith.constant 1.000000e+00 : f32
    %125 = vector.broadcast %cst_35 : f32 to vector<2x128xf32>
    %126 = arith.addf %125, %124 : vector<2x128xf32>
    %127 = arith.divf %125, %126 : vector<2x128xf32>
    %128 = vector.extract_strided_slice %118 {offsets = [0, 128], sizes = [2, 128], strides = [1, 1]} : vector<2x384xf32> to vector<2x128xf32>
    %129 = vector.extract_strided_slice %119 {offsets = [0, 128], sizes = [2, 128], strides = [1, 1]} : vector<2x384xf32> to vector<2x128xf32>
    %130 = arith.addf %128, %129 : vector<2x128xf32>
    %131 = arith.negf %130 : vector<2x128xf32>
    %132 = math.exp %131 : vector<2x128xf32>
    %cst_36 = arith.constant 1.000000e+00 : f32
    %133 = vector.broadcast %cst_36 : f32 to vector<2x128xf32>
    %134 = arith.addf %133, %132 : vector<2x128xf32>
    %135 = arith.divf %133, %134 : vector<2x128xf32>
    %136 = vector.extract_strided_slice %118 {offsets = [0, 256], sizes = [2, 128], strides = [1, 1]} : vector<2x384xf32> to vector<2x128xf32>
    %137 = vector.extract_strided_slice %119 {offsets = [0, 256], sizes = [2, 128], strides = [1, 1]} : vector<2x384xf32> to vector<2x128xf32>
    %138 = arith.addf %137, %16 : vector<2x128xf32>
    %139 = arith.mulf %127, %138 : vector<2x128xf32>
    %140 = arith.addf %136, %139 : vector<2x128xf32>
    %141 = math.tanh %140 : vector<2x128xf32>
    %cst_37 = arith.constant 1.000000e+00 : f32
    %142 = vector.broadcast %cst_37 : f32 to vector<2x128xf32>
    %143 = arith.subf %142, %135 : vector<2x128xf32>
    %144 = arith.mulf %143, %141 : vector<2x128xf32>
    %145 = arith.mulf %135, %88 : vector<2x128xf32>
    %146 = arith.addf %144, %145 : vector<2x128xf32>
    %147 = vector.extract_strided_slice %11 {offsets = [4, 0], sizes = [2, 384], strides = [1, 1]} : vector<24x384xf32> to vector<2x384xf32>
    %cst_38 = arith.constant dense<0.000000e+00> : vector<2x384xf32>
    %148 = tpu.matmul %117, %13, %cst_38 {dimension_numbers = #tpu.dot_dimension_numbers<[1], [0], [0], [1], [0, 0, 1, 1], [], []>} : vector<2x128xf32>, vector<128x384xf32>, vector<2x384xf32> -> vector<2x384xf32>
    %149 = vector.extract_strided_slice %147 {offsets = [0, 0], sizes = [2, 128], strides = [1, 1]} : vector<2x384xf32> to vector<2x128xf32>
    %150 = vector.extract_strided_slice %148 {offsets = [0, 0], sizes = [2, 128], strides = [1, 1]} : vector<2x384xf32> to vector<2x128xf32>
    %151 = arith.addf %149, %150 : vector<2x128xf32>
    %152 = arith.negf %151 : vector<2x128xf32>
    %153 = math.exp %152 : vector<2x128xf32>
    %cst_39 = arith.constant 1.000000e+00 : f32
    %154 = vector.broadcast %cst_39 : f32 to vector<2x128xf32>
    %155 = arith.addf %154, %153 : vector<2x128xf32>
    %156 = arith.divf %154, %155 : vector<2x128xf32>
    %157 = vector.extract_strided_slice %147 {offsets = [0, 128], sizes = [2, 128], strides = [1, 1]} : vector<2x384xf32> to vector<2x128xf32>
    %158 = vector.extract_strided_slice %148 {offsets = [0, 128], sizes = [2, 128], strides = [1, 1]} : vector<2x384xf32> to vector<2x128xf32>
    %159 = arith.addf %157, %158 : vector<2x128xf32>
    %160 = arith.negf %159 : vector<2x128xf32>
    %161 = math.exp %160 : vector<2x128xf32>
    %cst_40 = arith.constant 1.000000e+00 : f32
    %162 = vector.broadcast %cst_40 : f32 to vector<2x128xf32>
    %163 = arith.addf %162, %161 : vector<2x128xf32>
    %164 = arith.divf %162, %163 : vector<2x128xf32>
    %165 = vector.extract_strided_slice %147 {offsets = [0, 256], sizes = [2, 128], strides = [1, 1]} : vector<2x384xf32> to vector<2x128xf32>
    %166 = vector.extract_strided_slice %148 {offsets = [0, 256], sizes = [2, 128], strides = [1, 1]} : vector<2x384xf32> to vector<2x128xf32>
    %167 = arith.addf %166, %19 : vector<2x128xf32>
    %168 = arith.mulf %156, %167 : vector<2x128xf32>
    %169 = arith.addf %165, %168 : vector<2x128xf32>
    %170 = math.tanh %169 : vector<2x128xf32>
    %cst_41 = arith.constant 1.000000e+00 : f32
    %171 = vector.broadcast %cst_41 : f32 to vector<2x128xf32>
    %172 = arith.subf %171, %164 : vector<2x128xf32>
    %173 = arith.mulf %172, %170 : vector<2x128xf32>
    %174 = arith.mulf %164, %117 : vector<2x128xf32>
    %175 = arith.addf %173, %174 : vector<2x128xf32>
    %176 = vector.extract_strided_slice %5 {offsets = [6, 0], sizes = [2, 384], strides = [1, 1]} : vector<16x384xf32> to vector<2x384xf32>
    %cst_42 = arith.constant dense<0.000000e+00> : vector<2x384xf32>
    %177 = tpu.matmul %146, %12, %cst_42 {dimension_numbers = #tpu.dot_dimension_numbers<[1], [0], [0], [1], [0, 0, 1, 1], [], []>} : vector<2x128xf32>, vector<128x384xf32>, vector<2x384xf32> -> vector<2x384xf32>
    %178 = vector.extract_strided_slice %176 {offsets = [0, 0], sizes = [2, 128], strides = [1, 1]} : vector<2x384xf32> to vector<2x128xf32>
    %179 = vector.extract_strided_slice %177 {offsets = [0, 0], sizes = [2, 128], strides = [1, 1]} : vector<2x384xf32> to vector<2x128xf32>
    %180 = arith.addf %178, %179 : vector<2x128xf32>
    %181 = arith.negf %180 : vector<2x128xf32>
    %182 = math.exp %181 : vector<2x128xf32>
    %cst_43 = arith.constant 1.000000e+00 : f32
    %183 = vector.broadcast %cst_43 : f32 to vector<2x128xf32>
    %184 = arith.addf %183, %182 : vector<2x128xf32>
    %185 = arith.divf %183, %184 : vector<2x128xf32>
    %186 = vector.extract_strided_slice %176 {offsets = [0, 128], sizes = [2, 128], strides = [1, 1]} : vector<2x384xf32> to vector<2x128xf32>
    %187 = vector.extract_strided_slice %177 {offsets = [0, 128], sizes = [2, 128], strides = [1, 1]} : vector<2x384xf32> to vector<2x128xf32>
    %188 = arith.addf %186, %187 : vector<2x128xf32>
    %189 = arith.negf %188 : vector<2x128xf32>
    %190 = math.exp %189 : vector<2x128xf32>
    %cst_44 = arith.constant 1.000000e+00 : f32
    %191 = vector.broadcast %cst_44 : f32 to vector<2x128xf32>
    %192 = arith.addf %191, %190 : vector<2x128xf32>
    %193 = arith.divf %191, %192 : vector<2x128xf32>
    %194 = vector.extract_strided_slice %176 {offsets = [0, 256], sizes = [2, 128], strides = [1, 1]} : vector<2x384xf32> to vector<2x128xf32>
    %195 = vector.extract_strided_slice %177 {offsets = [0, 256], sizes = [2, 128], strides = [1, 1]} : vector<2x384xf32> to vector<2x128xf32>
    %196 = arith.addf %195, %16 : vector<2x128xf32>
    %197 = arith.mulf %185, %196 : vector<2x128xf32>
    %198 = arith.addf %194, %197 : vector<2x128xf32>
    %199 = math.tanh %198 : vector<2x128xf32>
    %cst_45 = arith.constant 1.000000e+00 : f32
    %200 = vector.broadcast %cst_45 : f32 to vector<2x128xf32>
    %201 = arith.subf %200, %193 : vector<2x128xf32>
    %202 = arith.mulf %201, %199 : vector<2x128xf32>
    %203 = arith.mulf %193, %146 : vector<2x128xf32>
    %204 = arith.addf %202, %203 : vector<2x128xf32>
    %205 = vector.extract_strided_slice %11 {offsets = [6, 0], sizes = [2, 384], strides = [1, 1]} : vector<24x384xf32> to vector<2x384xf32>
    %cst_46 = arith.constant dense<0.000000e+00> : vector<2x384xf32>
    %206 = tpu.matmul %175, %13, %cst_46 {dimension_numbers = #tpu.dot_dimension_numbers<[1], [0], [0], [1], [0, 0, 1, 1], [], []>} : vector<2x128xf32>, vector<128x384xf32>, vector<2x384xf32> -> vector<2x384xf32>
    %207 = vector.extract_strided_slice %205 {offsets = [0, 0], sizes = [2, 128], strides = [1, 1]} : vector<2x384xf32> to vector<2x128xf32>
    %208 = vector.extract_strided_slice %206 {offsets = [0, 0], sizes = [2, 128], strides = [1, 1]} : vector<2x384xf32> to vector<2x128xf32>
    %209 = arith.addf %207, %208 : vector<2x128xf32>
    %210 = arith.negf %209 : vector<2x128xf32>
    %211 = math.exp %210 : vector<2x128xf32>
    %cst_47 = arith.constant 1.000000e+00 : f32
    %212 = vector.broadcast %cst_47 : f32 to vector<2x128xf32>
    %213 = arith.addf %212, %211 : vector<2x128xf32>
    %214 = arith.divf %212, %213 : vector<2x128xf32>
    %215 = vector.extract_strided_slice %205 {offsets = [0, 128], sizes = [2, 128], strides = [1, 1]} : vector<2x384xf32> to vector<2x128xf32>
    %216 = vector.extract_strided_slice %206 {offsets = [0, 128], sizes = [2, 128], strides = [1, 1]} : vector<2x384xf32> to vector<2x128xf32>
    %217 = arith.addf %215, %216 : vector<2x128xf32>
    %218 = arith.negf %217 : vector<2x128xf32>
    %219 = math.exp %218 : vector<2x128xf32>
    %cst_48 = arith.constant 1.000000e+00 : f32
    %220 = vector.broadcast %cst_48 : f32 to vector<2x128xf32>
    %221 = arith.addf %220, %219 : vector<2x128xf32>
    %222 = arith.divf %220, %221 : vector<2x128xf32>
    %223 = vector.extract_strided_slice %205 {offsets = [0, 256], sizes = [2, 128], strides = [1, 1]} : vector<2x384xf32> to vector<2x128xf32>
    %224 = vector.extract_strided_slice %206 {offsets = [0, 256], sizes = [2, 128], strides = [1, 1]} : vector<2x384xf32> to vector<2x128xf32>
    %225 = arith.addf %224, %19 : vector<2x128xf32>
    %226 = arith.mulf %214, %225 : vector<2x128xf32>
    %227 = arith.addf %223, %226 : vector<2x128xf32>
    %228 = math.tanh %227 : vector<2x128xf32>
    %cst_49 = arith.constant 1.000000e+00 : f32
    %229 = vector.broadcast %cst_49 : f32 to vector<2x128xf32>
    %230 = arith.subf %229, %222 : vector<2x128xf32>
    %231 = arith.mulf %230, %228 : vector<2x128xf32>
    %232 = arith.mulf %222, %175 : vector<2x128xf32>
    %233 = arith.addf %231, %232 : vector<2x128xf32>
    %234 = vector.extract_strided_slice %5 {offsets = [8, 0], sizes = [2, 384], strides = [1, 1]} : vector<16x384xf32> to vector<2x384xf32>
    %cst_50 = arith.constant dense<0.000000e+00> : vector<2x384xf32>
    %235 = tpu.matmul %204, %12, %cst_50 {dimension_numbers = #tpu.dot_dimension_numbers<[1], [0], [0], [1], [0, 0, 1, 1], [], []>} : vector<2x128xf32>, vector<128x384xf32>, vector<2x384xf32> -> vector<2x384xf32>
    %236 = vector.extract_strided_slice %234 {offsets = [0, 0], sizes = [2, 128], strides = [1, 1]} : vector<2x384xf32> to vector<2x128xf32>
    %237 = vector.extract_strided_slice %235 {offsets = [0, 0], sizes = [2, 128], strides = [1, 1]} : vector<2x384xf32> to vector<2x128xf32>
    %238 = arith.addf %236, %237 : vector<2x128xf32>
    %239 = arith.negf %238 : vector<2x128xf32>
    %240 = math.exp %239 : vector<2x128xf32>
    %cst_51 = arith.constant 1.000000e+00 : f32
    %241 = vector.broadcast %cst_51 : f32 to vector<2x128xf32>
    %242 = arith.addf %241, %240 : vector<2x128xf32>
    %243 = arith.divf %241, %242 : vector<2x128xf32>
    %244 = vector.extract_strided_slice %234 {offsets = [0, 128], sizes = [2, 128], strides = [1, 1]} : vector<2x384xf32> to vector<2x128xf32>
    %245 = vector.extract_strided_slice %235 {offsets = [0, 128], sizes = [2, 128], strides = [1, 1]} : vector<2x384xf32> to vector<2x128xf32>
    %246 = arith.addf %244, %245 : vector<2x128xf32>
    %247 = arith.negf %246 : vector<2x128xf32>
    %248 = math.exp %247 : vector<2x128xf32>
    %cst_52 = arith.constant 1.000000e+00 : f32
    %249 = vector.broadcast %cst_52 : f32 to vector<2x128xf32>
    %250 = arith.addf %249, %248 : vector<2x128xf32>
    %251 = arith.divf %249, %250 : vector<2x128xf32>
    %252 = vector.extract_strided_slice %234 {offsets = [0, 256], sizes = [2, 128], strides = [1, 1]} : vector<2x384xf32> to vector<2x128xf32>
    %253 = vector.extract_strided_slice %235 {offsets = [0, 256], sizes = [2, 128], strides = [1, 1]} : vector<2x384xf32> to vector<2x128xf32>
    %254 = arith.addf %253, %16 : vector<2x128xf32>
    %255 = arith.mulf %243, %254 : vector<2x128xf32>
    %256 = arith.addf %252, %255 : vector<2x128xf32>
    %257 = math.tanh %256 : vector<2x128xf32>
    %cst_53 = arith.constant 1.000000e+00 : f32
    %258 = vector.broadcast %cst_53 : f32 to vector<2x128xf32>
    %259 = arith.subf %258, %251 : vector<2x128xf32>
    %260 = arith.mulf %259, %257 : vector<2x128xf32>
    %261 = arith.mulf %251, %204 : vector<2x128xf32>
    %262 = arith.addf %260, %261 : vector<2x128xf32>
    %263 = vector.extract_strided_slice %11 {offsets = [8, 0], sizes = [2, 384], strides = [1, 1]} : vector<24x384xf32> to vector<2x384xf32>
    %cst_54 = arith.constant dense<0.000000e+00> : vector<2x384xf32>
    %264 = tpu.matmul %233, %13, %cst_54 {dimension_numbers = #tpu.dot_dimension_numbers<[1], [0], [0], [1], [0, 0, 1, 1], [], []>} : vector<2x128xf32>, vector<128x384xf32>, vector<2x384xf32> -> vector<2x384xf32>
    %265 = vector.extract_strided_slice %263 {offsets = [0, 0], sizes = [2, 128], strides = [1, 1]} : vector<2x384xf32> to vector<2x128xf32>
    %266 = vector.extract_strided_slice %264 {offsets = [0, 0], sizes = [2, 128], strides = [1, 1]} : vector<2x384xf32> to vector<2x128xf32>
    %267 = arith.addf %265, %266 : vector<2x128xf32>
    %268 = arith.negf %267 : vector<2x128xf32>
    %269 = math.exp %268 : vector<2x128xf32>
    %cst_55 = arith.constant 1.000000e+00 : f32
    %270 = vector.broadcast %cst_55 : f32 to vector<2x128xf32>
    %271 = arith.addf %270, %269 : vector<2x128xf32>
    %272 = arith.divf %270, %271 : vector<2x128xf32>
    %273 = vector.extract_strided_slice %263 {offsets = [0, 128], sizes = [2, 128], strides = [1, 1]} : vector<2x384xf32> to vector<2x128xf32>
    %274 = vector.extract_strided_slice %264 {offsets = [0, 128], sizes = [2, 128], strides = [1, 1]} : vector<2x384xf32> to vector<2x128xf32>
    %275 = arith.addf %273, %274 : vector<2x128xf32>
    %276 = arith.negf %275 : vector<2x128xf32>
    %277 = math.exp %276 : vector<2x128xf32>
    %cst_56 = arith.constant 1.000000e+00 : f32
    %278 = vector.broadcast %cst_56 : f32 to vector<2x128xf32>
    %279 = arith.addf %278, %277 : vector<2x128xf32>
    %280 = arith.divf %278, %279 : vector<2x128xf32>
    %281 = vector.extract_strided_slice %263 {offsets = [0, 256], sizes = [2, 128], strides = [1, 1]} : vector<2x384xf32> to vector<2x128xf32>
    %282 = vector.extract_strided_slice %264 {offsets = [0, 256], sizes = [2, 128], strides = [1, 1]} : vector<2x384xf32> to vector<2x128xf32>
    %283 = arith.addf %282, %19 : vector<2x128xf32>
    %284 = arith.mulf %272, %283 : vector<2x128xf32>
    %285 = arith.addf %281, %284 : vector<2x128xf32>
    %286 = math.tanh %285 : vector<2x128xf32>
    %cst_57 = arith.constant 1.000000e+00 : f32
    %287 = vector.broadcast %cst_57 : f32 to vector<2x128xf32>
    %288 = arith.subf %287, %280 : vector<2x128xf32>
    %289 = arith.mulf %288, %286 : vector<2x128xf32>
    %290 = arith.mulf %280, %233 : vector<2x128xf32>
    %291 = arith.addf %289, %290 : vector<2x128xf32>
    %292 = vector.extract_strided_slice %5 {offsets = [10, 0], sizes = [2, 384], strides = [1, 1]} : vector<16x384xf32> to vector<2x384xf32>
    %cst_58 = arith.constant dense<0.000000e+00> : vector<2x384xf32>
    %293 = tpu.matmul %262, %12, %cst_58 {dimension_numbers = #tpu.dot_dimension_numbers<[1], [0], [0], [1], [0, 0, 1, 1], [], []>} : vector<2x128xf32>, vector<128x384xf32>, vector<2x384xf32> -> vector<2x384xf32>
    %294 = vector.extract_strided_slice %292 {offsets = [0, 0], sizes = [2, 128], strides = [1, 1]} : vector<2x384xf32> to vector<2x128xf32>
    %295 = vector.extract_strided_slice %293 {offsets = [0, 0], sizes = [2, 128], strides = [1, 1]} : vector<2x384xf32> to vector<2x128xf32>
    %296 = arith.addf %294, %295 : vector<2x128xf32>
    %297 = arith.negf %296 : vector<2x128xf32>
    %298 = math.exp %297 : vector<2x128xf32>
    %cst_59 = arith.constant 1.000000e+00 : f32
    %299 = vector.broadcast %cst_59 : f32 to vector<2x128xf32>
    %300 = arith.addf %299, %298 : vector<2x128xf32>
    %301 = arith.divf %299, %300 : vector<2x128xf32>
    %302 = vector.extract_strided_slice %292 {offsets = [0, 128], sizes = [2, 128], strides = [1, 1]} : vector<2x384xf32> to vector<2x128xf32>
    %303 = vector.extract_strided_slice %293 {offsets = [0, 128], sizes = [2, 128], strides = [1, 1]} : vector<2x384xf32> to vector<2x128xf32>
    %304 = arith.addf %302, %303 : vector<2x128xf32>
    %305 = arith.negf %304 : vector<2x128xf32>
    %306 = math.exp %305 : vector<2x128xf32>
    %cst_60 = arith.constant 1.000000e+00 : f32
    %307 = vector.broadcast %cst_60 : f32 to vector<2x128xf32>
    %308 = arith.addf %307, %306 : vector<2x128xf32>
    %309 = arith.divf %307, %308 : vector<2x128xf32>
    %310 = vector.extract_strided_slice %292 {offsets = [0, 256], sizes = [2, 128], strides = [1, 1]} : vector<2x384xf32> to vector<2x128xf32>
    %311 = vector.extract_strided_slice %293 {offsets = [0, 256], sizes = [2, 128], strides = [1, 1]} : vector<2x384xf32> to vector<2x128xf32>
    %312 = arith.addf %311, %16 : vector<2x128xf32>
    %313 = arith.mulf %301, %312 : vector<2x128xf32>
    %314 = arith.addf %310, %313 : vector<2x128xf32>
    %315 = math.tanh %314 : vector<2x128xf32>
    %cst_61 = arith.constant 1.000000e+00 : f32
    %316 = vector.broadcast %cst_61 : f32 to vector<2x128xf32>
    %317 = arith.subf %316, %309 : vector<2x128xf32>
    %318 = arith.mulf %317, %315 : vector<2x128xf32>
    %319 = arith.mulf %309, %262 : vector<2x128xf32>
    %320 = arith.addf %318, %319 : vector<2x128xf32>
    %321 = vector.extract_strided_slice %11 {offsets = [10, 0], sizes = [2, 384], strides = [1, 1]} : vector<24x384xf32> to vector<2x384xf32>
    %cst_62 = arith.constant dense<0.000000e+00> : vector<2x384xf32>
    %322 = tpu.matmul %291, %13, %cst_62 {dimension_numbers = #tpu.dot_dimension_numbers<[1], [0], [0], [1], [0, 0, 1, 1], [], []>} : vector<2x128xf32>, vector<128x384xf32>, vector<2x384xf32> -> vector<2x384xf32>
    %323 = vector.extract_strided_slice %321 {offsets = [0, 0], sizes = [2, 128], strides = [1, 1]} : vector<2x384xf32> to vector<2x128xf32>
    %324 = vector.extract_strided_slice %322 {offsets = [0, 0], sizes = [2, 128], strides = [1, 1]} : vector<2x384xf32> to vector<2x128xf32>
    %325 = arith.addf %323, %324 : vector<2x128xf32>
    %326 = arith.negf %325 : vector<2x128xf32>
    %327 = math.exp %326 : vector<2x128xf32>
    %cst_63 = arith.constant 1.000000e+00 : f32
    %328 = vector.broadcast %cst_63 : f32 to vector<2x128xf32>
    %329 = arith.addf %328, %327 : vector<2x128xf32>
    %330 = arith.divf %328, %329 : vector<2x128xf32>
    %331 = vector.extract_strided_slice %321 {offsets = [0, 128], sizes = [2, 128], strides = [1, 1]} : vector<2x384xf32> to vector<2x128xf32>
    %332 = vector.extract_strided_slice %322 {offsets = [0, 128], sizes = [2, 128], strides = [1, 1]} : vector<2x384xf32> to vector<2x128xf32>
    %333 = arith.addf %331, %332 : vector<2x128xf32>
    %334 = arith.negf %333 : vector<2x128xf32>
    %335 = math.exp %334 : vector<2x128xf32>
    %cst_64 = arith.constant 1.000000e+00 : f32
    %336 = vector.broadcast %cst_64 : f32 to vector<2x128xf32>
    %337 = arith.addf %336, %335 : vector<2x128xf32>
    %338 = arith.divf %336, %337 : vector<2x128xf32>
    %339 = vector.extract_strided_slice %321 {offsets = [0, 256], sizes = [2, 128], strides = [1, 1]} : vector<2x384xf32> to vector<2x128xf32>
    %340 = vector.extract_strided_slice %322 {offsets = [0, 256], sizes = [2, 128], strides = [1, 1]} : vector<2x384xf32> to vector<2x128xf32>
    %341 = arith.addf %340, %19 : vector<2x128xf32>
    %342 = arith.mulf %330, %341 : vector<2x128xf32>
    %343 = arith.addf %339, %342 : vector<2x128xf32>
    %344 = math.tanh %343 : vector<2x128xf32>
    %cst_65 = arith.constant 1.000000e+00 : f32
    %345 = vector.broadcast %cst_65 : f32 to vector<2x128xf32>
    %346 = arith.subf %345, %338 : vector<2x128xf32>
    %347 = arith.mulf %346, %344 : vector<2x128xf32>
    %348 = arith.mulf %338, %291 : vector<2x128xf32>
    %349 = arith.addf %347, %348 : vector<2x128xf32>
    %350 = vector.extract_strided_slice %5 {offsets = [12, 0], sizes = [2, 384], strides = [1, 1]} : vector<16x384xf32> to vector<2x384xf32>
    %cst_66 = arith.constant dense<0.000000e+00> : vector<2x384xf32>
    %351 = tpu.matmul %320, %12, %cst_66 {dimension_numbers = #tpu.dot_dimension_numbers<[1], [0], [0], [1], [0, 0, 1, 1], [], []>} : vector<2x128xf32>, vector<128x384xf32>, vector<2x384xf32> -> vector<2x384xf32>
    %352 = vector.extract_strided_slice %350 {offsets = [0, 0], sizes = [2, 128], strides = [1, 1]} : vector<2x384xf32> to vector<2x128xf32>
    %353 = vector.extract_strided_slice %351 {offsets = [0, 0], sizes = [2, 128], strides = [1, 1]} : vector<2x384xf32> to vector<2x128xf32>
    %354 = arith.addf %352, %353 : vector<2x128xf32>
    %355 = arith.negf %354 : vector<2x128xf32>
    %356 = math.exp %355 : vector<2x128xf32>
    %cst_67 = arith.constant 1.000000e+00 : f32
    %357 = vector.broadcast %cst_67 : f32 to vector<2x128xf32>
    %358 = arith.addf %357, %356 : vector<2x128xf32>
    %359 = arith.divf %357, %358 : vector<2x128xf32>
    %360 = vector.extract_strided_slice %350 {offsets = [0, 128], sizes = [2, 128], strides = [1, 1]} : vector<2x384xf32> to vector<2x128xf32>
    %361 = vector.extract_strided_slice %351 {offsets = [0, 128], sizes = [2, 128], strides = [1, 1]} : vector<2x384xf32> to vector<2x128xf32>
    %362 = arith.addf %360, %361 : vector<2x128xf32>
    %363 = arith.negf %362 : vector<2x128xf32>
    %364 = math.exp %363 : vector<2x128xf32>
    %cst_68 = arith.constant 1.000000e+00 : f32
    %365 = vector.broadcast %cst_68 : f32 to vector<2x128xf32>
    %366 = arith.addf %365, %364 : vector<2x128xf32>
    %367 = arith.divf %365, %366 : vector<2x128xf32>
    %368 = vector.extract_strided_slice %350 {offsets = [0, 256], sizes = [2, 128], strides = [1, 1]} : vector<2x384xf32> to vector<2x128xf32>
    %369 = vector.extract_strided_slice %351 {offsets = [0, 256], sizes = [2, 128], strides = [1, 1]} : vector<2x384xf32> to vector<2x128xf32>
    %370 = arith.addf %369, %16 : vector<2x128xf32>
    %371 = arith.mulf %359, %370 : vector<2x128xf32>
    %372 = arith.addf %368, %371 : vector<2x128xf32>
    %373 = math.tanh %372 : vector<2x128xf32>
    %cst_69 = arith.constant 1.000000e+00 : f32
    %374 = vector.broadcast %cst_69 : f32 to vector<2x128xf32>
    %375 = arith.subf %374, %367 : vector<2x128xf32>
    %376 = arith.mulf %375, %373 : vector<2x128xf32>
    %377 = arith.mulf %367, %320 : vector<2x128xf32>
    %378 = arith.addf %376, %377 : vector<2x128xf32>
    %379 = vector.extract_strided_slice %11 {offsets = [12, 0], sizes = [2, 384], strides = [1, 1]} : vector<24x384xf32> to vector<2x384xf32>
    %cst_70 = arith.constant dense<0.000000e+00> : vector<2x384xf32>
    %380 = tpu.matmul %349, %13, %cst_70 {dimension_numbers = #tpu.dot_dimension_numbers<[1], [0], [0], [1], [0, 0, 1, 1], [], []>} : vector<2x128xf32>, vector<128x384xf32>, vector<2x384xf32> -> vector<2x384xf32>
    %381 = vector.extract_strided_slice %379 {offsets = [0, 0], sizes = [2, 128], strides = [1, 1]} : vector<2x384xf32> to vector<2x128xf32>
    %382 = vector.extract_strided_slice %380 {offsets = [0, 0], sizes = [2, 128], strides = [1, 1]} : vector<2x384xf32> to vector<2x128xf32>
    %383 = arith.addf %381, %382 : vector<2x128xf32>
    %384 = arith.negf %383 : vector<2x128xf32>
    %385 = math.exp %384 : vector<2x128xf32>
    %cst_71 = arith.constant 1.000000e+00 : f32
    %386 = vector.broadcast %cst_71 : f32 to vector<2x128xf32>
    %387 = arith.addf %386, %385 : vector<2x128xf32>
    %388 = arith.divf %386, %387 : vector<2x128xf32>
    %389 = vector.extract_strided_slice %379 {offsets = [0, 128], sizes = [2, 128], strides = [1, 1]} : vector<2x384xf32> to vector<2x128xf32>
    %390 = vector.extract_strided_slice %380 {offsets = [0, 128], sizes = [2, 128], strides = [1, 1]} : vector<2x384xf32> to vector<2x128xf32>
    %391 = arith.addf %389, %390 : vector<2x128xf32>
    %392 = arith.negf %391 : vector<2x128xf32>
    %393 = math.exp %392 : vector<2x128xf32>
    %cst_72 = arith.constant 1.000000e+00 : f32
    %394 = vector.broadcast %cst_72 : f32 to vector<2x128xf32>
    %395 = arith.addf %394, %393 : vector<2x128xf32>
    %396 = arith.divf %394, %395 : vector<2x128xf32>
    %397 = vector.extract_strided_slice %379 {offsets = [0, 256], sizes = [2, 128], strides = [1, 1]} : vector<2x384xf32> to vector<2x128xf32>
    %398 = vector.extract_strided_slice %380 {offsets = [0, 256], sizes = [2, 128], strides = [1, 1]} : vector<2x384xf32> to vector<2x128xf32>
    %399 = arith.addf %398, %19 : vector<2x128xf32>
    %400 = arith.mulf %388, %399 : vector<2x128xf32>
    %401 = arith.addf %397, %400 : vector<2x128xf32>
    %402 = math.tanh %401 : vector<2x128xf32>
    %cst_73 = arith.constant 1.000000e+00 : f32
    %403 = vector.broadcast %cst_73 : f32 to vector<2x128xf32>
    %404 = arith.subf %403, %396 : vector<2x128xf32>
    %405 = arith.mulf %404, %402 : vector<2x128xf32>
    %406 = arith.mulf %396, %349 : vector<2x128xf32>
    %407 = arith.addf %405, %406 : vector<2x128xf32>
    %408 = vector.extract_strided_slice %5 {offsets = [14, 0], sizes = [2, 384], strides = [1, 1]} : vector<16x384xf32> to vector<2x384xf32>
    %cst_74 = arith.constant dense<0.000000e+00> : vector<2x384xf32>
    %409 = tpu.matmul %378, %12, %cst_74 {dimension_numbers = #tpu.dot_dimension_numbers<[1], [0], [0], [1], [0, 0, 1, 1], [], []>} : vector<2x128xf32>, vector<128x384xf32>, vector<2x384xf32> -> vector<2x384xf32>
    %410 = vector.extract_strided_slice %408 {offsets = [0, 0], sizes = [2, 128], strides = [1, 1]} : vector<2x384xf32> to vector<2x128xf32>
    %411 = vector.extract_strided_slice %409 {offsets = [0, 0], sizes = [2, 128], strides = [1, 1]} : vector<2x384xf32> to vector<2x128xf32>
    %412 = arith.addf %410, %411 : vector<2x128xf32>
    %413 = arith.negf %412 : vector<2x128xf32>
    %414 = math.exp %413 : vector<2x128xf32>
    %cst_75 = arith.constant 1.000000e+00 : f32
    %415 = vector.broadcast %cst_75 : f32 to vector<2x128xf32>
    %416 = arith.addf %415, %414 : vector<2x128xf32>
    %417 = arith.divf %415, %416 : vector<2x128xf32>
    %418 = vector.extract_strided_slice %408 {offsets = [0, 128], sizes = [2, 128], strides = [1, 1]} : vector<2x384xf32> to vector<2x128xf32>
    %419 = vector.extract_strided_slice %409 {offsets = [0, 128], sizes = [2, 128], strides = [1, 1]} : vector<2x384xf32> to vector<2x128xf32>
    %420 = arith.addf %418, %419 : vector<2x128xf32>
    %421 = arith.negf %420 : vector<2x128xf32>
    %422 = math.exp %421 : vector<2x128xf32>
    %cst_76 = arith.constant 1.000000e+00 : f32
    %423 = vector.broadcast %cst_76 : f32 to vector<2x128xf32>
    %424 = arith.addf %423, %422 : vector<2x128xf32>
    %425 = arith.divf %423, %424 : vector<2x128xf32>
    %426 = vector.extract_strided_slice %408 {offsets = [0, 256], sizes = [2, 128], strides = [1, 1]} : vector<2x384xf32> to vector<2x128xf32>
    %427 = vector.extract_strided_slice %409 {offsets = [0, 256], sizes = [2, 128], strides = [1, 1]} : vector<2x384xf32> to vector<2x128xf32>
    %428 = arith.addf %427, %16 : vector<2x128xf32>
    %429 = arith.mulf %417, %428 : vector<2x128xf32>
    %430 = arith.addf %426, %429 : vector<2x128xf32>
    %431 = math.tanh %430 : vector<2x128xf32>
    %cst_77 = arith.constant 1.000000e+00 : f32
    %432 = vector.broadcast %cst_77 : f32 to vector<2x128xf32>
    %433 = arith.subf %432, %425 : vector<2x128xf32>
    %434 = arith.mulf %433, %431 : vector<2x128xf32>
    %435 = arith.mulf %425, %378 : vector<2x128xf32>
    %436 = arith.addf %434, %435 : vector<2x128xf32>
    %437 = vector.extract_strided_slice %11 {offsets = [14, 0], sizes = [2, 384], strides = [1, 1]} : vector<24x384xf32> to vector<2x384xf32>
    %cst_78 = arith.constant dense<0.000000e+00> : vector<2x384xf32>
    %438 = tpu.matmul %407, %13, %cst_78 {dimension_numbers = #tpu.dot_dimension_numbers<[1], [0], [0], [1], [0, 0, 1, 1], [], []>} : vector<2x128xf32>, vector<128x384xf32>, vector<2x384xf32> -> vector<2x384xf32>
    %439 = vector.extract_strided_slice %437 {offsets = [0, 0], sizes = [2, 128], strides = [1, 1]} : vector<2x384xf32> to vector<2x128xf32>
    %440 = vector.extract_strided_slice %438 {offsets = [0, 0], sizes = [2, 128], strides = [1, 1]} : vector<2x384xf32> to vector<2x128xf32>
    %441 = arith.addf %439, %440 : vector<2x128xf32>
    %442 = arith.negf %441 : vector<2x128xf32>
    %443 = math.exp %442 : vector<2x128xf32>
    %cst_79 = arith.constant 1.000000e+00 : f32
    %444 = vector.broadcast %cst_79 : f32 to vector<2x128xf32>
    %445 = arith.addf %444, %443 : vector<2x128xf32>
    %446 = arith.divf %444, %445 : vector<2x128xf32>
    %447 = vector.extract_strided_slice %437 {offsets = [0, 128], sizes = [2, 128], strides = [1, 1]} : vector<2x384xf32> to vector<2x128xf32>
    %448 = vector.extract_strided_slice %438 {offsets = [0, 128], sizes = [2, 128], strides = [1, 1]} : vector<2x384xf32> to vector<2x128xf32>
    %449 = arith.addf %447, %448 : vector<2x128xf32>
    %450 = arith.negf %449 : vector<2x128xf32>
    %451 = math.exp %450 : vector<2x128xf32>
    %cst_80 = arith.constant 1.000000e+00 : f32
    %452 = vector.broadcast %cst_80 : f32 to vector<2x128xf32>
    %453 = arith.addf %452, %451 : vector<2x128xf32>
    %454 = arith.divf %452, %453 : vector<2x128xf32>
    %455 = vector.extract_strided_slice %437 {offsets = [0, 256], sizes = [2, 128], strides = [1, 1]} : vector<2x384xf32> to vector<2x128xf32>
    %456 = vector.extract_strided_slice %438 {offsets = [0, 256], sizes = [2, 128], strides = [1, 1]} : vector<2x384xf32> to vector<2x128xf32>
    %457 = arith.addf %456, %19 : vector<2x128xf32>
    %458 = arith.mulf %446, %457 : vector<2x128xf32>
    %459 = arith.addf %455, %458 : vector<2x128xf32>
    %460 = math.tanh %459 : vector<2x128xf32>
    %cst_81 = arith.constant 1.000000e+00 : f32
    %461 = vector.broadcast %cst_81 : f32 to vector<2x128xf32>
    %462 = arith.subf %461, %454 : vector<2x128xf32>
    %463 = arith.mulf %462, %460 : vector<2x128xf32>
    %464 = arith.mulf %454, %407 : vector<2x128xf32>
    %465 = arith.addf %463, %464 : vector<2x128xf32>
    %466 = vector.extract_strided_slice %11 {offsets = [16, 0], sizes = [2, 384], strides = [1, 1]} : vector<24x384xf32> to vector<2x384xf32>
    %cst_82 = arith.constant dense<0.000000e+00> : vector<2x384xf32>
    %467 = tpu.matmul %465, %13, %cst_82 {dimension_numbers = #tpu.dot_dimension_numbers<[1], [0], [0], [1], [0, 0, 1, 1], [], []>} : vector<2x128xf32>, vector<128x384xf32>, vector<2x384xf32> -> vector<2x384xf32>
    %468 = vector.extract_strided_slice %466 {offsets = [0, 0], sizes = [2, 128], strides = [1, 1]} : vector<2x384xf32> to vector<2x128xf32>
    %469 = vector.extract_strided_slice %467 {offsets = [0, 0], sizes = [2, 128], strides = [1, 1]} : vector<2x384xf32> to vector<2x128xf32>
    %470 = arith.addf %468, %469 : vector<2x128xf32>
    %471 = arith.negf %470 : vector<2x128xf32>
    %472 = math.exp %471 : vector<2x128xf32>
    %cst_83 = arith.constant 1.000000e+00 : f32
    %473 = vector.broadcast %cst_83 : f32 to vector<2x128xf32>
    %474 = arith.addf %473, %472 : vector<2x128xf32>
    %475 = arith.divf %473, %474 : vector<2x128xf32>
    %476 = vector.extract_strided_slice %466 {offsets = [0, 128], sizes = [2, 128], strides = [1, 1]} : vector<2x384xf32> to vector<2x128xf32>
    %477 = vector.extract_strided_slice %467 {offsets = [0, 128], sizes = [2, 128], strides = [1, 1]} : vector<2x384xf32> to vector<2x128xf32>
    %478 = arith.addf %476, %477 : vector<2x128xf32>
    %479 = arith.negf %478 : vector<2x128xf32>
    %480 = math.exp %479 : vector<2x128xf32>
    %cst_84 = arith.constant 1.000000e+00 : f32
    %481 = vector.broadcast %cst_84 : f32 to vector<2x128xf32>
    %482 = arith.addf %481, %480 : vector<2x128xf32>
    %483 = arith.divf %481, %482 : vector<2x128xf32>
    %484 = vector.extract_strided_slice %466 {offsets = [0, 256], sizes = [2, 128], strides = [1, 1]} : vector<2x384xf32> to vector<2x128xf32>
    %485 = vector.extract_strided_slice %467 {offsets = [0, 256], sizes = [2, 128], strides = [1, 1]} : vector<2x384xf32> to vector<2x128xf32>
    %486 = arith.addf %485, %19 : vector<2x128xf32>
    %487 = arith.mulf %475, %486 : vector<2x128xf32>
    %488 = arith.addf %484, %487 : vector<2x128xf32>
    %489 = math.tanh %488 : vector<2x128xf32>
    %cst_85 = arith.constant 1.000000e+00 : f32
    %490 = vector.broadcast %cst_85 : f32 to vector<2x128xf32>
    %491 = arith.subf %490, %483 : vector<2x128xf32>
    %492 = arith.mulf %491, %489 : vector<2x128xf32>
    %493 = arith.mulf %483, %465 : vector<2x128xf32>
    %494 = arith.addf %492, %493 : vector<2x128xf32>
    %495 = vector.extract_strided_slice %11 {offsets = [18, 0], sizes = [2, 384], strides = [1, 1]} : vector<24x384xf32> to vector<2x384xf32>
    %cst_86 = arith.constant dense<0.000000e+00> : vector<2x384xf32>
    %496 = tpu.matmul %494, %13, %cst_86 {dimension_numbers = #tpu.dot_dimension_numbers<[1], [0], [0], [1], [0, 0, 1, 1], [], []>} : vector<2x128xf32>, vector<128x384xf32>, vector<2x384xf32> -> vector<2x384xf32>
    %497 = vector.extract_strided_slice %495 {offsets = [0, 0], sizes = [2, 128], strides = [1, 1]} : vector<2x384xf32> to vector<2x128xf32>
    %498 = vector.extract_strided_slice %496 {offsets = [0, 0], sizes = [2, 128], strides = [1, 1]} : vector<2x384xf32> to vector<2x128xf32>
    %499 = arith.addf %497, %498 : vector<2x128xf32>
    %500 = arith.negf %499 : vector<2x128xf32>
    %501 = math.exp %500 : vector<2x128xf32>
    %cst_87 = arith.constant 1.000000e+00 : f32
    %502 = vector.broadcast %cst_87 : f32 to vector<2x128xf32>
    %503 = arith.addf %502, %501 : vector<2x128xf32>
    %504 = arith.divf %502, %503 : vector<2x128xf32>
    %505 = vector.extract_strided_slice %495 {offsets = [0, 128], sizes = [2, 128], strides = [1, 1]} : vector<2x384xf32> to vector<2x128xf32>
    %506 = vector.extract_strided_slice %496 {offsets = [0, 128], sizes = [2, 128], strides = [1, 1]} : vector<2x384xf32> to vector<2x128xf32>
    %507 = arith.addf %505, %506 : vector<2x128xf32>
    %508 = arith.negf %507 : vector<2x128xf32>
    %509 = math.exp %508 : vector<2x128xf32>
    %cst_88 = arith.constant 1.000000e+00 : f32
    %510 = vector.broadcast %cst_88 : f32 to vector<2x128xf32>
    %511 = arith.addf %510, %509 : vector<2x128xf32>
    %512 = arith.divf %510, %511 : vector<2x128xf32>
    %513 = vector.extract_strided_slice %495 {offsets = [0, 256], sizes = [2, 128], strides = [1, 1]} : vector<2x384xf32> to vector<2x128xf32>
    %514 = vector.extract_strided_slice %496 {offsets = [0, 256], sizes = [2, 128], strides = [1, 1]} : vector<2x384xf32> to vector<2x128xf32>
    %515 = arith.addf %514, %19 : vector<2x128xf32>
    %516 = arith.mulf %504, %515 : vector<2x128xf32>
    %517 = arith.addf %513, %516 : vector<2x128xf32>
    %518 = math.tanh %517 : vector<2x128xf32>
    %cst_89 = arith.constant 1.000000e+00 : f32
    %519 = vector.broadcast %cst_89 : f32 to vector<2x128xf32>
    %520 = arith.subf %519, %512 : vector<2x128xf32>
    %521 = arith.mulf %520, %518 : vector<2x128xf32>
    %522 = arith.mulf %512, %494 : vector<2x128xf32>
    %523 = arith.addf %521, %522 : vector<2x128xf32>
    %524 = vector.extract_strided_slice %11 {offsets = [20, 0], sizes = [2, 384], strides = [1, 1]} : vector<24x384xf32> to vector<2x384xf32>
    %cst_90 = arith.constant dense<0.000000e+00> : vector<2x384xf32>
    %525 = tpu.matmul %523, %13, %cst_90 {dimension_numbers = #tpu.dot_dimension_numbers<[1], [0], [0], [1], [0, 0, 1, 1], [], []>} : vector<2x128xf32>, vector<128x384xf32>, vector<2x384xf32> -> vector<2x384xf32>
    %526 = vector.extract_strided_slice %524 {offsets = [0, 0], sizes = [2, 128], strides = [1, 1]} : vector<2x384xf32> to vector<2x128xf32>
    %527 = vector.extract_strided_slice %525 {offsets = [0, 0], sizes = [2, 128], strides = [1, 1]} : vector<2x384xf32> to vector<2x128xf32>
    %528 = arith.addf %526, %527 : vector<2x128xf32>
    %529 = arith.negf %528 : vector<2x128xf32>
    %530 = math.exp %529 : vector<2x128xf32>
    %cst_91 = arith.constant 1.000000e+00 : f32
    %531 = vector.broadcast %cst_91 : f32 to vector<2x128xf32>
    %532 = arith.addf %531, %530 : vector<2x128xf32>
    %533 = arith.divf %531, %532 : vector<2x128xf32>
    %534 = vector.extract_strided_slice %524 {offsets = [0, 128], sizes = [2, 128], strides = [1, 1]} : vector<2x384xf32> to vector<2x128xf32>
    %535 = vector.extract_strided_slice %525 {offsets = [0, 128], sizes = [2, 128], strides = [1, 1]} : vector<2x384xf32> to vector<2x128xf32>
    %536 = arith.addf %534, %535 : vector<2x128xf32>
    %537 = arith.negf %536 : vector<2x128xf32>
    %538 = math.exp %537 : vector<2x128xf32>
    %cst_92 = arith.constant 1.000000e+00 : f32
    %539 = vector.broadcast %cst_92 : f32 to vector<2x128xf32>
    %540 = arith.addf %539, %538 : vector<2x128xf32>
    %541 = arith.divf %539, %540 : vector<2x128xf32>
    %542 = vector.extract_strided_slice %524 {offsets = [0, 256], sizes = [2, 128], strides = [1, 1]} : vector<2x384xf32> to vector<2x128xf32>
    %543 = vector.extract_strided_slice %525 {offsets = [0, 256], sizes = [2, 128], strides = [1, 1]} : vector<2x384xf32> to vector<2x128xf32>
    %544 = arith.addf %543, %19 : vector<2x128xf32>
    %545 = arith.mulf %533, %544 : vector<2x128xf32>
    %546 = arith.addf %542, %545 : vector<2x128xf32>
    %547 = math.tanh %546 : vector<2x128xf32>
    %cst_93 = arith.constant 1.000000e+00 : f32
    %548 = vector.broadcast %cst_93 : f32 to vector<2x128xf32>
    %549 = arith.subf %548, %541 : vector<2x128xf32>
    %550 = arith.mulf %549, %547 : vector<2x128xf32>
    %551 = arith.mulf %541, %523 : vector<2x128xf32>
    %552 = arith.addf %550, %551 : vector<2x128xf32>
    %553 = vector.extract_strided_slice %11 {offsets = [22, 0], sizes = [2, 384], strides = [1, 1]} : vector<24x384xf32> to vector<2x384xf32>
    %cst_94 = arith.constant dense<0.000000e+00> : vector<2x384xf32>
    %554 = tpu.matmul %552, %13, %cst_94 {dimension_numbers = #tpu.dot_dimension_numbers<[1], [0], [0], [1], [0, 0, 1, 1], [], []>} : vector<2x128xf32>, vector<128x384xf32>, vector<2x384xf32> -> vector<2x384xf32>
    %555 = vector.extract_strided_slice %553 {offsets = [0, 0], sizes = [2, 128], strides = [1, 1]} : vector<2x384xf32> to vector<2x128xf32>
    %556 = vector.extract_strided_slice %554 {offsets = [0, 0], sizes = [2, 128], strides = [1, 1]} : vector<2x384xf32> to vector<2x128xf32>
    %557 = arith.addf %555, %556 : vector<2x128xf32>
    %558 = arith.negf %557 : vector<2x128xf32>
    %559 = math.exp %558 : vector<2x128xf32>
    %cst_95 = arith.constant 1.000000e+00 : f32
    %560 = vector.broadcast %cst_95 : f32 to vector<2x128xf32>
    %561 = arith.addf %560, %559 : vector<2x128xf32>
    %562 = arith.divf %560, %561 : vector<2x128xf32>
    %563 = vector.extract_strided_slice %553 {offsets = [0, 128], sizes = [2, 128], strides = [1, 1]} : vector<2x384xf32> to vector<2x128xf32>
    %564 = vector.extract_strided_slice %554 {offsets = [0, 128], sizes = [2, 128], strides = [1, 1]} : vector<2x384xf32> to vector<2x128xf32>
    %565 = arith.addf %563, %564 : vector<2x128xf32>
    %566 = arith.negf %565 : vector<2x128xf32>
    %567 = math.exp %566 : vector<2x128xf32>
    %cst_96 = arith.constant 1.000000e+00 : f32
    %568 = vector.broadcast %cst_96 : f32 to vector<2x128xf32>
    %569 = arith.addf %568, %567 : vector<2x128xf32>
    %570 = arith.divf %568, %569 : vector<2x128xf32>
    %571 = vector.extract_strided_slice %553 {offsets = [0, 256], sizes = [2, 128], strides = [1, 1]} : vector<2x384xf32> to vector<2x128xf32>
    %572 = vector.extract_strided_slice %554 {offsets = [0, 256], sizes = [2, 128], strides = [1, 1]} : vector<2x384xf32> to vector<2x128xf32>
    %573 = arith.addf %572, %19 : vector<2x128xf32>
    %574 = arith.mulf %562, %573 : vector<2x128xf32>
    %575 = arith.addf %571, %574 : vector<2x128xf32>
    %576 = math.tanh %575 : vector<2x128xf32>
    %cst_97 = arith.constant 1.000000e+00 : f32
    %577 = vector.broadcast %cst_97 : f32 to vector<2x128xf32>
    %578 = arith.subf %577, %570 : vector<2x128xf32>
    %579 = arith.mulf %578, %576 : vector<2x128xf32>
    %580 = arith.mulf %570, %552 : vector<2x128xf32>
    %581 = arith.addf %579, %580 : vector<2x128xf32>
    %c0_98 = arith.constant 0 : index
    %c0_99 = arith.constant 0 : index
    %582 = vector.load %arg10[%c0_98, %c0_99] : memref<2x128xf32, #tpu.memory_space<vmem>>, vector<1x128xf32>
    %583 = vector.broadcast %582 : vector<1x128xf32> to vector<2x128xf32>
    %584 = arith.mulf %436, %583 : vector<2x128xf32>
    %cst_100 = arith.constant dense<0.000000e+00> : vector<2xf32>
    %585 = vector.multi_reduction <add>, %584, %cst_100 [1] : vector<2x128xf32> to vector<2xf32>
    %586 = vector.shape_cast %585 : vector<2xf32> to vector<2x1xf32>
    %c1 = arith.constant 1 : index
    %c0_101 = arith.constant 0 : index
    %587 = vector.load %arg10[%c1, %c0_101] : memref<2x128xf32, #tpu.memory_space<vmem>>, vector<1x128xf32>
    %588 = vector.broadcast %587 : vector<1x128xf32> to vector<2x128xf32>
    %589 = arith.mulf %581, %588 : vector<2x128xf32>
    %cst_102 = arith.constant dense<0.000000e+00> : vector<2xf32>
    %590 = vector.multi_reduction <add>, %589, %cst_102 [1] : vector<2x128xf32> to vector<2xf32>
    %591 = vector.shape_cast %590 : vector<2xf32> to vector<2x1xf32>
    %592 = arith.addf %586, %591 : vector<2x1xf32>
    %c0_103 = arith.constant 0 : index
    %c0_104 = arith.constant 0 : index
    %593 = vector.load %arg11[%c0_103, %c0_104] : memref<1x1xf32, #tpu.memory_space<vmem>>, vector<1x1xf32>
    %594 = vector.broadcast %593 : vector<1x1xf32> to vector<2x1xf32>
    %595 = arith.addf %592, %594 : vector<2x1xf32>
    %c0_105 = arith.constant 0 : index
    %c0_106 = arith.constant 0 : index
    %596 = vector.load %arg12[%c0_105, %c0_106] : memref<2x1xf32, #tpu.memory_space<vmem>>, vector<2x1xf32>
    tpu.vector_store %arg12[%c0_105, %c0_106], %595 {strides = array<i32>} : memref<2x1xf32, #tpu.memory_space<vmem>>, vector<2x1xf32>,
    return
  }
}

</mosaic_0001>

<llo_original>
// kernel: fake_news_rnn_classifier.1
$region0: #{fake_news_rnn_classifier.1}
  #allocation0 [shape = 'u32[]', space=smem, size = 0x4, offset = 0x4, fixed_abs, tag = 'smem constant byte address 0x4 - core index']
  #allocation1 [shape = 'u32[144,128]{1,0:T(1,128)}', space=vmem, size = 0x12000, scoped, tag = 'internal scratch']
  #allocation2 [shape = 'f32[1,1]{1,0:T(1,128)S(1)}', space=vmem, size = 0x200, scoped, tag = 'scoped memory for fake_news_rnn_classifier.1']
  %s0 = inlined_call_operand.vmem [shape: f32[16,32], index: 0, kind: input, shape index: {}]
  %s1 = inlined_call_operand.vmem [shape: f32[24,32], index: 1, kind: input, shape index: {}]
  %s2 = inlined_call_operand.vmem [shape: f32[32,384], index: 2, kind: input, shape index: {}]
  %s3 = inlined_call_operand.vmem [shape: f32[128,384], index: 3, kind: input, shape index: {}]
  %s4 = inlined_call_operand.vmem [shape: f32[1,384], index: 4, kind: input, shape index: {}]
  %s5 = inlined_call_operand.vmem [shape: f32[1,128], index: 5, kind: input, shape index: {}]
  %s6 = inlined_call_operand.vmem [shape: f32[32,384], index: 6, kind: input, shape index: {}]
  %s7 = inlined_call_operand.vmem [shape: f32[128,384], index: 7, kind: input, shape index: {}]
  %s8 = inlined_call_operand.vmem [shape: f32[1,384], index: 8, kind: input, shape index: {}]
  %s9 = inlined_call_operand.vmem [shape: f32[1,128], index: 9, kind: input, shape index: {}]
  %s10 = inlined_call_operand.vmem [shape: f32[2,128], index: 10, kind: input, shape index: {}]
  %s11 = inlined_call_operand.<no memory space> [shape: f32[1,1], index: 11, kind: input, shape index: {}]
  %s12 = inlined_call_operand.vmem [shape: f32[2,1], index: 12, kind: output, shape index: {}]
  %s13 = sld [smem:[#allocation0]]
  $region58: #{fake_news_rnn_classifier.1} parent=0
    _
  %s15 = ssub.s32 1, %s13
  %s16 = scalar_select 0, %s15, %s13
  %v17 = vstv %s11
  %18 = vst [vmem:[#allocation2] sm:$0x1] %v17
  // Predicated region
  $region2: #{fake_news_rnn_classifier.1} parent=0 // pred_check
    _
  $region3: #{fake_news_rnn_classifier.1} parent=0 // pred_check_branch
    %20 = sbr.rel (0) target = $region5
  $region4: #{fake_news_rnn_classifier.1} parent=0 // pred_region
    _
  $region5: #{fake_news_rnn_classifier.1} parent=0 // pred_fallthru
    _
  // Predicated region
  $region6: #{fake_news_rnn_classifier.1} parent=0 // pred_check
    _
  $region7: #{fake_news_rnn_classifier.1} parent=0 // pred_check_branch
    %22 = sbr.rel (0) target = $region9
  $region8: #{fake_news_rnn_classifier.1} parent=0 // pred_region
    _
  $region9: #{fake_news_rnn_classifier.1} parent=0 // pred_fallthru
    _
  // Predicated region
  $region10: #{fake_news_rnn_classifier.1} parent=0 // pred_check
    _
  $region11: #{fake_news_rnn_classifier.1} parent=0 // pred_check_branch
    %24 = sbr.rel (0) target = $region13
  $region12: #{fake_news_rnn_classifier.1} parent=0 // pred_region
    _
  $region13: #{fake_news_rnn_classifier.1} parent=0 // pred_fallthru
    _
  // Predicated region
  $region14: #{fake_news_rnn_classifier.1} parent=0 // pred_check
    _
  $region15: #{fake_news_rnn_classifier.1} parent=0 // pred_check_branch
    %26 = sbr.rel (0) target = $region17
  $region16: #{fake_news_rnn_classifier.1} parent=0 // pred_region
    _
  $region17: #{fake_news_rnn_classifier.1} parent=0 // pred_fallthru
    _
  // Predicated region
  $region18: #{fake_news_rnn_classifier.1} parent=0 // pred_check
    _
  $region19: #{fake_news_rnn_classifier.1} parent=0 // pred_check_branch
    %28 = sbr.rel (0) target = $region21
  $region20: #{fake_news_rnn_classifier.1} parent=0 // pred_region
    _
  $region21: #{fake_news_rnn_classifier.1} parent=0 // pred_fallthru
    _
  // Predicated region
  $region22: #{fake_news_rnn_classifier.1} parent=0 // pred_check
    _
  $region23: #{fake_news_rnn_classifier.1} parent=0 // pred_check_branch
    %30 = sbr.rel (0) target = $region25
  $region24: #{fake_news_rnn_classifier.1} parent=0 // pred_region
    _
  $region25: #{fake_news_rnn_classifier.1} parent=0 // pred_fallthru
    _
  // Predicated region
  $region26: #{fake_news_rnn_classifier.1} parent=0 // pred_check
    _
  $region27: #{fake_news_rnn_classifier.1} parent=0 // pred_check_branch
    %32 = sbr.rel (0) target = $region29
  $region28: #{fake_news_rnn_classifier.1} parent=0 // pred_region
    _
  $region29: #{fake_news_rnn_classifier.1} parent=0 // pred_fallthru
    _
  // Predicated region
  $region30: #{fake_news_rnn_classifier.1} parent=0 // pred_check
    _
  $region31: #{fake_news_rnn_classifier.1} parent=0 // pred_check_branch
    %34 = sbr.rel (0) target = $region33
  $region32: #{fake_news_rnn_classifier.1} parent=0 // pred_region
    _
  $region33: #{fake_news_rnn_classifier.1} parent=0 // pred_fallthru
    _
  // Predicated region
  $region34: #{fake_news_rnn_classifier.1} parent=0 // pred_check
    _
  $region35: #{fake_news_rnn_classifier.1} parent=0 // pred_check_branch
    %36 = sbr.rel (0) target = $region37
  $region36: #{fake_news_rnn_classifier.1} parent=0 // pred_region
    _
  $region37: #{fake_news_rnn_classifier.1} parent=0 // pred_fallthru
    _
  // Predicated region
  $region38: #{fake_news_rnn_classifier.1} parent=0 // pred_check
    _
  $region39: #{fake_news_rnn_classifier.1} parent=0 // pred_check_branch
    %38 = sbr.rel (0) target = $region41
  $region40: #{fake_news_rnn_classifier.1} parent=0 // pred_region
    _
  $region41: #{fake_news_rnn_classifier.1} parent=0 // pred_fallthru
    _
  // Predicated region
  $region42: #{fake_news_rnn_classifier.1} parent=0 // pred_check
    _
  $region43: #{fake_news_rnn_classifier.1} parent=0 // pred_check_branch
    %40 = sbr.rel (0) target = $region45
  $region44: #{fake_news_rnn_classifier.1} parent=0 // pred_region
    _
  $region45: #{fake_news_rnn_classifier.1} parent=0 // pred_fallthru
    _
  // Predicated region
  $region46: #{fake_news_rnn_classifier.1} parent=0 // pred_check
    _
  $region47: #{fake_news_rnn_classifier.1} parent=0 // pred_check_branch
    %42 = sbr.rel (0) target = $region49
  $region48: #{fake_news_rnn_classifier.1} parent=0 // pred_region
    _
  $region49: #{fake_news_rnn_classifier.1} parent=0 // pred_fallthru
    _
  %v43 = vld [vmem:[%s0] sm:$0xff]
  %v44 = vld [vmem:[%s0 + $0x8] sm:$0xff]
  %v45 = vld [vmem:[%s2] sm:$0xff]
  %v46 = vld [vmem:[%s2 + $0x8] sm:$0xff]
  %v47 = vld [vmem:[%s2 + $0x10] sm:$0xff]
  %v48 = vld [vmem:[%s2 + $0x18] sm:$0xff]
  %v49 = vld [vmem:[%s2 + $0x20] sm:$0xff]
  %v50 = vld [vmem:[%s2 + $0x28] sm:$0xff]
  %v51 = vld [vmem:[%s2 + $0x30] sm:$0xff]
  %v52 = vld [vmem:[%s2 + $0x38] sm:$0xff]
  %v53 = vld [vmem:[%s2 + $0x40] sm:$0xff]
  %v54 = vld [vmem:[%s2 + $0x48] sm:$0xff]
  %v55 = vld [vmem:[%s2 + $0x50] sm:$0xff]
  %v56 = vld [vmem:[%s2 + $0x58] sm:$0xff]
  %v57 = vld [vmem:[%s4] sm:$0x7]
  %v59 = vlaneseq
  %v60 = vshrl.u32 %v59, 7
  %v61 = vsub.s32 0, %v60
  %v62 = vrot.slane %v57, %v61
  %v63 = vlaneseq
  %v64 = vshrl.u32 %v63, 7
  %v65 = vsub.s32 1, %v64
  %v66 = vrot.slane %v57, %v65
  %v67 = vlaneseq
  %v68 = vshrl.u32 %v67, 7
  %v69 = vsub.s32 2, %v68
  %v70 = vrot.slane %v57, %v69
  %vm74 = vcmask 261120
  %v76 = vsel %vm74, %v43, 0
  %v79 = vsel %vm74, %v44, 0
  %81 = vmatprep.subr.mxu0 0.0
  %82 = vmatpush1.msra.mxu0 0.0
  %83 = vmatprep.subr.mxu0 0.0
  %84 = vmatpush1.msra.mxu0 0.0
  %85 = vmatprep.subr.mxu0 0.0
  %86 = vmatpush1.msra.mxu0 0.0
  %87 = vmatprep.subr.mxu0 0.0
  %88 = vmatpush1.msra.mxu0 0.0
  %89 = vmatprep.subr.mxu0 0.0
  %90 = vmatpush1.msra.mxu0 0.0
  %91 = vmatprep.subr.mxu0 0.0
  %92 = vmatpush1.msra.mxu0 0.0
  %93 = vmatprep.subr.mxu0 0.0
  %94 = vmatpush1.msra.mxu0 0.0
  %95 = vmatprep.subr.mxu0 0.0
  %96 = vmatpush1.msra.mxu0 0.0
  %97 = vmatprep.subr.mxu0 0.0
  %98 = vmatpush1.msra.mxu0 0.0
  %99 = vmatprep.subr.mxu0 0.0
  %100 = vmatpush1.msra.mxu0 0.0
  %101 = vmatprep.subr.mxu0 0.0
  %102 = vmatpush1.msra.mxu0 0.0
  %103 = vmatprep.subr.mxu0 0.0
  %104 = vmatpush1.msra.mxu0 0.0
  %105 = vmatprep.subr.mxu0 %v55
  %106 = vmatpush1.msra.mxu0 %v54
  %107 = vmatprep.subr.mxu0 %v52
  %108 = vmatpush1.msra.mxu0 %v51
  %109 = vmatprep.subr.mxu0 %v49
  %110 = vmatpush1.msra.mxu0 %v48
  %111 = vmatprep.subr.mxu0 %v46
  %112 = vmatpush1.msra.mxu0 %v45
  %113 = vmatprep.subr.mxu0 0.0
  %114 = vmatpush2.msra.mxu0 0.0
  %115 = vmatprep.subr.mxu0 0.0
  %116 = vmatpush2.msra.mxu0 0.0
  %117 = vmatprep.subr.mxu0 0.0
  %118 = vmatpush2.msra.mxu0 0.0
  %119 = vmatprep.subr.mxu0 0.0
  %120 = vmatpush2.msra.mxu0 0.0
  %121 = vmatprep.subr.mxu0 0.0
  %122 = vmatpush2.msra.mxu0 0.0
  %123 = vmatprep.subr.mxu0 0.0
  %124 = vmatpush2.msra.mxu0 0.0
  %125 = vmatprep.subr.mxu0 0.0
  %126 = vmatpush2.msra.mxu0 0.0
  %127 = vmatprep.subr.mxu0 0.0
  %128 = vmatpush2.msra.mxu0 0.0
  %129 = vmatprep.subr.mxu0 0.0
  %130 = vmatpush2.msra.mxu0 0.0
  %131 = vmatprep.subr.mxu0 0.0
  %132 = vmatpush2.msra.mxu0 0.0
  %133 = vmatprep.subr.mxu0 0.0
  %134 = vmatpush2.msra.mxu0 0.0
  %135 = vmatprep.subr.mxu0 0.0
  %136 = vmatpush2.msra.mxu0 0.0
  %137 = vmatprep.subr.mxu0 0.0
  %138 = vmatpush2.msra.mxu0 0.0
  %139 = vmatprep.subr.mxu0 0.0
  %140 = vmatpush2.msra.mxu0 0.0
  %141 = vmatprep.subr.mxu0 0.0
  %142 = vmatpush2.msra.mxu0 0.0
  %143 = vmatprep.subr.mxu0 0.0
  %144 = vmatpush2.msra.mxu0 0.0
  %145 = vmatprep.mubr.f32.mxu0 0.0
  %146 = vmatmul.mubr.f32.gmra.mxu0 %v76
  %v147 = vpop.f32.mrf.mxu0
  %v148 = vadd.f32 %v62, %v147
  %v149 = vpop.f32.mrf.mxu0
  %v150 = vadd.f32 %v66, %v149
  %151 = vmatprep.mubr.f32.mxu0 0.0
  %152 = vmatmul.mubr.f32.gmra.mxu0 %v79
  %v153 = vpop.f32.mrf.mxu0
  %v154 = vadd.f32 %v62, %v153
  %v155 = vpop.f32.mrf.mxu0
  %v156 = vadd.f32 %v66, %v155
  %157 = vdwg.mxu0
  %158 = vmatprep.subr.mxu0 0.0
  %159 = vmatpush1.msra.mxu0 0.0
  %160 = vmatprep.subr.mxu0 0.0
  %161 = vmatpush1.msra.mxu0 0.0
  %162 = vmatprep.subr.mxu0 0.0
  %163 = vmatpush1.msra.mxu0 0.0
  %164 = vmatprep.subr.mxu0 0.0
  %165 = vmatpush1.msra.mxu0 0.0
  %166 = vmatprep.subr.mxu0 0.0
  %167 = vmatpush1.msra.mxu0 0.0
  %168 = vmatprep.subr.mxu0 0.0
  %169 = vmatpush1.msra.mxu0 0.0
  %170 = vmatprep.subr.mxu0 0.0
  %171 = vmatpush1.msra.mxu0 0.0
  %172 = vmatprep.subr.mxu0 0.0
  %173 = vmatpush1.msra.mxu0 0.0
  %174 = vmatprep.subr.mxu0 0.0
  %175 = vmatpush1.msra.mxu0 0.0
  %176 = vmatprep.subr.mxu0 0.0
  %177 = vmatpush1.msra.mxu0 0.0
  %178 = vmatprep.subr.mxu0 0.0
  %179 = vmatpush1.msra.mxu0 0.0
  %180 = vmatprep.subr.mxu0 0.0
  %181 = vmatpush1.msra.mxu0 0.0
  %182 = vmatprep.subr.mxu0 0.0
  %183 = vmatpush1.msra.mxu0 %v56
  %184 = vmatprep.subr.mxu0 0.0
  %185 = vmatpush1.msra.mxu0 %v53
  %186 = vmatprep.subr.mxu0 0.0
  %187 = vmatpush1.msra.mxu0 %v50
  %188 = vmatprep.subr.mxu0 0.0
  %189 = vmatpush1.msra.mxu0 %v47
  %190 = vmatprep.subr.mxu0 0.0
  %191 = vmatpush2.msra.mxu0 0.0
  %192 = vmatprep.subr.mxu0 0.0
  %193 = vmatpush2.msra.mxu0 0.0
  %194 = vmatprep.subr.mxu0 0.0
  %195 = vmatpush2.msra.mxu0 0.0
  %196 = vmatprep.subr.mxu0 0.0
  %197 = vmatpush2.msra.mxu0 0.0
  %198 = vmatprep.subr.mxu0 0.0
  %199 = vmatpush2.msra.mxu0 0.0
  %200 = vmatprep.subr.mxu0 0.0
  %201 = vmatpush2.msra.mxu0 0.0
  %202 = vmatprep.subr.mxu0 0.0
  %203 = vmatpush2.msra.mxu0 0.0
  %204 = vmatprep.subr.mxu0 0.0
  %205 = vmatpush2.msra.mxu0 0.0
  %206 = vmatprep.subr.mxu0 0.0
  %207 = vmatpush2.msra.mxu0 0.0
  %208 = vmatprep.subr.mxu0 0.0
  %209 = vmatpush2.msra.mxu0 0.0
  %210 = vmatprep.subr.mxu0 0.0
  %211 = vmatpush2.msra.mxu0 0.0
  %212 = vmatprep.subr.mxu0 0.0
  %213 = vmatpush2.msra.mxu0 0.0
  %214 = vmatprep.subr.mxu0 0.0
  %215 = vmatpush2.msra.mxu0 0.0
  %216 = vmatprep.subr.mxu0 0.0
  %217 = vmatpush2.msra.mxu0 0.0
  %218 = vmatprep.subr.mxu0 0.0
  %219 = vmatpush2.msra.mxu0 0.0
  %220 = vmatprep.subr.mxu0 0.0
  %221 = vmatpush2.msra.mxu0 0.0
  %222 = vmatprep.mubr.f32.mxu0 0.0
  %223 = vmatmul.mubr.f32.gmra.mxu0 %v76
  %v224 = vpop.f32.mrf.mxu0
  %v225 = vadd.f32 %v70, %v224
  %v226 = vpop.f32.mrf.mxu0
  %227 = vmatprep.mubr.f32.mxu0 0.0
  %228 = vmatmul.mubr.f32.gmra.mxu0 %v79
  %v229 = vpop.f32.mrf.mxu0
  %v230 = vadd.f32 %v70, %v229
  %v231 = vpop.f32.mrf.mxu0
  %232 = vdwg.mxu0
  %v233 = vld [vmem:[%s1] sm:$0xff]
  %v234 = vld [vmem:[%s1 + $0x8] sm:$0xff]
  %v235 = vld [vmem:[%s1 + $0x10] sm:$0xff]
  %v236 = vld [vmem:[%s6] sm:$0xff]
  %v237 = vld [vmem:[%s6 + $0x8] sm:$0xff]
  %v238 = vld [vmem:[%s6 + $0x10] sm:$0xff]
  %v239 = vld [vmem:[%s6 + $0x18] sm:$0xff]
  %v240 = vld [vmem:[%s6 + $0x20] sm:$0xff]
  %v241 = vld [vmem:[%s6 + $0x28] sm:$0xff]
  %v242 = vld [vmem:[%s6 + $0x30] sm:$0xff]
  %v243 = vld [vmem:[%s6 + $0x38] sm:$0xff]
  %v244 = vld [vmem:[%s6 + $0x40] sm:$0xff]
  %v245 = vld [vmem:[%s6 + $0x48] sm:$0xff]
  %v246 = vld [vmem:[%s6 + $0x50] sm:$0xff]
  %v247 = vld [vmem:[%s6 + $0x58] sm:$0xff]
  %v248 = vld [vmem:[%s8] sm:$0x7]
  %v250 = vlaneseq
  %v251 = vshrl.u32 %v250, 7
  %v252 = vsub.s32 0, %v251
  %v253 = vrot.slane %v248, %v252
  %v254 = vlaneseq
  %v255 = vshrl.u32 %v254, 7
  %v256 = vsub.s32 1, %v255
  %v257 = vrot.slane %v248, %v256
  %v258 = vlaneseq
  %v259 = vshrl.u32 %v258, 7
  %v260 = vsub.s32 2, %v259
  %v261 = vrot.slane %v248, %v260
  %v266 = vsel %vm74, %v233, 0
  %v269 = vsel %vm74, %v234, 0
  %v272 = vsel %vm74, %v235, 0
  %274 = vmatprep.subr.mxu0 0.0
  %275 = vmatpush1.msra.mxu0 0.0
  %276 = vmatprep.subr.mxu0 0.0
  %277 = vmatpush1.msra.mxu0 0.0
  %278 = vmatprep.subr.mxu0 0.0
  %279 = vmatpush1.msra.mxu0 0.0
  %280 = vmatprep.subr.mxu0 0.0
  %281 = vmatpush1.msra.mxu0 0.0
  %282 = vmatprep.subr.mxu0 0.0
  %283 = vmatpush1.msra.mxu0 0.0
  %284 = vmatprep.subr.mxu0 0.0
  %285 = vmatpush1.msra.mxu0 0.0
  %286 = vmatprep.subr.mxu0 0.0
  %287 = vmatpush1.msra.mxu0 0.0
  %288 = vmatprep.subr.mxu0 0.0
  %289 = vmatpush1.msra.mxu0 0.0
  %290 = vmatprep.subr.mxu0 0.0
  %291 = vmatpush1.msra.mxu0 0.0
  %292 = vmatprep.subr.mxu0 0.0
  %293 = vmatpush1.msra.mxu0 0.0
  %294 = vmatprep.subr.mxu0 0.0
  %295 = vmatpush1.msra.mxu0 0.0
  %296 = vmatprep.subr.mxu0 0.0
  %297 = vmatpush1.msra.mxu0 0.0
  %298 = vmatprep.subr.mxu0 %v246
  %299 = vmatpush1.msra.mxu0 %v245
  %300 = vmatprep.subr.mxu0 %v243
  %301 = vmatpush1.msra.mxu0 %v242
  %302 = vmatprep.subr.mxu0 %v240
  %303 = vmatpush1.msra.mxu0 %v239
  %304 = vmatprep.subr.mxu0 %v237
  %305 = vmatpush1.msra.mxu0 %v236
  %306 = vmatprep.subr.mxu0 0.0
  %307 = vmatpush2.msra.mxu0 0.0
  %308 = vmatprep.subr.mxu0 0.0
  %309 = vmatpush2.msra.mxu0 0.0
  %310 = vmatprep.subr.mxu0 0.0
  %311 = vmatpush2.msra.mxu0 0.0
  %312 = vmatprep.subr.mxu0 0.0
  %313 = vmatpush2.msra.mxu0 0.0
  %314 = vmatprep.subr.mxu0 0.0
  %315 = vmatpush2.msra.mxu0 0.0
  %316 = vmatprep.subr.mxu0 0.0
  %317 = vmatpush2.msra.mxu0 0.0
  %318 = vmatprep.subr.mxu0 0.0
  %319 = vmatpush2.msra.mxu0 0.0
  %320 = vmatprep.subr.mxu0 0.0
  %321 = vmatpush2.msra.mxu0 0.0
  %322 = vmatprep.subr.mxu0 0.0
  %323 = vmatpush2.msra.mxu0 0.0
  %324 = vmatprep.subr.mxu0 0.0
  %325 = vmatpush2.msra.mxu0 0.0
  %326 = vmatprep.subr.mxu0 0.0
  %327 = vmatpush2.msra.mxu0 0.0
  %328 = vmatprep.subr.mxu0 0.0
  %329 = vmatpush2.msra.mxu0 0.0
  %330 = vmatprep.subr.mxu0 0.0
  %331 = vmatpush2.msra.mxu0 0.0
  %332 = vmatprep.subr.mxu0 0.0
  %333 = vmatpush2.msra.mxu0 0.0
  %334 = vmatprep.subr.mxu0 0.0
  %335 = vmatpush2.msra.mxu0 0.0
  %336 = vmatprep.subr.mxu0 0.0
  %337 = vmatpush2.msra.mxu0 0.0
  %338 = vmatprep.mubr.f32.mxu0 0.0
  %339 = vmatmul.mubr.f32.gmra.mxu0 %v266
  %v340 = vpop.f32.mrf.mxu0
  %v341 = vadd.f32 %v253, %v340
  %v342 = vpop.f32.mrf.mxu0
  %v343 = vadd.f32 %v257, %v342
  %344 = vmatprep.mubr.f32.mxu0 0.0
  %345 = vmatmul.mubr.f32.gmra.mxu0 %v269
  %v346 = vpop.f32.mrf.mxu0
  %v347 = vadd.f32 %v253, %v346
  %v348 = vpop.f32.mrf.mxu0
  %v349 = vadd.f32 %v257, %v348
  %350 = vmatprep.mubr.f32.mxu0 0.0
  %351 = vmatmul.mubr.f32.gmra.mxu0 %v272
  %v352 = vpop.f32.mrf.mxu0
  %v353 = vadd.f32 %v253, %v352
  %v354 = vpop.f32.mrf.mxu0
  %v355 = vadd.f32 %v257, %v354
  %356 = vdwg.mxu0
  %357 = vmatprep.subr.mxu0 0.0
  %358 = vmatpush1.msra.mxu0 0.0
  %359 = vmatprep.subr.mxu0 0.0
  %360 = vmatpush1.msra.mxu0 0.0
  %361 = vmatprep.subr.mxu0 0.0
  %362 = vmatpush1.msra.mxu0 0.0
  %363 = vmatprep.subr.mxu0 0.0
  %364 = vmatpush1.msra.mxu0 0.0
  %365 = vmatprep.subr.mxu0 0.0
  %366 = vmatpush1.msra.mxu0 0.0
  %367 = vmatprep.subr.mxu0 0.0
  %368 = vmatpush1.msra.mxu0 0.0
  %369 = vmatprep.subr.mxu0 0.0
  %370 = vmatpush1.msra.mxu0 0.0
  %371 = vmatprep.subr.mxu0 0.0
  %372 = vmatpush1.msra.mxu0 0.0
  %373 = vmatprep.subr.mxu0 0.0
  %374 = vmatpush1.msra.mxu0 0.0
  %375 = vmatprep.subr.mxu0 0.0
  %376 = vmatpush1.msra.mxu0 0.0
  %377 = vmatprep.subr.mxu0 0.0
  %378 = vmatpush1.msra.mxu0 0.0
  %379 = vmatprep.subr.mxu0 0.0
  %380 = vmatpush1.msra.mxu0 0.0
  %381 = vmatprep.subr.mxu0 0.0
  %382 = vmatpush1.msra.mxu0 %v247
  %383 = vmatprep.subr.mxu0 0.0
  %384 = vmatpush1.msra.mxu0 %v244
  %385 = vmatprep.subr.mxu0 0.0
  %386 = vmatpush1.msra.mxu0 %v241
  %387 = vmatprep.subr.mxu0 0.0
  %388 = vmatpush1.msra.mxu0 %v238
  %389 = vmatprep.subr.mxu0 0.0
  %390 = vmatpush2.msra.mxu0 0.0
  %391 = vmatprep.subr.mxu0 0.0
  %392 = vmatpush2.msra.mxu0 0.0
  %393 = vmatprep.subr.mxu0 0.0
  %394 = vmatpush2.msra.mxu0 0.0
  %395 = vmatprep.subr.mxu0 0.0
  %396 = vmatpush2.msra.mxu0 0.0
  %397 = vmatprep.subr.mxu0 0.0
  %398 = vmatpush2.msra.mxu0 0.0
  %399 = vmatprep.subr.mxu0 0.0
  %400 = vmatpush2.msra.mxu0 0.0
  %401 = vmatprep.subr.mxu0 0.0
  %402 = vmatpush2.msra.mxu0 0.0
  %403 = vmatprep.subr.mxu0 0.0
  %404 = vmatpush2.msra.mxu0 0.0
  %405 = vmatprep.subr.mxu0 0.0
  %406 = vmatpush2.msra.mxu0 0.0
  %407 = vmatprep.subr.mxu0 0.0
  %408 = vmatpush2.msra.mxu0 0.0
  %409 = vmatprep.subr.mxu0 0.0
  %410 = vmatpush2.msra.mxu0 0.0
  %411 = vmatprep.subr.mxu0 0.0
  %412 = vmatpush2.msra.mxu0 0.0
  %413 = vmatprep.subr.mxu0 0.0
  %414 = vmatpush2.msra.mxu0 0.0
  %415 = vmatprep.subr.mxu0 0.0
  %416 = vmatpush2.msra.mxu0 0.0
  %417 = vmatprep.subr.mxu0 0.0
  %418 = vmatpush2.msra.mxu0 0.0
  %419 = vmatprep.subr.mxu0 0.0
  %420 = vmatpush2.msra.mxu0 0.0
  %421 = vmatprep.mubr.f32.mxu0 0.0
  %422 = vmatmul.mubr.f32.gmra.mxu0 %v266
  %v423 = vpop.f32.mrf.mxu0
  %v424 = vadd.f32 %v261, %v423
  %v425 = vpop.f32.mrf.mxu0
  %426 = vmatprep.mubr.f32.mxu0 0.0
  %427 = vmatmul.mubr.f32.gmra.mxu0 %v269
  %v428 = vpop.f32.mrf.mxu0
  %v429 = vadd.f32 %v261, %v428
  %v430 = vpop.f32.mrf.mxu0
  %431 = vmatprep.mubr.f32.mxu0 0.0
  %432 = vmatmul.mubr.f32.gmra.mxu0 %v272
  %v433 = vpop.f32.mrf.mxu0
  %v434 = vadd.f32 %v261, %v433
  %v435 = vpop.f32.mrf.mxu0
  %436 = vdwg.mxu0
  %v437 = vld [vmem:[%s3] sm:$0xff]
  %v438 = vld [vmem:[%s3 + $0x8] sm:$0xff]
  %v439 = vld [vmem:[%s3 + $0x10] sm:$0xff]
  %v440 = vld [vmem:[%s3 + $0x18] sm:$0xff]
  %v441 = vld [vmem:[%s3 + $0x20] sm:$0xff]
  %v442 = vld [vmem:[%s3 + $0x28] sm:$0xff]
  %v443 = vld [vmem:[%s3 + $0x30] sm:$0xff]
  %v444 = vld [vmem:[%s3 + $0x38] sm:$0xff]
  %v445 = vld [vmem:[%s3 + $0x40] sm:$0xff]
  %v446 = vld [vmem:[%s3 + $0x48] sm:$0xff]
  %v447 = vld [vmem:[%s3 + $0x50] sm:$0xff]
  %v448 = vld [vmem:[%s3 + $0x58] sm:$0xff]
  %v449 = vld [vmem:[%s3 + $0x60] sm:$0xff]
  %v450 = vld [vmem:[%s3 + $0x68] sm:$0xff]
  %v451 = vld [vmem:[%s3 + $0x70] sm:$0xff]
  %v452 = vld [vmem:[%s3 + $0x78] sm:$0xff]
  %v453 = vld [vmem:[%s3 + $0x80] sm:$0xff]
  %v454 = vld [vmem:[%s3 + $0x88] sm:$0xff]
  %v455 = vld [vmem:[%s3 + $0x90] sm:$0xff]
  %v456 = vld [vmem:[%s3 + $0x98] sm:$0xff]
  %v457 = vld [vmem:[%s3 + $0xa0] sm:$0xff]
  %v458 = vld [vmem:[%s3 + $0xa8] sm:$0xff]
  %v459 = vld [vmem:[%s3 + $0xb0] sm:$0xff]
  %v460 = vld [vmem:[%s3 + $0xb8] sm:$0xff]
  %v461 = vld [vmem:[%s3 + $0xc0] sm:$0xff]
  %v462 = vld [vmem:[%s3 + $0xc8] sm:$0xff]
  %v463 = vld [vmem:[%s3 + $0xd0] sm:$0xff]
  %v464 = vld [vmem:[%s3 + $0xd8] sm:$0xff]
  %v465 = vld [vmem:[%s3 + $0xe0] sm:$0xff]
  %v466 = vld [vmem:[%s3 + $0xe8] sm:$0xff]
  %v467 = vld [vmem:[%s3 + $0xf0] sm:$0xff]
  %v468 = vld [vmem:[%s3 + $0xf8] sm:$0xff]
  %v469 = vld [vmem:[%s3 + $0x100] sm:$0xff]
  %v470 = vld [vmem:[%s3 + $0x108] sm:$0xff]
  %v471 = vld [vmem:[%s3 + $0x110] sm:$0xff]
  %v472 = vld [vmem:[%s3 + $0x118] sm:$0xff]
  %v473 = vld [vmem:[%s3 + $0x120] sm:$0xff]
  %v474 = vld [vmem:[%s3 + $0x128] sm:$0xff]
  %v475 = vld [vmem:[%s3 + $0x130] sm:$0xff]
  %v476 = vld [vmem:[%s3 + $0x138] sm:$0xff]
  %v477 = vld [vmem:[%s3 + $0x140] sm:$0xff]
  %v478 = vld [vmem:[%s3 + $0x148] sm:$0xff]
  %v479 = vld [vmem:[%s3 + $0x150] sm:$0xff]
  %v480 = vld [vmem:[%s3 + $0x158] sm:$0xff]
  %v481 = vld [vmem:[%s3 + $0x160] sm:$0xff]
  %v482 = vld [vmem:[%s3 + $0x168] sm:$0xff]
  %v483 = vld [vmem:[%s3 + $0x170] sm:$0xff]
  %v484 = vld [vmem:[%s3 + $0x178] sm:$0xff]
  %v485 = vld [vmem:[%s7] sm:$0xff]
  %v486 = vld [vmem:[%s7 + $0x8] sm:$0xff]
  %v487 = vld [vmem:[%s7 + $0x10] sm:$0xff]
  %v488 = vld [vmem:[%s7 + $0x18] sm:$0xff]
  %v489 = vld [vmem:[%s7 + $0x20] sm:$0xff]
  %v490 = vld [vmem:[%s7 + $0x28] sm:$0xff]
  %v491 = vld [vmem:[%s7 + $0x30] sm:$0xff]
  %v492 = vld [vmem:[%s7 + $0x38] sm:$0xff]
  %v493 = vld [vmem:[%s7 + $0x40] sm:$0xff]
  %v494 = vld [vmem:[%s7 + $0x48] sm:$0xff]
  %v495 = vld [vmem:[%s7 + $0x50] sm:$0xff]
  %v496 = vld [vmem:[%s7 + $0x58] sm:$0xff]
  %v497 = vld [vmem:[%s7 + $0x60] sm:$0xff]
  %v498 = vld [vmem:[%s7 + $0x68] sm:$0xff]
  %v499 = vld [vmem:[%s7 + $0x70] sm:$0xff]
  %v500 = vld [vmem:[%s7 + $0x78] sm:$0xff]
  %v501 = vld [vmem:[%s7 + $0x80] sm:$0xff]
  %v502 = vld [vmem:[%s7 + $0x88] sm:$0xff]
  %v503 = vld [vmem:[%s7 + $0x90] sm:$0xff]
  %v504 = vld [vmem:[%s7 + $0x98] sm:$0xff]
  %v505 = vld [vmem:[%s7 + $0xa0] sm:$0xff]
  %v506 = vld [vmem:[%s7 + $0xa8] sm:$0xff]
  %v507 = vld [vmem:[%s7 + $0xb0] sm:$0xff]
  %v508 = vld [vmem:[%s7 + $0xb8] sm:$0xff]
  %v509 = vld [vmem:[%s7 + $0xc0] sm:$0xff]
  %v510 = vld [vmem:[%s7 + $0xc8] sm:$0xff]
  %v511 = vld [vmem:[%s7 + $0xd0] sm:$0xff]
  %v512 = vld [vmem:[%s7 + $0xd8] sm:$0xff]
  %v513 = vld [vmem:[%s7 + $0xe0] sm:$0xff]
  %v514 = vld [vmem:[%s7 + $0xe8] sm:$0xff]
  %v515 = vld [vmem:[%s7 + $0xf0] sm:$0xff]
  %v516 = vld [vmem:[%s7 + $0xf8] sm:$0xff]
  %v517 = vld [vmem:[%s7 + $0x100] sm:$0xff]
  %v518 = vld [vmem:[%s7 + $0x108] sm:$0xff]
  %v519 = vld [vmem:[%s7 + $0x110] sm:$0xff]
  %v520 = vld [vmem:[%s7 + $0x118] sm:$0xff]
  %v521 = vld [vmem:[%s7 + $0x120] sm:$0xff]
  %v522 = vld [vmem:[%s7 + $0x128] sm:$0xff]
  %v523 = vld [vmem:[%s7 + $0x130] sm:$0xff]
  %v524 = vld [vmem:[%s7 + $0x138] sm:$0xff]
  %v525 = vld [vmem:[%s7 + $0x140] sm:$0xff]
  %v526 = vld [vmem:[%s7 + $0x148] sm:$0xff]
  %v527 = vld [vmem:[%s7 + $0x150] sm:$0xff]
  %v528 = vld [vmem:[%s7 + $0x158] sm:$0xff]
  %v529 = vld [vmem:[%s7 + $0x160] sm:$0xff]
  %v530 = vld [vmem:[%s7 + $0x168] sm:$0xff]
  %v531 = vld [vmem:[%s7 + $0x170] sm:$0xff]
  %v532 = vld [vmem:[%s7 + $0x178] sm:$0xff]
  %v533 = vld [vmem:[%s5] sm:$0x1]
  %v535 = vlaneseq
  %v536 = vshrl.u32 %v535, 7
  %v537 = vsub.s32 0, %v536
  %v538 = vrot.slane %v533, %v537
  %v540 = vld [vmem:[%s9] sm:$0x1]
  %v542 = vlaneseq
  %v543 = vshrl.u32 %v542, 7
  %v544 = vsub.s32 0, %v543
  %v545 = vrot.slane %v540, %v544
  %v547 = vxor.u32 %v148, 2147483648
  %v548 = vmul.f32 %v547, 1.442695
  %v549 = vpow.pop %v548
  %v550 = vadd.f32 %v549, 1.0
  %v551 = vrcp.pop %v550
  %v552 = vmul.f32 1.0, %v551
  %v553 = vxor.u32 %v150, 2147483648
  %v554 = vmul.f32 %v553, 1.442695
  %v555 = vpow.pop %v554
  %v556 = vadd.f32 %v555, 1.0
  %v557 = vrcp.pop %v556
  %v558 = vmul.f32 1.0, %v557
  %v559 = vmul.f32 %v552, %v538
  %v560 = vadd.f32 %v225, %v559
  %v561 = vtanh.pop %v560
  %v562 = vsub.f32 1.0, %v558
  %v563 = vmul.f32 %v562, %v561
  %v564 = vxor.u32 %v341, 2147483648
  %v565 = vmul.f32 %v564, 1.442695
  %v566 = vpow.pop %v565
  %v567 = vadd.f32 %v566, 1.0
  %v568 = vrcp.pop %v567
  %v569 = vmul.f32 1.0, %v568
  %v570 = vxor.u32 %v343, 2147483648
  %v571 = vmul.f32 %v570, 1.442695
  %v572 = vpow.pop %v571
  %v573 = vadd.f32 %v572, 1.0
  %v574 = vrcp.pop %v573
  %v575 = vmul.f32 1.0, %v574
  %v576 = vmul.f32 %v569, %v545
  %v577 = vadd.f32 %v424, %v576
  %v578 = vtanh.pop %v577
  %v579 = vsub.f32 1.0, %v575
  %v580 = vmul.f32 %v579, %v578
  %581 = vmatprep.subr.mxu0 %v483
  %582 = vmatpush1.msra.mxu0 %v482
  %583 = vmatprep.subr.mxu0 %v480
  %584 = vmatpush1.msra.mxu0 %v479
  %585 = vmatprep.subr.mxu0 %v477
  %586 = vmatpush1.msra.mxu0 %v476
  %587 = vmatprep.subr.mxu0 %v474
  %588 = vmatpush1.msra.mxu0 %v473
  %589 = vmatprep.subr.mxu0 %v471
  %590 = vmatpush1.msra.mxu0 %v470
  %591 = vmatprep.subr.mxu0 %v468
  %592 = vmatpush1.msra.mxu0 %v467
  %593 = vmatprep.subr.mxu0 %v465
  %594 = vmatpush1.msra.mxu0 %v464
  %595 = vmatprep.subr.mxu0 %v462
  %596 = vmatpush1.msra.mxu0 %v461
  %597 = vmatprep.subr.mxu0 %v459
  %598 = vmatpush1.msra.mxu0 %v458
  %599 = vmatprep.subr.mxu0 %v456
  %600 = vmatpush1.msra.mxu0 %v455
  %601 = vmatprep.subr.mxu0 %v453
  %602 = vmatpush1.msra.mxu0 %v452
  %603 = vmatprep.subr.mxu0 %v450
  %604 = vmatpush1.msra.mxu0 %v449
  %605 = vmatprep.subr.mxu0 %v447
  %606 = vmatpush1.msra.mxu0 %v446
  %607 = vmatprep.subr.mxu0 %v444
  %608 = vmatpush1.msra.mxu0 %v443
  %609 = vmatprep.subr.mxu0 %v441
  %610 = vmatpush1.msra.mxu0 %v440
  %611 = vmatprep.subr.mxu0 %v438
  %612 = vmatpush1.msra.mxu0 %v437
  %613 = vmatprep.subr.mxu0 0.0
  %614 = vmatpush2.msra.mxu0 0.0
  %615 = vmatprep.subr.mxu0 0.0
  %616 = vmatpush2.msra.mxu0 0.0
  %617 = vmatprep.subr.mxu0 0.0
  %618 = vmatpush2.msra.mxu0 0.0
  %619 = vmatprep.subr.mxu0 0.0
  %620 = vmatpush2.msra.mxu0 0.0
  %621 = vmatprep.subr.mxu0 0.0
  %622 = vmatpush2.msra.mxu0 0.0
  %623 = vmatprep.subr.mxu0 0.0
  %624 = vmatpush2.msra.mxu0 0.0
  %625 = vmatprep.subr.mxu0 0.0
  %626 = vmatpush2.msra.mxu0 0.0
  %627 = vmatprep.subr.mxu0 0.0
  %628 = vmatpush2.msra.mxu0 0.0
  %629 = vmatprep.subr.mxu0 0.0
  %630 = vmatpush2.msra.mxu0 0.0
  %631 = vmatprep.subr.mxu0 0.0
  %632 = vmatpush2.msra.mxu0 0.0
  %633 = vmatprep.subr.mxu0 0.0
  %634 = vmatpush2.msra.mxu0 0.0
  %635 = vmatprep.subr.mxu0 0.0
  %636 = vmatpush2.msra.mxu0 0.0
  %637 = vmatprep.subr.mxu0 0.0
  %638 = vmatpush2.msra.mxu0 0.0
  %639 = vmatprep.subr.mxu0 0.0
  %640 = vmatpush2.msra.mxu0 0.0
  %641 = vmatprep.subr.mxu0 0.0
  %642 = vmatpush2.msra.mxu0 0.0
  %643 = vmatprep.subr.mxu0 0.0
  %644 = vmatpush2.msra.mxu0 0.0
  %645 = vmatprep.mubr.f32.mxu0 0.0
  %646 = vmatmul.mubr.f32.gmra.mxu0 %v563
  %v647 = vpop.f32.mrf.mxu0
  %v648 = vadd.f32 0.0, %v647
  %v649 = vpop.f32.mrf.mxu0
  %v650 = vadd.f32 0.0, %v649
  %651 = vdwg.mxu0
  %652 = vmatprep.subr.mxu0 0.0
  %653 = vmatpush1.msra.mxu0 %v484
  %654 = vmatprep.subr.mxu0 0.0
  %655 = vmatpush1.msra.mxu0 %v481
  %656 = vmatprep.subr.mxu0 0.0
  %657 = vmatpush1.msra.mxu0 %v478
  %658 = vmatprep.subr.mxu0 0.0
  %659 = vmatpush1.msra.mxu0 %v475
  %660 = vmatprep.subr.mxu0 0.0
  %661 = vmatpush1.msra.mxu0 %v472
  %662 = vmatprep.subr.mxu0 0.0
  %663 = vmatpush1.msra.mxu0 %v469
  %664 = vmatprep.subr.mxu0 0.0
  %665 = vmatpush1.msra.mxu0 %v466
  %666 = vmatprep.subr.mxu0 0.0
  %667 = vmatpush1.msra.mxu0 %v463
  %668 = vmatprep.subr.mxu0 0.0
  %669 = vmatpush1.msra.mxu0 %v460
  %670 = vmatprep.subr.mxu0 0.0
  %671 = vmatpush1.msra.mxu0 %v457
  %672 = vmatprep.subr.mxu0 0.0
  %673 = vmatpush1.msra.mxu0 %v454
  %674 = vmatprep.subr.mxu0 0.0
  %675 = vmatpush1.msra.mxu0 %v451
  %676 = vmatprep.subr.mxu0 0.0
  %677 = vmatpush1.msra.mxu0 %v448
  %678 = vmatprep.subr.mxu0 0.0
  %679 = vmatpush1.msra.mxu0 %v445
  %680 = vmatprep.subr.mxu0 0.0
  %681 = vmatpush1.msra.mxu0 %v442
  %682 = vmatprep.subr.mxu0 0.0
  %683 = vmatpush1.msra.mxu0 %v439
  %684 = vmatprep.subr.mxu0 0.0
  %685 = vmatpush2.msra.mxu0 0.0
  %686 = vmatprep.subr.mxu0 0.0
  %687 = vmatpush2.msra.mxu0 0.0
  %688 = vmatprep.subr.mxu0 0.0
  %689 = vmatpush2.msra.mxu0 0.0
  %690 = vmatprep.subr.mxu0 0.0
  %691 = vmatpush2.msra.mxu0 0.0
  %692 = vmatprep.subr.mxu0 0.0
  %693 = vmatpush2.msra.mxu0 0.0
  %694 = vmatprep.subr.mxu0 0.0
  %695 = vmatpush2.msra.mxu0 0.0
  %696 = vmatprep.subr.mxu0 0.0
  %697 = vmatpush2.msra.mxu0 0.0
  %698 = vmatprep.subr.mxu0 0.0
  %699 = vmatpush2.msra.mxu0 0.0
  %700 = vmatprep.subr.mxu0 0.0
  %701 = vmatpush2.msra.mxu0 0.0
  %702 = vmatprep.subr.mxu0 0.0
  %703 = vmatpush2.msra.mxu0 0.0
  %704 = vmatprep.subr.mxu0 0.0
  %705 = vmatpush2.msra.mxu0 0.0
  %706 = vmatprep.subr.mxu0 0.0
  %707 = vmatpush2.msra.mxu0 0.0
  %708 = vmatprep.subr.mxu0 0.0
  %709 = vmatpush2.msra.mxu0 0.0
  %710 = vmatprep.subr.mxu0 0.0
  %711 = vmatpush2.msra.mxu0 0.0
  %712 = vmatprep.subr.mxu0 0.0
  %713 = vmatpush2.msra.mxu0 0.0
  %714 = vmatprep.subr.mxu0 0.0
  %715 = vmatpush2.msra.mxu0 0.0
  %716 = vmatprep.mubr.f32.mxu0 0.0
  %717 = vmatmul.mubr.f32.gmra.mxu0 %v563
  %v718 = vpop.f32.mrf.mxu0
  %v719 = vadd.f32 0.0, %v718
  %v720 = vpop.f32.mrf.mxu0
  %721 = vdwg.mxu0
  %v723 = vrot.slane %v648, 6
  %v725 = vadd.f32 %v148, %v723
  %v726 = vxor.u32 %v725, 2147483648
  %v727 = vmul.f32 %v726, 1.442695
  %v728 = vpow.pop %v727
  %v729 = vadd.f32 %v728, 1.0
  %v730 = vrcp.pop %v729
  %v731 = vmul.f32 1.0, %v730
  %v733 = vrot.slane %v650, 6
  %v735 = vadd.f32 %v150, %v733
  %v736 = vxor.u32 %v735, 2147483648
  %v737 = vmul.f32 %v736, 1.442695
  %v738 = vpow.pop %v737
  %v739 = vadd.f32 %v738, 1.0
  %v740 = vrcp.pop %v739
  %v741 = vmul.f32 1.0, %v740
  %v742 = vadd.f32 %v719, %v538
  %v744 = vrot.slane %v742, 6
  %v746 = vmul.f32 %v731, %v744
  %v747 = vadd.f32 %v225, %v746
  %v748 = vtanh.pop %v747
  %v749 = vsub.f32 1.0, %v741
  %v750 = vmul.f32 %v749, %v748
  %v752 = vrot.slane %v563, 6
  %v754 = vmul.f32 %v741, %v752
  %v755 = vadd.f32 %v750, %v754
  %756 = vmatprep.subr.mxu0 %v531
  %757 = vmatpush1.msra.mxu0 %v530
  %758 = vmatprep.subr.mxu0 %v528
  %759 = vmatpush1.msra.mxu0 %v527
  %760 = vmatprep.subr.mxu0 %v525
  %761 = vmatpush1.msra.mxu0 %v524
  %762 = vmatprep.subr.mxu0 %v522
  %763 = vmatpush1.msra.mxu0 %v521
  %764 = vmatprep.subr.mxu0 %v519
  %765 = vmatpush1.msra.mxu0 %v518
  %766 = vmatprep.subr.mxu0 %v516
  %767 = vmatpush1.msra.mxu0 %v515
  %768 = vmatprep.subr.mxu0 %v513
  %769 = vmatpush1.msra.mxu0 %v512
  %770 = vmatprep.subr.mxu0 %v510
  %771 = vmatpush1.msra.mxu0 %v509
  %772 = vmatprep.subr.mxu0 %v507
  %773 = vmatpush1.msra.mxu0 %v506
  %774 = vmatprep.subr.mxu0 %v504
  %775 = vmatpush1.msra.mxu0 %v503
  %776 = vmatprep.subr.mxu0 %v501
  %777 = vmatpush1.msra.mxu0 %v500
  %778 = vmatprep.subr.mxu0 %v498
  %779 = vmatpush1.msra.mxu0 %v497
  %780 = vmatprep.subr.mxu0 %v495
  %781 = vmatpush1.msra.mxu0 %v494
  %782 = vmatprep.subr.mxu0 %v492
  %783 = vmatpush1.msra.mxu0 %v491
  %784 = vmatprep.subr.mxu0 %v489
  %785 = vmatpush1.msra.mxu0 %v488
  %786 = vmatprep.subr.mxu0 %v486
  %787 = vmatpush1.msra.mxu0 %v485
  %788 = vmatprep.subr.mxu0 0.0
  %789 = vmatpush2.msra.mxu0 0.0
  %790 = vmatprep.subr.mxu0 0.0
  %791 = vmatpush2.msra.mxu0 0.0
  %792 = vmatprep.subr.mxu0 0.0
  %793 = vmatpush2.msra.mxu0 0.0
  %794 = vmatprep.subr.mxu0 0.0
  %795 = vmatpush2.msra.mxu0 0.0
  %796 = vmatprep.subr.mxu0 0.0
  %797 = vmatpush2.msra.mxu0 0.0
  %798 = vmatprep.subr.mxu0 0.0
  %799 = vmatpush2.msra.mxu0 0.0
  %800 = vmatprep.subr.mxu0 0.0
  %801 = vmatpush2.msra.mxu0 0.0
  %802 = vmatprep.subr.mxu0 0.0
  %803 = vmatpush2.msra.mxu0 0.0
  %804 = vmatprep.subr.mxu0 0.0
  %805 = vmatpush2.msra.mxu0 0.0
  %806 = vmatprep.subr.mxu0 0.0
  %807 = vmatpush2.msra.mxu0 0.0
  %808 = vmatprep.subr.mxu0 0.0
  %809 = vmatpush2.msra.mxu0 0.0
  %810 = vmatprep.subr.mxu0 0.0
  %811 = vmatpush2.msra.mxu0 0.0
  %812 = vmatprep.subr.mxu0 0.0
  %813 = vmatpush2.msra.mxu0 0.0
  %814 = vmatprep.subr.mxu0 0.0
  %815 = vmatpush2.msra.mxu0 0.0
  %816 = vmatprep.subr.mxu0 0.0
  %817 = vmatpush2.msra.mxu0 0.0
  %818 = vmatprep.subr.mxu0 0.0
  %819 = vmatpush2.msra.mxu0 0.0
  %820 = vmatprep.mubr.f32.mxu0 0.0
  %821 = vmatmul.mubr.f32.gmra.mxu0 %v580
  %v822 = vpop.f32.mrf.mxu0
  %v823 = vadd.f32 0.0, %v822
  %v824 = vpop.f32.mrf.mxu0
  %v825 = vadd.f32 0.0, %v824
  %826 = vdwg.mxu0
  %827 = vmatprep.subr.mxu0 0.0
  %828 = vmatpush1.msra.mxu0 %v532
  %829 = vmatprep.subr.mxu0 0.0
  %830 = vmatpush1.msra.mxu0 %v529
  %831 = vmatprep.subr.mxu0 0.0
  %832 = vmatpush1.msra.mxu0 %v526
  %833 = vmatprep.subr.mxu0 0.0
  %834 = vmatpush1.msra.mxu0 %v523
  %835 = vmatprep.subr.mxu0 0.0
  %836 = vmatpush1.msra.mxu0 %v520
  %837 = vmatprep.subr.mxu0 0.0
  %838 = vmatpush1.msra.mxu0 %v517
  %839 = vmatprep.subr.mxu0 0.0
  %840 = vmatpush1.msra.mxu0 %v514
  %841 = vmatprep.subr.mxu0 0.0
  %842 = vmatpush1.msra.mxu0 %v511
  %843 = vmatprep.subr.mxu0 0.0
  %844 = vmatpush1.msra.mxu0 %v508
  %845 = vmatprep.subr.mxu0 0.0
  %846 = vmatpush1.msra.mxu0 %v505
  %847 = vmatprep.subr.mxu0 0.0
  %848 = vmatpush1.msra.mxu0 %v502
  %849 = vmatprep.subr.mxu0 0.0
  %850 = vmatpush1.msra.mxu0 %v499
  %851 = vmatprep.subr.mxu0 0.0
  %852 = vmatpush1.msra.mxu0 %v496
  %853 = vmatprep.subr.mxu0 0.0
  %854 = vmatpush1.msra.mxu0 %v493
  %855 = vmatprep.subr.mxu0 0.0
  %856 = vmatpush1.msra.mxu0 %v490
  %857 = vmatprep.subr.mxu0 0.0
  %858 = vmatpush1.msra.mxu0 %v487
  %859 = vmatprep.subr.mxu0 0.0
  %860 = vmatpush2.msra.mxu0 0.0
  %861 = vmatprep.subr.mxu0 0.0
  %862 = vmatpush2.msra.mxu0 0.0
  %863 = vmatprep.subr.mxu0 0.0
  %864 = vmatpush2.msra.mxu0 0.0
  %865 = vmatprep.subr.mxu0 0.0
  %866 = vmatpush2.msra.mxu0 0.0
  %867 = vmatprep.subr.mxu0 0.0
  %868 = vmatpush2.msra.mxu0 0.0
  %869 = vmatprep.subr.mxu0 0.0
  %870 = vmatpush2.msra.mxu0 0.0
  %871 = vmatprep.subr.mxu0 0.0
  %872 = vmatpush2.msra.mxu0 0.0
  %873 = vmatprep.subr.mxu0 0.0
  %874 = vmatpush2.msra.mxu0 0.0
  %875 = vmatprep.subr.mxu0 0.0
  %876 = vmatpush2.msra.mxu0 0.0
  %877 = vmatprep.subr.mxu0 0.0
  %878 = vmatpush2.msra.mxu0 0.0
  %879 = vmatprep.subr.mxu0 0.0
  %880 = vmatpush2.msra.mxu0 0.0
  %881 = vmatprep.subr.mxu0 0.0
  %882 = vmatpush2.msra.mxu0 0.0
  %883 = vmatprep.subr.mxu0 0.0
  %884 = vmatpush2.msra.mxu0 0.0
  %885 = vmatprep.subr.mxu0 0.0
  %886 = vmatpush2.msra.mxu0 0.0
  %887 = vmatprep.subr.mxu0 0.0
  %888 = vmatpush2.msra.mxu0 0.0
  %889 = vmatprep.subr.mxu0 0.0
  %890 = vmatpush2.msra.mxu0 0.0
  %891 = vmatprep.mubr.f32.mxu0 0.0
  %892 = vmatmul.mubr.f32.gmra.mxu0 %v580
  %v893 = vpop.f32.mrf.mxu0
  %v894 = vadd.f32 0.0, %v893
  %v895 = vpop.f32.mrf.mxu0
  %896 = vdwg.mxu0
  %v898 = vrot.slane %v823, 6
  %v900 = vadd.f32 %v341, %v898
  %v901 = vxor.u32 %v900, 2147483648
  %v902 = vmul.f32 %v901, 1.442695
  %v903 = vpow.pop %v902
  %v904 = vadd.f32 %v903, 1.0
  %v905 = vrcp.pop %v904
  %v906 = vmul.f32 1.0, %v905
  %v908 = vrot.slane %v825, 6
  %v910 = vadd.f32 %v343, %v908
  %v911 = vxor.u32 %v910, 2147483648
  %v912 = vmul.f32 %v911, 1.442695
  %v913 = vpow.pop %v912
  %v914 = vadd.f32 %v913, 1.0
  %v915 = vrcp.pop %v914
  %v916 = vmul.f32 1.0, %v915
  %v917 = vadd.f32 %v894, %v545
  %v919 = vrot.slane %v917, 6
  %v921 = vmul.f32 %v906, %v919
  %v922 = vadd.f32 %v424, %v921
  %v923 = vtanh.pop %v922
  %v924 = vsub.f32 1.0, %v916
  %v925 = vmul.f32 %v924, %v923
  %v927 = vrot.slane %v580, 6
  %v929 = vmul.f32 %v916, %v927
  %v930 = vadd.f32 %v925, %v929
  %v932 = vrot.slane %v755, 2
  %934 = vmatprep.subr.mxu0 %v483
  %935 = vmatpush1.msra.mxu0 %v482
  %936 = vmatprep.subr.mxu0 %v480
  %937 = vmatpush1.msra.mxu0 %v479
  %938 = vmatprep.subr.mxu0 %v477
  %939 = vmatpush1.msra.mxu0 %v476
  %940 = vmatprep.subr.mxu0 %v474
  %941 = vmatpush1.msra.mxu0 %v473
  %942 = vmatprep.subr.mxu0 %v471
  %943 = vmatpush1.msra.mxu0 %v470
  %944 = vmatprep.subr.mxu0 %v468
  %945 = vmatpush1.msra.mxu0 %v467
  %946 = vmatprep.subr.mxu0 %v465
  %947 = vmatpush1.msra.mxu0 %v464
  %948 = vmatprep.subr.mxu0 %v462
  %949 = vmatpush1.msra.mxu0 %v461
  %950 = vmatprep.subr.mxu0 %v459
  %951 = vmatpush1.msra.mxu0 %v458
  %952 = vmatprep.subr.mxu0 %v456
  %953 = vmatpush1.msra.mxu0 %v455
  %954 = vmatprep.subr.mxu0 %v453
  %955 = vmatpush1.msra.mxu0 %v452
  %956 = vmatprep.subr.mxu0 %v450
  %957 = vmatpush1.msra.mxu0 %v449
  %958 = vmatprep.subr.mxu0 %v447
  %959 = vmatpush1.msra.mxu0 %v446
  %960 = vmatprep.subr.mxu0 %v444
  %961 = vmatpush1.msra.mxu0 %v443
  %962 = vmatprep.subr.mxu0 %v441
  %963 = vmatpush1.msra.mxu0 %v440
  %964 = vmatprep.subr.mxu0 %v438
  %965 = vmatpush1.msra.mxu0 %v437
  %966 = vmatprep.subr.mxu0 0.0
  %967 = vmatpush2.msra.mxu0 0.0
  %968 = vmatprep.subr.mxu0 0.0
  %969 = vmatpush2.msra.mxu0 0.0
  %970 = vmatprep.subr.mxu0 0.0
  %971 = vmatpush2.msra.mxu0 0.0
  %972 = vmatprep.subr.mxu0 0.0
  %973 = vmatpush2.msra.mxu0 0.0
  %974 = vmatprep.subr.mxu0 0.0
  %975 = vmatpush2.msra.mxu0 0.0
  %976 = vmatprep.subr.mxu0 0.0
  %977 = vmatpush2.msra.mxu0 0.0
  %978 = vmatprep.subr.mxu0 0.0
  %979 = vmatpush2.msra.mxu0 0.0
  %980 = vmatprep.subr.mxu0 0.0
  %981 = vmatpush2.msra.mxu0 0.0
  %982 = vmatprep.subr.mxu0 0.0
  %983 = vmatpush2.msra.mxu0 0.0
  %984 = vmatprep.subr.mxu0 0.0
  %985 = vmatpush2.msra.mxu0 0.0
  %986 = vmatprep.subr.mxu0 0.0
  %987 = vmatpush2.msra.mxu0 0.0
  %988 = vmatprep.subr.mxu0 0.0
  %989 = vmatpush2.msra.mxu0 0.0
  %990 = vmatprep.subr.mxu0 0.0
  %991 = vmatpush2.msra.mxu0 0.0
  %992 = vmatprep.subr.mxu0 0.0
  %993 = vmatpush2.msra.mxu0 0.0
  %994 = vmatprep.subr.mxu0 0.0
  %995 = vmatpush2.msra.mxu0 0.0
  %996 = vmatprep.subr.mxu0 0.0
  %997 = vmatpush2.msra.mxu0 0.0
  %998 = vmatprep.mubr.f32.mxu0 0.0
  %999 = vmatmul.mubr.f32.gmra.mxu0 %v932
  %v1000 = vpop.f32.mrf.mxu0
  %v1001 = vadd.f32 0.0, %v1000
  %v1002 = vpop.f32.mrf.mxu0
  %v1003 = vadd.f32 0.0, %v1002
  %1004 = vdwg.mxu0
  %1005 = vmatprep.subr.mxu0 0.0
  %1006 = vmatpush1.msra.mxu0 %v484
  %1007 = vmatprep.subr.mxu0 0.0
  %1008 = vmatpush1.msra.mxu0 %v481
  %1009 = vmatprep.subr.mxu0 0.0
  %1010 = vmatpush1.msra.mxu0 %v478
  %1011 = vmatprep.subr.mxu0 0.0
  %1012 = vmatpush1.msra.mxu0 %v475
  %1013 = vmatprep.subr.mxu0 0.0
  %1014 = vmatpush1.msra.mxu0 %v472
  %1015 = vmatprep.subr.mxu0 0.0
  %1016 = vmatpush1.msra.mxu0 %v469
  %1017 = vmatprep.subr.mxu0 0.0
  %1018 = vmatpush1.msra.mxu0 %v466
  %1019 = vmatprep.subr.mxu0 0.0
  %1020 = vmatpush1.msra.mxu0 %v463
  %1021 = vmatprep.subr.mxu0 0.0
  %1022 = vmatpush1.msra.mxu0 %v460
  %1023 = vmatprep.subr.mxu0 0.0
  %1024 = vmatpush1.msra.mxu0 %v457
  %1025 = vmatprep.subr.mxu0 0.0
  %1026 = vmatpush1.msra.mxu0 %v454
  %1027 = vmatprep.subr.mxu0 0.0
  %1028 = vmatpush1.msra.mxu0 %v451
  %1029 = vmatprep.subr.mxu0 0.0
  %1030 = vmatpush1.msra.mxu0 %v448
  %1031 = vmatprep.subr.mxu0 0.0
  %1032 = vmatpush1.msra.mxu0 %v445
  %1033 = vmatprep.subr.mxu0 0.0
  %1034 = vmatpush1.msra.mxu0 %v442
  %1035 = vmatprep.subr.mxu0 0.0
  %1036 = vmatpush1.msra.mxu0 %v439
  %1037 = vmatprep.subr.mxu0 0.0
  %1038 = vmatpush2.msra.mxu0 0.0
  %1039 = vmatprep.subr.mxu0 0.0
  %1040 = vmatpush2.msra.mxu0 0.0
  %1041 = vmatprep.subr.mxu0 0.0
  %1042 = vmatpush2.msra.mxu0 0.0
  %1043 = vmatprep.subr.mxu0 0.0
  %1044 = vmatpush2.msra.mxu0 0.0
  %1045 = vmatprep.subr.mxu0 0.0
  %1046 = vmatpush2.msra.mxu0 0.0
  %1047 = vmatprep.subr.mxu0 0.0
  %1048 = vmatpush2.msra.mxu0 0.0
  %1049 = vmatprep.subr.mxu0 0.0
  %1050 = vmatpush2.msra.mxu0 0.0
  %1051 = vmatprep.subr.mxu0 0.0
  %1052 = vmatpush2.msra.mxu0 0.0
  %1053 = vmatprep.subr.mxu0 0.0
  %1054 = vmatpush2.msra.mxu0 0.0
  %1055 = vmatprep.subr.mxu0 0.0
  %1056 = vmatpush2.msra.mxu0 0.0
  %1057 = vmatprep.subr.mxu0 0.0
  %1058 = vmatpush2.msra.mxu0 0.0
  %1059 = vmatprep.subr.mxu0 0.0
  %1060 = vmatpush2.msra.mxu0 0.0
  %1061 = vmatprep.subr.mxu0 0.0
  %1062 = vmatpush2.msra.mxu0 0.0
  %1063 = vmatprep.subr.mxu0 0.0
  %1064 = vmatpush2.msra.mxu0 0.0
  %1065 = vmatprep.subr.mxu0 0.0
  %1066 = vmatpush2.msra.mxu0 0.0
  %1067 = vmatprep.subr.mxu0 0.0
  %1068 = vmatpush2.msra.mxu0 0.0
  %1069 = vmatprep.mubr.f32.mxu0 0.0
  %1070 = vmatmul.mubr.f32.gmra.mxu0 %v932
  %v1071 = vpop.f32.mrf.mxu0
  %v1072 = vadd.f32 0.0, %v1071
  %v1073 = vpop.f32.mrf.mxu0
  %1074 = vdwg.mxu0
  %v1076 = vrot.slane %v1001, 4
  %v1078 = vadd.f32 %v148, %v1076
  %v1079 = vxor.u32 %v1078, 2147483648
  %v1080 = vmul.f32 %v1079, 1.442695
  %v1081 = vpow.pop %v1080
  %v1082 = vadd.f32 %v1081, 1.0
  %v1083 = vrcp.pop %v1082
  %v1084 = vmul.f32 1.0, %v1083
  %v1086 = vrot.slane %v1003, 4
  %v1088 = vadd.f32 %v150, %v1086
  %v1089 = vxor.u32 %v1088, 2147483648
  %v1090 = vmul.f32 %v1089, 1.442695
  %v1091 = vpow.pop %v1090
  %v1092 = vadd.f32 %v1091, 1.0
  %v1093 = vrcp.pop %v1092
  %v1094 = vmul.f32 1.0, %v1093
  %v1095 = vadd.f32 %v1072, %v538
  %v1097 = vrot.slane %v1095, 4
  %v1099 = vmul.f32 %v1084, %v1097
  %v1100 = vadd.f32 %v225, %v1099
  %v1101 = vtanh.pop %v1100
  %v1102 = vsub.f32 1.0, %v1094
  %v1103 = vmul.f32 %v1102, %v1101
  %v1104 = vrot.slane %v755, 6
  %v1106 = vmul.f32 %v1094, %v1104
  %v1107 = vadd.f32 %v1103, %v1106
  %v1109 = vrot.slane %v930, 2
  %1111 = vmatprep.subr.mxu0 %v531
  %1112 = vmatpush1.msra.mxu0 %v530
  %1113 = vmatprep.subr.mxu0 %v528
  %1114 = vmatpush1.msra.mxu0 %v527
  %1115 = vmatprep.subr.mxu0 %v525
  %1116 = vmatpush1.msra.mxu0 %v524
  %1117 = vmatprep.subr.mxu0 %v522
  %1118 = vmatpush1.msra.mxu0 %v521
  %1119 = vmatprep.subr.mxu0 %v519
  %1120 = vmatpush1.msra.mxu0 %v518
  %1121 = vmatprep.subr.mxu0 %v516
  %1122 = vmatpush1.msra.mxu0 %v515
  %1123 = vmatprep.subr.mxu0 %v513
  %1124 = vmatpush1.msra.mxu0 %v512
  %1125 = vmatprep.subr.mxu0 %v510
  %1126 = vmatpush1.msra.mxu0 %v509
  %1127 = vmatprep.subr.mxu0 %v507
  %1128 = vmatpush1.msra.mxu0 %v506
  %1129 = vmatprep.subr.mxu0 %v504
  %1130 = vmatpush1.msra.mxu0 %v503
  %1131 = vmatprep.subr.mxu0 %v501
  %1132 = vmatpush1.msra.mxu0 %v500
  %1133 = vmatprep.subr.mxu0 %v498
  %1134 = vmatpush1.msra.mxu0 %v497
  %1135 = vmatprep.subr.mxu0 %v495
  %1136 = vmatpush1.msra.mxu0 %v494
  %1137 = vmatprep.subr.mxu0 %v492
  %1138 = vmatpush1.msra.mxu0 %v491
  %1139 = vmatprep.subr.mxu0 %v489
  %1140 = vmatpush1.msra.mxu0 %v488
  %1141 = vmatprep.subr.mxu0 %v486
  %1142 = vmatpush1.msra.mxu0 %v485
  %1143 = vmatprep.subr.mxu0 0.0
  %1144 = vmatpush2.msra.mxu0 0.0
  %1145 = vmatprep.subr.mxu0 0.0
  %1146 = vmatpush2.msra.mxu0 0.0
  %1147 = vmatprep.subr.mxu0 0.0
  %1148 = vmatpush2.msra.mxu0 0.0
  %1149 = vmatprep.subr.mxu0 0.0
  %1150 = vmatpush2.msra.mxu0 0.0
  %1151 = vmatprep.subr.mxu0 0.0
  %1152 = vmatpush2.msra.mxu0 0.0
  %1153 = vmatprep.subr.mxu0 0.0
  %1154 = vmatpush2.msra.mxu0 0.0
  %1155 = vmatprep.subr.mxu0 0.0
  %1156 = vmatpush2.msra.mxu0 0.0
  %1157 = vmatprep.subr.mxu0 0.0
  %1158 = vmatpush2.msra.mxu0 0.0
  %1159 = vmatprep.subr.mxu0 0.0
  %1160 = vmatpush2.msra.mxu0 0.0
  %1161 = vmatprep.subr.mxu0 0.0
  %1162 = vmatpush2.msra.mxu0 0.0
  %1163 = vmatprep.subr.mxu0 0.0
  %1164 = vmatpush2.msra.mxu0 0.0
  %1165 = vmatprep.subr.mxu0 0.0
  %1166 = vmatpush2.msra.mxu0 0.0
  %1167 = vmatprep.subr.mxu0 0.0
  %1168 = vmatpush2.msra.mxu0 0.0
  %1169 = vmatprep.subr.mxu0 0.0
  %1170 = vmatpush2.msra.mxu0 0.0
  %1171 = vmatprep.subr.mxu0 0.0
  %1172 = vmatpush2.msra.mxu0 0.0
  %1173 = vmatprep.subr.mxu0 0.0
  %1174 = vmatpush2.msra.mxu0 0.0
  %1175 = vmatprep.mubr.f32.mxu0 0.0
  %1176 = vmatmul.mubr.f32.gmra.mxu0 %v1109
  %v1177 = vpop.f32.mrf.mxu0
  %v1178 = vadd.f32 0.0, %v1177
  %v1179 = vpop.f32.mrf.mxu0
  %v1180 = vadd.f32 0.0, %v1179
  %1181 = vdwg.mxu0
  %1182 = vmatprep.subr.mxu0 0.0
  %1183 = vmatpush1.msra.mxu0 %v532
  %1184 = vmatprep.subr.mxu0 0.0
  %1185 = vmatpush1.msra.mxu0 %v529
  %1186 = vmatprep.subr.mxu0 0.0
  %1187 = vmatpush1.msra.mxu0 %v526
  %1188 = vmatprep.subr.mxu0 0.0
  %1189 = vmatpush1.msra.mxu0 %v523
  %1190 = vmatprep.subr.mxu0 0.0
  %1191 = vmatpush1.msra.mxu0 %v520
  %1192 = vmatprep.subr.mxu0 0.0
  %1193 = vmatpush1.msra.mxu0 %v517
  %1194 = vmatprep.subr.mxu0 0.0
  %1195 = vmatpush1.msra.mxu0 %v514
  %1196 = vmatprep.subr.mxu0 0.0
  %1197 = vmatpush1.msra.mxu0 %v511
  %1198 = vmatprep.subr.mxu0 0.0
  %1199 = vmatpush1.msra.mxu0 %v508
  %1200 = vmatprep.subr.mxu0 0.0
  %1201 = vmatpush1.msra.mxu0 %v505
  %1202 = vmatprep.subr.mxu0 0.0
  %1203 = vmatpush1.msra.mxu0 %v502
  %1204 = vmatprep.subr.mxu0 0.0
  %1205 = vmatpush1.msra.mxu0 %v499
  %1206 = vmatprep.subr.mxu0 0.0
  %1207 = vmatpush1.msra.mxu0 %v496
  %1208 = vmatprep.subr.mxu0 0.0
  %1209 = vmatpush1.msra.mxu0 %v493
  %1210 = vmatprep.subr.mxu0 0.0
  %1211 = vmatpush1.msra.mxu0 %v490
  %1212 = vmatprep.subr.mxu0 0.0
  %1213 = vmatpush1.msra.mxu0 %v487
  %1214 = vmatprep.subr.mxu0 0.0
  %1215 = vmatpush2.msra.mxu0 0.0
  %1216 = vmatprep.subr.mxu0 0.0
  %1217 = vmatpush2.msra.mxu0 0.0
  %1218 = vmatprep.subr.mxu0 0.0
  %1219 = vmatpush2.msra.mxu0 0.0
  %1220 = vmatprep.subr.mxu0 0.0
  %1221 = vmatpush2.msra.mxu0 0.0
  %1222 = vmatprep.subr.mxu0 0.0
  %1223 = vmatpush2.msra.mxu0 0.0
  %1224 = vmatprep.subr.mxu0 0.0
  %1225 = vmatpush2.msra.mxu0 0.0
  %1226 = vmatprep.subr.mxu0 0.0
  %1227 = vmatpush2.msra.mxu0 0.0
  %1228 = vmatprep.subr.mxu0 0.0
  %1229 = vmatpush2.msra.mxu0 0.0
  %1230 = vmatprep.subr.mxu0 0.0
  %1231 = vmatpush2.msra.mxu0 0.0
  %1232 = vmatprep.subr.mxu0 0.0
  %1233 = vmatpush2.msra.mxu0 0.0
  %1234 = vmatprep.subr.mxu0 0.0
  %1235 = vmatpush2.msra.mxu0 0.0
  %1236 = vmatprep.subr.mxu0 0.0
  %1237 = vmatpush2.msra.mxu0 0.0
  %1238 = vmatprep.subr.mxu0 0.0
  %1239 = vmatpush2.msra.mxu0 0.0
  %1240 = vmatprep.subr.mxu0 0.0
  %1241 = vmatpush2.msra.mxu0 0.0
  %1242 = vmatprep.subr.mxu0 0.0
  %1243 = vmatpush2.msra.mxu0 0.0
  %1244 = vmatprep.subr.mxu0 0.0
  %1245 = vmatpush2.msra.mxu0 0.0
  %1246 = vmatprep.mubr.f32.mxu0 0.0
  %1247 = vmatmul.mubr.f32.gmra.mxu0 %v1109
  %v1248 = vpop.f32.mrf.mxu0
  %v1249 = vadd.f32 0.0, %v1248
  %v1250 = vpop.f32.mrf.mxu0
  %1251 = vdwg.mxu0
  %v1253 = vrot.slane %v1178, 4
  %v1255 = vadd.f32 %v341, %v1253
  %v1256 = vxor.u32 %v1255, 2147483648
  %v1257 = vmul.f32 %v1256, 1.442695
  %v1258 = vpow.pop %v1257
  %v1259 = vadd.f32 %v1258, 1.0
  %v1260 = vrcp.pop %v1259
  %v1261 = vmul.f32 1.0, %v1260
  %v1263 = vrot.slane %v1180, 4
  %v1265 = vadd.f32 %v343, %v1263
  %v1266 = vxor.u32 %v1265, 2147483648
  %v1267 = vmul.f32 %v1266, 1.442695
  %v1268 = vpow.pop %v1267
  %v1269 = vadd.f32 %v1268, 1.0
  %v1270 = vrcp.pop %v1269
  %v1271 = vmul.f32 1.0, %v1270
  %v1272 = vadd.f32 %v1249, %v545
  %v1274 = vrot.slane %v1272, 4
  %v1276 = vmul.f32 %v1261, %v1274
  %v1277 = vadd.f32 %v424, %v1276
  %v1278 = vtanh.pop %v1277
  %v1279 = vsub.f32 1.0, %v1271
  %v1280 = vmul.f32 %v1279, %v1278
  %v1281 = vrot.slane %v930, 6
  %v1283 = vmul.f32 %v1271, %v1281
  %v1284 = vadd.f32 %v1280, %v1283
  %v1286 = vrot.slane %v1107, 4
  %1288 = vmatprep.subr.mxu0 %v483
  %1289 = vmatpush1.msra.mxu0 %v482
  %1290 = vmatprep.subr.mxu0 %v480
  %1291 = vmatpush1.msra.mxu0 %v479
  %1292 = vmatprep.subr.mxu0 %v477
  %1293 = vmatpush1.msra.mxu0 %v476
  %1294 = vmatprep.subr.mxu0 %v474
  %1295 = vmatpush1.msra.mxu0 %v473
  %1296 = vmatprep.subr.mxu0 %v471
  %1297 = vmatpush1.msra.mxu0 %v470
  %1298 = vmatprep.subr.mxu0 %v468
  %1299 = vmatpush1.msra.mxu0 %v467
  %1300 = vmatprep.subr.mxu0 %v465
  %1301 = vmatpush1.msra.mxu0 %v464
  %1302 = vmatprep.subr.mxu0 %v462
  %1303 = vmatpush1.msra.mxu0 %v461
  %1304 = vmatprep.subr.mxu0 %v459
  %1305 = vmatpush1.msra.mxu0 %v458
  %1306 = vmatprep.subr.mxu0 %v456
  %1307 = vmatpush1.msra.mxu0 %v455
  %1308 = vmatprep.subr.mxu0 %v453
  %1309 = vmatpush1.msra.mxu0 %v452
  %1310 = vmatprep.subr.mxu0 %v450
  %1311 = vmatpush1.msra.mxu0 %v449
  %1312 = vmatprep.subr.mxu0 %v447
  %1313 = vmatpush1.msra.mxu0 %v446
  %1314 = vmatprep.subr.mxu0 %v444
  %1315 = vmatpush1.msra.mxu0 %v443
  %1316 = vmatprep.subr.mxu0 %v441
  %1317 = vmatpush1.msra.mxu0 %v440
  %1318 = vmatprep.subr.mxu0 %v438
  %1319 = vmatpush1.msra.mxu0 %v437
  %1320 = vmatprep.subr.mxu0 0.0
  %1321 = vmatpush2.msra.mxu0 0.0
  %1322 = vmatprep.subr.mxu0 0.0
  %1323 = vmatpush2.msra.mxu0 0.0
  %1324 = vmatprep.subr.mxu0 0.0
  %1325 = vmatpush2.msra.mxu0 0.0
  %1326 = vmatprep.subr.mxu0 0.0
  %1327 = vmatpush2.msra.mxu0 0.0
  %1328 = vmatprep.subr.mxu0 0.0
  %1329 = vmatpush2.msra.mxu0 0.0
  %1330 = vmatprep.subr.mxu0 0.0
  %1331 = vmatpush2.msra.mxu0 0.0
  %1332 = vmatprep.subr.mxu0 0.0
  %1333 = vmatpush2.msra.mxu0 0.0
  %1334 = vmatprep.subr.mxu0 0.0
  %1335 = vmatpush2.msra.mxu0 0.0
  %1336 = vmatprep.subr.mxu0 0.0
  %1337 = vmatpush2.msra.mxu0 0.0
  %1338 = vmatprep.subr.mxu0 0.0
  %1339 = vmatpush2.msra.mxu0 0.0
  %1340 = vmatprep.subr.mxu0 0.0
  %1341 = vmatpush2.msra.mxu0 0.0
  %1342 = vmatprep.subr.mxu0 0.0
  %1343 = vmatpush2.msra.mxu0 0.0
  %1344 = vmatprep.subr.mxu0 0.0
  %1345 = vmatpush2.msra.mxu0 0.0
  %1346 = vmatprep.subr.mxu0 0.0
  %1347 = vmatpush2.msra.mxu0 0.0
  %1348 = vmatprep.subr.mxu0 0.0
  %1349 = vmatpush2.msra.mxu0 0.0
  %1350 = vmatprep.subr.mxu0 0.0
  %1351 = vmatpush2.msra.mxu0 0.0
  %1352 = vmatprep.mubr.f32.mxu0 0.0
  %1353 = vmatmul.mubr.f32.gmra.mxu0 %v1286
  %v1354 = vpop.f32.mrf.mxu0
  %v1355 = vadd.f32 0.0, %v1354
  %v1356 = vpop.f32.mrf.mxu0
  %v1357 = vadd.f32 0.0, %v1356
  %1358 = vdwg.mxu0
  %1359 = vmatprep.subr.mxu0 0.0
  %1360 = vmatpush1.msra.mxu0 %v484
  %1361 = vmatprep.subr.mxu0 0.0
  %1362 = vmatpush1.msra.mxu0 %v481
  %1363 = vmatprep.subr.mxu0 0.0
  %1364 = vmatpush1.msra.mxu0 %v478
  %1365 = vmatprep.subr.mxu0 0.0
  %1366 = vmatpush1.msra.mxu0 %v475
  %1367 = vmatprep.subr.mxu0 0.0
  %1368 = vmatpush1.msra.mxu0 %v472
  %1369 = vmatprep.subr.mxu0 0.0
  %1370 = vmatpush1.msra.mxu0 %v469
  %1371 = vmatprep.subr.mxu0 0.0
  %1372 = vmatpush1.msra.mxu0 %v466
  %1373 = vmatprep.subr.mxu0 0.0
  %1374 = vmatpush1.msra.mxu0 %v463
  %1375 = vmatprep.subr.mxu0 0.0
  %1376 = vmatpush1.msra.mxu0 %v460
  %1377 = vmatprep.subr.mxu0 0.0
  %1378 = vmatpush1.msra.mxu0 %v457
  %1379 = vmatprep.subr.mxu0 0.0
  %1380 = vmatpush1.msra.mxu0 %v454
  %1381 = vmatprep.subr.mxu0 0.0
  %1382 = vmatpush1.msra.mxu0 %v451
  %1383 = vmatprep.subr.mxu0 0.0
  %1384 = vmatpush1.msra.mxu0 %v448
  %1385 = vmatprep.subr.mxu0 0.0
  %1386 = vmatpush1.msra.mxu0 %v445
  %1387 = vmatprep.subr.mxu0 0.0
  %1388 = vmatpush1.msra.mxu0 %v442
  %1389 = vmatprep.subr.mxu0 0.0
  %1390 = vmatpush1.msra.mxu0 %v439
  %1391 = vmatprep.subr.mxu0 0.0
  %1392 = vmatpush2.msra.mxu0 0.0
  %1393 = vmatprep.subr.mxu0 0.0
  %1394 = vmatpush2.msra.mxu0 0.0
  %1395 = vmatprep.subr.mxu0 0.0
  %1396 = vmatpush2.msra.mxu0 0.0
  %1397 = vmatprep.subr.mxu0 0.0
  %1398 = vmatpush2.msra.mxu0 0.0
  %1399 = vmatprep.subr.mxu0 0.0
  %1400 = vmatpush2.msra.mxu0 0.0
  %1401 = vmatprep.subr.mxu0 0.0
  %1402 = vmatpush2.msra.mxu0 0.0
  %1403 = vmatprep.subr.mxu0 0.0
  %1404 = vmatpush2.msra.mxu0 0.0
  %1405 = vmatprep.subr.mxu0 0.0
  %1406 = vmatpush2.msra.mxu0 0.0
  %1407 = vmatprep.subr.mxu0 0.0
  %1408 = vmatpush2.msra.mxu0 0.0
  %1409 = vmatprep.subr.mxu0 0.0
  %1410 = vmatpush2.msra.mxu0 0.0
  %1411 = vmatprep.subr.mxu0 0.0
  %1412 = vmatpush2.msra.mxu0 0.0
  %1413 = vmatprep.subr.mxu0 0.0
  %1414 = vmatpush2.msra.mxu0 0.0
  %1415 = vmatprep.subr.mxu0 0.0
  %1416 = vmatpush2.msra.mxu0 0.0
  %1417 = vmatprep.subr.mxu0 0.0
  %1418 = vmatpush2.msra.mxu0 0.0
  %1419 = vmatprep.subr.mxu0 0.0
  %1420 = vmatpush2.msra.mxu0 0.0
  %1421 = vmatprep.subr.mxu0 0.0
  %1422 = vmatpush2.msra.mxu0 0.0
  %1423 = vmatprep.mubr.f32.mxu0 0.0
  %1424 = vmatmul.mubr.f32.gmra.mxu0 %v1286
  %v1425 = vpop.f32.mrf.mxu0
  %v1426 = vadd.f32 0.0, %v1425
  %v1427 = vpop.f32.mrf.mxu0
  %1428 = vdwg.mxu0
  %v1430 = vrot.slane %v1355, 2
  %v1432 = vadd.f32 %v148, %v1430
  %v1433 = vxor.u32 %v1432, 2147483648
  %v1434 = vmul.f32 %v1433, 1.442695
  %v1435 = vpow.pop %v1434
  %v1436 = vadd.f32 %v1435, 1.0
  %v1437 = vrcp.pop %v1436
  %v1438 = vmul.f32 1.0, %v1437
  %v1440 = vrot.slane %v1357, 2
  %v1442 = vadd.f32 %v150, %v1440
  %v1443 = vxor.u32 %v1442, 2147483648
  %v1444 = vmul.f32 %v1443, 1.442695
  %v1445 = vpow.pop %v1444
  %v1446 = vadd.f32 %v1445, 1.0
  %v1447 = vrcp.pop %v1446
  %v1448 = vmul.f32 1.0, %v1447
  %v1449 = vadd.f32 %v1426, %v538
  %v1451 = vrot.slane %v1449, 2
  %v1453 = vmul.f32 %v1438, %v1451
  %v1454 = vadd.f32 %v225, %v1453
  %v1455 = vtanh.pop %v1454
  %v1456 = vsub.f32 1.0, %v1448
  %v1457 = vmul.f32 %v1456, %v1455
  %v1458 = vrot.slane %v1107, 6
  %v1460 = vmul.f32 %v1448, %v1458
  %v1461 = vadd.f32 %v1457, %v1460
  %v1463 = vrot.slane %v1284, 4
  %1465 = vmatprep.subr.mxu0 %v531
  %1466 = vmatpush1.msra.mxu0 %v530
  %1467 = vmatprep.subr.mxu0 %v528
  %1468 = vmatpush1.msra.mxu0 %v527
  %1469 = vmatprep.subr.mxu0 %v525
  %1470 = vmatpush1.msra.mxu0 %v524
  %1471 = vmatprep.subr.mxu0 %v522
  %1472 = vmatpush1.msra.mxu0 %v521
  %1473 = vmatprep.subr.mxu0 %v519
  %1474 = vmatpush1.msra.mxu0 %v518
  %1475 = vmatprep.subr.mxu0 %v516
  %1476 = vmatpush1.msra.mxu0 %v515
  %1477 = vmatprep.subr.mxu0 %v513
  %1478 = vmatpush1.msra.mxu0 %v512
  %1479 = vmatprep.subr.mxu0 %v510
  %1480 = vmatpush1.msra.mxu0 %v509
  %1481 = vmatprep.subr.mxu0 %v507
  %1482 = vmatpush1.msra.mxu0 %v506
  %1483 = vmatprep.subr.mxu0 %v504
  %1484 = vmatpush1.msra.mxu0 %v503
  %1485 = vmatprep.subr.mxu0 %v501
  %1486 = vmatpush1.msra.mxu0 %v500
  %1487 = vmatprep.subr.mxu0 %v498
  %1488 = vmatpush1.msra.mxu0 %v497
  %1489 = vmatprep.subr.mxu0 %v495
  %1490 = vmatpush1.msra.mxu0 %v494
  %1491 = vmatprep.subr.mxu0 %v492
  %1492 = vmatpush1.msra.mxu0 %v491
  %1493 = vmatprep.subr.mxu0 %v489
  %1494 = vmatpush1.msra.mxu0 %v488
  %1495 = vmatprep.subr.mxu0 %v486
  %1496 = vmatpush1.msra.mxu0 %v485
  %1497 = vmatprep.subr.mxu0 0.0
  %1498 = vmatpush2.msra.mxu0 0.0
  %1499 = vmatprep.subr.mxu0 0.0
  %1500 = vmatpush2.msra.mxu0 0.0
  %1501 = vmatprep.subr.mxu0 0.0
  %1502 = vmatpush2.msra.mxu0 0.0
  %1503 = vmatprep.subr.mxu0 0.0
  %1504 = vmatpush2.msra.mxu0 0.0
  %1505 = vmatprep.subr.mxu0 0.0
  %1506 = vmatpush2.msra.mxu0 0.0
  %1507 = vmatprep.subr.mxu0 0.0
  %1508 = vmatpush2.msra.mxu0 0.0
  %1509 = vmatprep.subr.mxu0 0.0
  %1510 = vmatpush2.msra.mxu0 0.0
  %1511 = vmatprep.subr.mxu0 0.0
  %1512 = vmatpush2.msra.mxu0 0.0
  %1513 = vmatprep.subr.mxu0 0.0
  %1514 = vmatpush2.msra.mxu0 0.0
  %1515 = vmatprep.subr.mxu0 0.0
  %1516 = vmatpush2.msra.mxu0 0.0
  %1517 = vmatprep.subr.mxu0 0.0
  %1518 = vmatpush2.msra.mxu0 0.0
  %1519 = vmatprep.subr.mxu0 0.0
  %1520 = vmatpush2.msra.mxu0 0.0
  %1521 = vmatprep.subr.mxu0 0.0
  %1522 = vmatpush2.msra.mxu0 0.0
  %1523 = vmatprep.subr.mxu0 0.0
  %1524 = vmatpush2.msra.mxu0 0.0
  %1525 = vmatprep.subr.mxu0 0.0
  %1526 = vmatpush2.msra.mxu0 0.0
  %1527 = vmatprep.subr.mxu0 0.0
  %1528 = vmatpush2.msra.mxu0 0.0
  %1529 = vmatprep.mubr.f32.mxu0 0.0
  %1530 = vmatmul.mubr.f32.gmra.mxu0 %v1463
  %v1531 = vpop.f32.mrf.mxu0
  %v1532 = vadd.f32 0.0, %v1531
  %v1533 = vpop.f32.mrf.mxu0
  %v1534 = vadd.f32 0.0, %v1533
  %1535 = vdwg.mxu0
  %1536 = vmatprep.subr.mxu0 0.0
  %1537 = vmatpush1.msra.mxu0 %v532
  %1538 = vmatprep.subr.mxu0 0.0
  %1539 = vmatpush1.msra.mxu0 %v529
  %1540 = vmatprep.subr.mxu0 0.0
  %1541 = vmatpush1.msra.mxu0 %v526
  %1542 = vmatprep.subr.mxu0 0.0
  %1543 = vmatpush1.msra.mxu0 %v523
  %1544 = vmatprep.subr.mxu0 0.0
  %1545 = vmatpush1.msra.mxu0 %v520
  %1546 = vmatprep.subr.mxu0 0.0
  %1547 = vmatpush1.msra.mxu0 %v517
  %1548 = vmatprep.subr.mxu0 0.0
  %1549 = vmatpush1.msra.mxu0 %v514
  %1550 = vmatprep.subr.mxu0 0.0
  %1551 = vmatpush1.msra.mxu0 %v511
  %1552 = vmatprep.subr.mxu0 0.0
  %1553 = vmatpush1.msra.mxu0 %v508
  %1554 = vmatprep.subr.mxu0 0.0
  %1555 = vmatpush1.msra.mxu0 %v505
  %1556 = vmatprep.subr.mxu0 0.0
  %1557 = vmatpush1.msra.mxu0 %v502
  %1558 = vmatprep.subr.mxu0 0.0
  %1559 = vmatpush1.msra.mxu0 %v499
  %1560 = vmatprep.subr.mxu0 0.0
  %1561 = vmatpush1.msra.mxu0 %v496
  %1562 = vmatprep.subr.mxu0 0.0
  %1563 = vmatpush1.msra.mxu0 %v493
  %1564 = vmatprep.subr.mxu0 0.0
  %1565 = vmatpush1.msra.mxu0 %v490
  %1566 = vmatprep.subr.mxu0 0.0
  %1567 = vmatpush1.msra.mxu0 %v487
  %1568 = vmatprep.subr.mxu0 0.0
  %1569 = vmatpush2.msra.mxu0 0.0
  %1570 = vmatprep.subr.mxu0 0.0
  %1571 = vmatpush2.msra.mxu0 0.0
  %1572 = vmatprep.subr.mxu0 0.0
  %1573 = vmatpush2.msra.mxu0 0.0
  %1574 = vmatprep.subr.mxu0 0.0
  %1575 = vmatpush2.msra.mxu0 0.0
  %1576 = vmatprep.subr.mxu0 0.0
  %1577 = vmatpush2.msra.mxu0 0.0
  %1578 = vmatprep.subr.mxu0 0.0
  %1579 = vmatpush2.msra.mxu0 0.0
  %1580 = vmatprep.subr.mxu0 0.0
  %1581 = vmatpush2.msra.mxu0 0.0
  %1582 = vmatprep.subr.mxu0 0.0
  %1583 = vmatpush2.msra.mxu0 0.0
  %1584 = vmatprep.subr.mxu0 0.0
  %1585 = vmatpush2.msra.mxu0 0.0
  %1586 = vmatprep.subr.mxu0 0.0
  %1587 = vmatpush2.msra.mxu0 0.0
  %1588 = vmatprep.subr.mxu0 0.0
  %1589 = vmatpush2.msra.mxu0 0.0
  %1590 = vmatprep.subr.mxu0 0.0
  %1591 = vmatpush2.msra.mxu0 0.0
  %1592 = vmatprep.subr.mxu0 0.0
  %1593 = vmatpush2.msra.mxu0 0.0
  %1594 = vmatprep.subr.mxu0 0.0
  %1595 = vmatpush2.msra.mxu0 0.0
  %1596 = vmatprep.subr.mxu0 0.0
  %1597 = vmatpush2.msra.mxu0 0.0
  %1598 = vmatprep.subr.mxu0 0.0
  %1599 = vmatpush2.msra.mxu0 0.0
  %1600 = vmatprep.mubr.f32.mxu0 0.0
  %1601 = vmatmul.mubr.f32.gmra.mxu0 %v1463
  %v1602 = vpop.f32.mrf.mxu0
  %v1603 = vadd.f32 0.0, %v1602
  %v1604 = vpop.f32.mrf.mxu0
  %1605 = vdwg.mxu0
  %v1607 = vrot.slane %v1532, 2
  %v1609 = vadd.f32 %v341, %v1607
  %v1610 = vxor.u32 %v1609, 2147483648
  %v1611 = vmul.f32 %v1610, 1.442695
  %v1612 = vpow.pop %v1611
  %v1613 = vadd.f32 %v1612, 1.0
  %v1614 = vrcp.pop %v1613
  %v1615 = vmul.f32 1.0, %v1614
  %v1617 = vrot.slane %v1534, 2
  %v1619 = vadd.f32 %v343, %v1617
  %v1620 = vxor.u32 %v1619, 2147483648
  %v1621 = vmul.f32 %v1620, 1.442695
  %v1622 = vpow.pop %v1621
  %v1623 = vadd.f32 %v1622, 1.0
  %v1624 = vrcp.pop %v1623
  %v1625 = vmul.f32 1.0, %v1624
  %v1626 = vadd.f32 %v1603, %v545
  %v1628 = vrot.slane %v1626, 2
  %v1630 = vmul.f32 %v1615, %v1628
  %v1631 = vadd.f32 %v424, %v1630
  %v1632 = vtanh.pop %v1631
  %v1633 = vsub.f32 1.0, %v1625
  %v1634 = vmul.f32 %v1633, %v1632
  %v1635 = vrot.slane %v1284, 6
  %v1637 = vmul.f32 %v1625, %v1635
  %v1638 = vadd.f32 %v1634, %v1637
  %v1640 = vrot.slane %v1461, 6
  %1642 = vmatprep.subr.mxu0 %v483
  %1643 = vmatpush1.msra.mxu0 %v482
  %1644 = vmatprep.subr.mxu0 %v480
  %1645 = vmatpush1.msra.mxu0 %v479
  %1646 = vmatprep.subr.mxu0 %v477
  %1647 = vmatpush1.msra.mxu0 %v476
  %1648 = vmatprep.subr.mxu0 %v474
  %1649 = vmatpush1.msra.mxu0 %v473
  %1650 = vmatprep.subr.mxu0 %v471
  %1651 = vmatpush1.msra.mxu0 %v470
  %1652 = vmatprep.subr.mxu0 %v468
  %1653 = vmatpush1.msra.mxu0 %v467
  %1654 = vmatprep.subr.mxu0 %v465
  %1655 = vmatpush1.msra.mxu0 %v464
  %1656 = vmatprep.subr.mxu0 %v462
  %1657 = vmatpush1.msra.mxu0 %v461
  %1658 = vmatprep.subr.mxu0 %v459
  %1659 = vmatpush1.msra.mxu0 %v458
  %1660 = vmatprep.subr.mxu0 %v456
  %1661 = vmatpush1.msra.mxu0 %v455
  %1662 = vmatprep.subr.mxu0 %v453
  %1663 = vmatpush1.msra.mxu0 %v452
  %1664 = vmatprep.subr.mxu0 %v450
  %1665 = vmatpush1.msra.mxu0 %v449
  %1666 = vmatprep.subr.mxu0 %v447
  %1667 = vmatpush1.msra.mxu0 %v446
  %1668 = vmatprep.subr.mxu0 %v444
  %1669 = vmatpush1.msra.mxu0 %v443
  %1670 = vmatprep.subr.mxu0 %v441
  %1671 = vmatpush1.msra.mxu0 %v440
  %1672 = vmatprep.subr.mxu0 %v438
  %1673 = vmatpush1.msra.mxu0 %v437
  %1674 = vmatprep.subr.mxu0 0.0
  %1675 = vmatpush2.msra.mxu0 0.0
  %1676 = vmatprep.subr.mxu0 0.0
  %1677 = vmatpush2.msra.mxu0 0.0
  %1678 = vmatprep.subr.mxu0 0.0
  %1679 = vmatpush2.msra.mxu0 0.0
  %1680 = vmatprep.subr.mxu0 0.0
  %1681 = vmatpush2.msra.mxu0 0.0
  %1682 = vmatprep.subr.mxu0 0.0
  %1683 = vmatpush2.msra.mxu0 0.0
  %1684 = vmatprep.subr.mxu0 0.0
  %1685 = vmatpush2.msra.mxu0 0.0
  %1686 = vmatprep.subr.mxu0 0.0
  %1687 = vmatpush2.msra.mxu0 0.0
  %1688 = vmatprep.subr.mxu0 0.0
  %1689 = vmatpush2.msra.mxu0 0.0
  %1690 = vmatprep.subr.mxu0 0.0
  %1691 = vmatpush2.msra.mxu0 0.0
  %1692 = vmatprep.subr.mxu0 0.0
  %1693 = vmatpush2.msra.mxu0 0.0
  %1694 = vmatprep.subr.mxu0 0.0
  %1695 = vmatpush2.msra.mxu0 0.0
  %1696 = vmatprep.subr.mxu0 0.0
  %1697 = vmatpush2.msra.mxu0 0.0
  %1698 = vmatprep.subr.mxu0 0.0
  %1699 = vmatpush2.msra.mxu0 0.0
  %1700 = vmatprep.subr.mxu0 0.0
  %1701 = vmatpush2.msra.mxu0 0.0
  %1702 = vmatprep.subr.mxu0 0.0
  %1703 = vmatpush2.msra.mxu0 0.0
  %1704 = vmatprep.subr.mxu0 0.0
  %1705 = vmatpush2.msra.mxu0 0.0
  %1706 = vmatprep.mubr.f32.mxu0 0.0
  %1707 = vmatmul.mubr.f32.gmra.mxu0 %v1640
  %v1708 = vpop.f32.mrf.mxu0
  %v1709 = vadd.f32 0.0, %v1708
  %v1710 = vpop.f32.mrf.mxu0
  %v1711 = vadd.f32 0.0, %v1710
  %1712 = vdwg.mxu0
  %1713 = vmatprep.subr.mxu0 0.0
  %1714 = vmatpush1.msra.mxu0 %v484
  %1715 = vmatprep.subr.mxu0 0.0
  %1716 = vmatpush1.msra.mxu0 %v481
  %1717 = vmatprep.subr.mxu0 0.0
  %1718 = vmatpush1.msra.mxu0 %v478
  %1719 = vmatprep.subr.mxu0 0.0
  %1720 = vmatpush1.msra.mxu0 %v475
  %1721 = vmatprep.subr.mxu0 0.0
  %1722 = vmatpush1.msra.mxu0 %v472
  %1723 = vmatprep.subr.mxu0 0.0
  %1724 = vmatpush1.msra.mxu0 %v469
  %1725 = vmatprep.subr.mxu0 0.0
  %1726 = vmatpush1.msra.mxu0 %v466
  %1727 = vmatprep.subr.mxu0 0.0
  %1728 = vmatpush1.msra.mxu0 %v463
  %1729 = vmatprep.subr.mxu0 0.0
  %1730 = vmatpush1.msra.mxu0 %v460
  %1731 = vmatprep.subr.mxu0 0.0
  %1732 = vmatpush1.msra.mxu0 %v457
  %1733 = vmatprep.subr.mxu0 0.0
  %1734 = vmatpush1.msra.mxu0 %v454
  %1735 = vmatprep.subr.mxu0 0.0
  %1736 = vmatpush1.msra.mxu0 %v451
  %1737 = vmatprep.subr.mxu0 0.0
  %1738 = vmatpush1.msra.mxu0 %v448
  %1739 = vmatprep.subr.mxu0 0.0
  %1740 = vmatpush1.msra.mxu0 %v445
  %1741 = vmatprep.subr.mxu0 0.0
  %1742 = vmatpush1.msra.mxu0 %v442
  %1743 = vmatprep.subr.mxu0 0.0
  %1744 = vmatpush1.msra.mxu0 %v439
  %1745 = vmatprep.subr.mxu0 0.0
  %1746 = vmatpush2.msra.mxu0 0.0
  %1747 = vmatprep.subr.mxu0 0.0
  %1748 = vmatpush2.msra.mxu0 0.0
  %1749 = vmatprep.subr.mxu0 0.0
  %1750 = vmatpush2.msra.mxu0 0.0
  %1751 = vmatprep.subr.mxu0 0.0
  %1752 = vmatpush2.msra.mxu0 0.0
  %1753 = vmatprep.subr.mxu0 0.0
  %1754 = vmatpush2.msra.mxu0 0.0
  %1755 = vmatprep.subr.mxu0 0.0
  %1756 = vmatpush2.msra.mxu0 0.0
  %1757 = vmatprep.subr.mxu0 0.0
  %1758 = vmatpush2.msra.mxu0 0.0
  %1759 = vmatprep.subr.mxu0 0.0
  %1760 = vmatpush2.msra.mxu0 0.0
  %1761 = vmatprep.subr.mxu0 0.0
  %1762 = vmatpush2.msra.mxu0 0.0
  %1763 = vmatprep.subr.mxu0 0.0
  %1764 = vmatpush2.msra.mxu0 0.0
  %1765 = vmatprep.subr.mxu0 0.0
  %1766 = vmatpush2.msra.mxu0 0.0
  %1767 = vmatprep.subr.mxu0 0.0
  %1768 = vmatpush2.msra.mxu0 0.0
  %1769 = vmatprep.subr.mxu0 0.0
  %1770 = vmatpush2.msra.mxu0 0.0
  %1771 = vmatprep.subr.mxu0 0.0
  %1772 = vmatpush2.msra.mxu0 0.0
  %1773 = vmatprep.subr.mxu0 0.0
  %1774 = vmatpush2.msra.mxu0 0.0
  %1775 = vmatprep.subr.mxu0 0.0
  %1776 = vmatpush2.msra.mxu0 0.0
  %1777 = vmatprep.mubr.f32.mxu0 0.0
  %1778 = vmatmul.mubr.f32.gmra.mxu0 %v1640
  %v1779 = vpop.f32.mrf.mxu0
  %v1780 = vadd.f32 0.0, %v1779
  %v1781 = vpop.f32.mrf.mxu0
  %1782 = vdwg.mxu0
  %v1783 = vadd.f32 %v154, %v1709
  %v1784 = vxor.u32 %v1783, 2147483648
  %v1785 = vmul.f32 %v1784, 1.442695
  %v1786 = vpow.pop %v1785
  %v1787 = vadd.f32 %v1786, 1.0
  %v1788 = vrcp.pop %v1787
  %v1789 = vmul.f32 1.0, %v1788
  %v1790 = vadd.f32 %v156, %v1711
  %v1791 = vxor.u32 %v1790, 2147483648
  %v1792 = vmul.f32 %v1791, 1.442695
  %v1793 = vpow.pop %v1792
  %v1794 = vadd.f32 %v1793, 1.0
  %v1795 = vrcp.pop %v1794
  %v1796 = vmul.f32 1.0, %v1795
  %v1797 = vadd.f32 %v1780, %v538
  %v1798 = vmul.f32 %v1789, %v1797
  %v1799 = vadd.f32 %v230, %v1798
  %v1800 = vtanh.pop %v1799
  %v1801 = vsub.f32 1.0, %v1796
  %v1802 = vmul.f32 %v1801, %v1800
  %v1803 = vmul.f32 %v1796, %v1640
  %v1804 = vadd.f32 %v1802, %v1803
  %v1806 = vrot.slane %v1638, 6
  %1808 = vmatprep.subr.mxu0 %v531
  %1809 = vmatpush1.msra.mxu0 %v530
  %1810 = vmatprep.subr.mxu0 %v528
  %1811 = vmatpush1.msra.mxu0 %v527
  %1812 = vmatprep.subr.mxu0 %v525
  %1813 = vmatpush1.msra.mxu0 %v524
  %1814 = vmatprep.subr.mxu0 %v522
  %1815 = vmatpush1.msra.mxu0 %v521
  %1816 = vmatprep.subr.mxu0 %v519
  %1817 = vmatpush1.msra.mxu0 %v518
  %1818 = vmatprep.subr.mxu0 %v516
  %1819 = vmatpush1.msra.mxu0 %v515
  %1820 = vmatprep.subr.mxu0 %v513
  %1821 = vmatpush1.msra.mxu0 %v512
  %1822 = vmatprep.subr.mxu0 %v510
  %1823 = vmatpush1.msra.mxu0 %v509
  %1824 = vmatprep.subr.mxu0 %v507
  %1825 = vmatpush1.msra.mxu0 %v506
  %1826 = vmatprep.subr.mxu0 %v504
  %1827 = vmatpush1.msra.mxu0 %v503
  %1828 = vmatprep.subr.mxu0 %v501
  %1829 = vmatpush1.msra.mxu0 %v500
  %1830 = vmatprep.subr.mxu0 %v498
  %1831 = vmatpush1.msra.mxu0 %v497
  %1832 = vmatprep.subr.mxu0 %v495
  %1833 = vmatpush1.msra.mxu0 %v494
  %1834 = vmatprep.subr.mxu0 %v492
  %1835 = vmatpush1.msra.mxu0 %v491
  %1836 = vmatprep.subr.mxu0 %v489
  %1837 = vmatpush1.msra.mxu0 %v488
  %1838 = vmatprep.subr.mxu0 %v486
  %1839 = vmatpush1.msra.mxu0 %v485
  %1840 = vmatprep.subr.mxu0 0.0
  %1841 = vmatpush2.msra.mxu0 0.0
  %1842 = vmatprep.subr.mxu0 0.0
  %1843 = vmatpush2.msra.mxu0 0.0
  %1844 = vmatprep.subr.mxu0 0.0
  %1845 = vmatpush2.msra.mxu0 0.0
  %1846 = vmatprep.subr.mxu0 0.0
  %1847 = vmatpush2.msra.mxu0 0.0
  %1848 = vmatprep.subr.mxu0 0.0
  %1849 = vmatpush2.msra.mxu0 0.0
  %1850 = vmatprep.subr.mxu0 0.0
  %1851 = vmatpush2.msra.mxu0 0.0
  %1852 = vmatprep.subr.mxu0 0.0
  %1853 = vmatpush2.msra.mxu0 0.0
  %1854 = vmatprep.subr.mxu0 0.0
  %1855 = vmatpush2.msra.mxu0 0.0
  %1856 = vmatprep.subr.mxu0 0.0
  %1857 = vmatpush2.msra.mxu0 0.0
  %1858 = vmatprep.subr.mxu0 0.0
  %1859 = vmatpush2.msra.mxu0 0.0
  %1860 = vmatprep.subr.mxu0 0.0
  %1861 = vmatpush2.msra.mxu0 0.0
  %1862 = vmatprep.subr.mxu0 0.0
  %1863 = vmatpush2.msra.mxu0 0.0
  %1864 = vmatprep.subr.mxu0 0.0
  %1865 = vmatpush2.msra.mxu0 0.0
  %1866 = vmatprep.subr.mxu0 0.0
  %1867 = vmatpush2.msra.mxu0 0.0
  %1868 = vmatprep.subr.mxu0 0.0
  %1869 = vmatpush2.msra.mxu0 0.0
  %1870 = vmatprep.subr.mxu0 0.0
  %1871 = vmatpush2.msra.mxu0 0.0
  %1872 = vmatprep.mubr.f32.mxu0 0.0
  %1873 = vmatmul.mubr.f32.gmra.mxu0 %v1806
  %v1874 = vpop.f32.mrf.mxu0
  %v1875 = vadd.f32 0.0, %v1874
  %v1876 = vpop.f32.mrf.mxu0
  %v1877 = vadd.f32 0.0, %v1876
  %1878 = vdwg.mxu0
  %1879 = vmatprep.subr.mxu0 0.0
  %1880 = vmatpush1.msra.mxu0 %v532
  %1881 = vmatprep.subr.mxu0 0.0
  %1882 = vmatpush1.msra.mxu0 %v529
  %1883 = vmatprep.subr.mxu0 0.0
  %1884 = vmatpush1.msra.mxu0 %v526
  %1885 = vmatprep.subr.mxu0 0.0
  %1886 = vmatpush1.msra.mxu0 %v523
  %1887 = vmatprep.subr.mxu0 0.0
  %1888 = vmatpush1.msra.mxu0 %v520
  %1889 = vmatprep.subr.mxu0 0.0
  %1890 = vmatpush1.msra.mxu0 %v517
  %1891 = vmatprep.subr.mxu0 0.0
  %1892 = vmatpush1.msra.mxu0 %v514
  %1893 = vmatprep.subr.mxu0 0.0
  %1894 = vmatpush1.msra.mxu0 %v511
  %1895 = vmatprep.subr.mxu0 0.0
  %1896 = vmatpush1.msra.mxu0 %v508
  %1897 = vmatprep.subr.mxu0 0.0
  %1898 = vmatpush1.msra.mxu0 %v505
  %1899 = vmatprep.subr.mxu0 0.0
  %1900 = vmatpush1.msra.mxu0 %v502
  %1901 = vmatprep.subr.mxu0 0.0
  %1902 = vmatpush1.msra.mxu0 %v499
  %1903 = vmatprep.subr.mxu0 0.0
  %1904 = vmatpush1.msra.mxu0 %v496
  %1905 = vmatprep.subr.mxu0 0.0
  %1906 = vmatpush1.msra.mxu0 %v493
  %1907 = vmatprep.subr.mxu0 0.0
  %1908 = vmatpush1.msra.mxu0 %v490
  %1909 = vmatprep.subr.mxu0 0.0
  %1910 = vmatpush1.msra.mxu0 %v487
  %1911 = vmatprep.subr.mxu0 0.0
  %1912 = vmatpush2.msra.mxu0 0.0
  %1913 = vmatprep.subr.mxu0 0.0
  %1914 = vmatpush2.msra.mxu0 0.0
  %1915 = vmatprep.subr.mxu0 0.0
  %1916 = vmatpush2.msra.mxu0 0.0
  %1917 = vmatprep.subr.mxu0 0.0
  %1918 = vmatpush2.msra.mxu0 0.0
  %1919 = vmatprep.subr.mxu0 0.0
  %1920 = vmatpush2.msra.mxu0 0.0
  %1921 = vmatprep.subr.mxu0 0.0
  %1922 = vmatpush2.msra.mxu0 0.0
  %1923 = vmatprep.subr.mxu0 0.0
  %1924 = vmatpush2.msra.mxu0 0.0
  %1925 = vmatprep.subr.mxu0 0.0
  %1926 = vmatpush2.msra.mxu0 0.0
  %1927 = vmatprep.subr.mxu0 0.0
  %1928 = vmatpush2.msra.mxu0 0.0
  %1929 = vmatprep.subr.mxu0 0.0
  %1930 = vmatpush2.msra.mxu0 0.0
  %1931 = vmatprep.subr.mxu0 0.0
  %1932 = vmatpush2.msra.mxu0 0.0
  %1933 = vmatprep.subr.mxu0 0.0
  %1934 = vmatpush2.msra.mxu0 0.0
  %1935 = vmatprep.subr.mxu0 0.0
  %1936 = vmatpush2.msra.mxu0 0.0
  %1937 = vmatprep.subr.mxu0 0.0
  %1938 = vmatpush2.msra.mxu0 0.0
  %1939 = vmatprep.subr.mxu0 0.0
  %1940 = vmatpush2.msra.mxu0 0.0
  %1941 = vmatprep.subr.mxu0 0.0
  %1942 = vmatpush2.msra.mxu0 0.0
  %1943 = vmatprep.mubr.f32.mxu0 0.0
  %1944 = vmatmul.mubr.f32.gmra.mxu0 %v1806
  %v1945 = vpop.f32.mrf.mxu0
  %v1946 = vadd.f32 0.0, %v1945
  %v1947 = vpop.f32.mrf.mxu0
  %1948 = vdwg.mxu0
  %v1949 = vadd.f32 %v347, %v1875
  %v1950 = vxor.u32 %v1949, 2147483648
  %v1951 = vmul.f32 %v1950, 1.442695
  %v1952 = vpow.pop %v1951
  %v1953 = vadd.f32 %v1952, 1.0
  %v1954 = vrcp.pop %v1953
  %v1955 = vmul.f32 1.0, %v1954
  %v1956 = vadd.f32 %v349, %v1877
  %v1957 = vxor.u32 %v1956, 2147483648
  %v1958 = vmul.f32 %v1957, 1.442695
  %v1959 = vpow.pop %v1958
  %v1960 = vadd.f32 %v1959, 1.0
  %v1961 = vrcp.pop %v1960
  %v1962 = vmul.f32 1.0, %v1961
  %v1963 = vadd.f32 %v1946, %v545
  %v1964 = vmul.f32 %v1955, %v1963
  %v1965 = vadd.f32 %v429, %v1964
  %v1966 = vtanh.pop %v1965
  %v1967 = vsub.f32 1.0, %v1962
  %v1968 = vmul.f32 %v1967, %v1966
  %v1969 = vmul.f32 %v1962, %v1806
  %v1970 = vadd.f32 %v1968, %v1969
  %1971 = vmatprep.subr.mxu0 %v483
  %1972 = vmatpush1.msra.mxu0 %v482
  %1973 = vmatprep.subr.mxu0 %v480
  %1974 = vmatpush1.msra.mxu0 %v479
  %1975 = vmatprep.subr.mxu0 %v477
  %1976 = vmatpush1.msra.mxu0 %v476
  %1977 = vmatprep.subr.mxu0 %v474
  %1978 = vmatpush1.msra.mxu0 %v473
  %1979 = vmatprep.subr.mxu0 %v471
  %1980 = vmatpush1.msra.mxu0 %v470
  %1981 = vmatprep.subr.mxu0 %v468
  %1982 = vmatpush1.msra.mxu0 %v467
  %1983 = vmatprep.subr.mxu0 %v465
  %1984 = vmatpush1.msra.mxu0 %v464
  %1985 = vmatprep.subr.mxu0 %v462
  %1986 = vmatpush1.msra.mxu0 %v461
  %1987 = vmatprep.subr.mxu0 %v459
  %1988 = vmatpush1.msra.mxu0 %v458
  %1989 = vmatprep.subr.mxu0 %v456
  %1990 = vmatpush1.msra.mxu0 %v455
  %1991 = vmatprep.subr.mxu0 %v453
  %1992 = vmatpush1.msra.mxu0 %v452
  %1993 = vmatprep.subr.mxu0 %v450
  %1994 = vmatpush1.msra.mxu0 %v449
  %1995 = vmatprep.subr.mxu0 %v447
  %1996 = vmatpush1.msra.mxu0 %v446
  %1997 = vmatprep.subr.mxu0 %v444
  %1998 = vmatpush1.msra.mxu0 %v443
  %1999 = vmatprep.subr.mxu0 %v441
  %2000 = vmatpush1.msra.mxu0 %v440
  %2001 = vmatprep.subr.mxu0 %v438
  %2002 = vmatpush1.msra.mxu0 %v437
  %2003 = vmatprep.subr.mxu0 0.0
  %2004 = vmatpush2.msra.mxu0 0.0
  %2005 = vmatprep.subr.mxu0 0.0
  %2006 = vmatpush2.msra.mxu0 0.0
  %2007 = vmatprep.subr.mxu0 0.0
  %2008 = vmatpush2.msra.mxu0 0.0
  %2009 = vmatprep.subr.mxu0 0.0
  %2010 = vmatpush2.msra.mxu0 0.0
  %2011 = vmatprep.subr.mxu0 0.0
  %2012 = vmatpush2.msra.mxu0 0.0
  %2013 = vmatprep.subr.mxu0 0.0
  %2014 = vmatpush2.msra.mxu0 0.0
  %2015 = vmatprep.subr.mxu0 0.0
  %2016 = vmatpush2.msra.mxu0 0.0
  %2017 = vmatprep.subr.mxu0 0.0
  %2018 = vmatpush2.msra.mxu0 0.0
  %2019 = vmatprep.subr.mxu0 0.0
  %2020 = vmatpush2.msra.mxu0 0.0
  %2021 = vmatprep.subr.mxu0 0.0
  %2022 = vmatpush2.msra.mxu0 0.0
  %2023 = vmatprep.subr.mxu0 0.0
  %2024 = vmatpush2.msra.mxu0 0.0
  %2025 = vmatprep.subr.mxu0 0.0
  %2026 = vmatpush2.msra.mxu0 0.0
  %2027 = vmatprep.subr.mxu0 0.0
  %2028 = vmatpush2.msra.mxu0 0.0
  %2029 = vmatprep.subr.mxu0 0.0
  %2030 = vmatpush2.msra.mxu0 0.0
  %2031 = vmatprep.subr.mxu0 0.0
  %2032 = vmatpush2.msra.mxu0 0.0
  %2033 = vmatprep.subr.mxu0 0.0
  %2034 = vmatpush2.msra.mxu0 0.0
  %2035 = vmatprep.mubr.f32.mxu0 0.0
  %2036 = vmatmul.mubr.f32.gmra.mxu0 %v1804
  %v2037 = vpop.f32.mrf.mxu0
  %v2038 = vadd.f32 0.0, %v2037
  %v2039 = vpop.f32.mrf.mxu0
  %v2040 = vadd.f32 0.0, %v2039
  %2041 = vdwg.mxu0
  %2042 = vmatprep.subr.mxu0 0.0
  %2043 = vmatpush1.msra.mxu0 %v484
  %2044 = vmatprep.subr.mxu0 0.0
  %2045 = vmatpush1.msra.mxu0 %v481
  %2046 = vmatprep.subr.mxu0 0.0
  %2047 = vmatpush1.msra.mxu0 %v478
  %2048 = vmatprep.subr.mxu0 0.0
  %2049 = vmatpush1.msra.mxu0 %v475
  %2050 = vmatprep.subr.mxu0 0.0
  %2051 = vmatpush1.msra.mxu0 %v472
  %2052 = vmatprep.subr.mxu0 0.0
  %2053 = vmatpush1.msra.mxu0 %v469
  %2054 = vmatprep.subr.mxu0 0.0
  %2055 = vmatpush1.msra.mxu0 %v466
  %2056 = vmatprep.subr.mxu0 0.0
  %2057 = vmatpush1.msra.mxu0 %v463
  %2058 = vmatprep.subr.mxu0 0.0
  %2059 = vmatpush1.msra.mxu0 %v460
  %2060 = vmatprep.subr.mxu0 0.0
  %2061 = vmatpush1.msra.mxu0 %v457
  %2062 = vmatprep.subr.mxu0 0.0
  %2063 = vmatpush1.msra.mxu0 %v454
  %2064 = vmatprep.subr.mxu0 0.0
  %2065 = vmatpush1.msra.mxu0 %v451
  %2066 = vmatprep.subr.mxu0 0.0
  %2067 = vmatpush1.msra.mxu0 %v448
  %2068 = vmatprep.subr.mxu0 0.0
  %2069 = vmatpush1.msra.mxu0 %v445
  %2070 = vmatprep.subr.mxu0 0.0
  %2071 = vmatpush1.msra.mxu0 %v442
  %2072 = vmatprep.subr.mxu0 0.0
  %2073 = vmatpush1.msra.mxu0 %v439
  %2074 = vmatprep.subr.mxu0 0.0
  %2075 = vmatpush2.msra.mxu0 0.0
  %2076 = vmatprep.subr.mxu0 0.0
  %2077 = vmatpush2.msra.mxu0 0.0
  %2078 = vmatprep.subr.mxu0 0.0
  %2079 = vmatpush2.msra.mxu0 0.0
  %2080 = vmatprep.subr.mxu0 0.0
  %2081 = vmatpush2.msra.mxu0 0.0
  %2082 = vmatprep.subr.mxu0 0.0
  %2083 = vmatpush2.msra.mxu0 0.0
  %2084 = vmatprep.subr.mxu0 0.0
  %2085 = vmatpush2.msra.mxu0 0.0
  %2086 = vmatprep.subr.mxu0 0.0
  %2087 = vmatpush2.msra.mxu0 0.0
  %2088 = vmatprep.subr.mxu0 0.0
  %2089 = vmatpush2.msra.mxu0 0.0
  %2090 = vmatprep.subr.mxu0 0.0
  %2091 = vmatpush2.msra.mxu0 0.0
  %2092 = vmatprep.subr.mxu0 0.0
  %2093 = vmatpush2.msra.mxu0 0.0
  %2094 = vmatprep.subr.mxu0 0.0
  %2095 = vmatpush2.msra.mxu0 0.0
  %2096 = vmatprep.subr.mxu0 0.0
  %2097 = vmatpush2.msra.mxu0 0.0
  %2098 = vmatprep.subr.mxu0 0.0
  %2099 = vmatpush2.msra.mxu0 0.0
  %2100 = vmatprep.subr.mxu0 0.0
  %2101 = vmatpush2.msra.mxu0 0.0
  %2102 = vmatprep.subr.mxu0 0.0
  %2103 = vmatpush2.msra.mxu0 0.0
  %2104 = vmatprep.subr.mxu0 0.0
  %2105 = vmatpush2.msra.mxu0 0.0
  %2106 = vmatprep.mubr.f32.mxu0 0.0
  %2107 = vmatmul.mubr.f32.gmra.mxu0 %v1804
  %v2108 = vpop.f32.mrf.mxu0
  %v2109 = vadd.f32 0.0, %v2108
  %v2110 = vpop.f32.mrf.mxu0
  %2111 = vdwg.mxu0
  %v2113 = vrot.slane %v2038, 6
  %v2115 = vadd.f32 %v154, %v2113
  %v2116 = vxor.u32 %v2115, 2147483648
  %v2117 = vmul.f32 %v2116, 1.442695
  %v2118 = vpow.pop %v2117
  %v2119 = vadd.f32 %v2118, 1.0
  %v2120 = vrcp.pop %v2119
  %v2121 = vmul.f32 1.0, %v2120
  %v2123 = vrot.slane %v2040, 6
  %v2125 = vadd.f32 %v156, %v2123
  %v2126 = vxor.u32 %v2125, 2147483648
  %v2127 = vmul.f32 %v2126, 1.442695
  %v2128 = vpow.pop %v2127
  %v2129 = vadd.f32 %v2128, 1.0
  %v2130 = vrcp.pop %v2129
  %v2131 = vmul.f32 1.0, %v2130
  %v2132 = vadd.f32 %v2109, %v538
  %v2134 = vrot.slane %v2132, 6
  %v2136 = vmul.f32 %v2121, %v2134
  %v2137 = vadd.f32 %v230, %v2136
  %v2138 = vtanh.pop %v2137
  %v2139 = vsub.f32 1.0, %v2131
  %v2140 = vmul.f32 %v2139, %v2138
  %v2142 = vrot.slane %v1804, 6
  %v2144 = vmul.f32 %v2131, %v2142
  %v2145 = vadd.f32 %v2140, %v2144
  %2146 = vmatprep.subr.mxu0 %v531
  %2147 = vmatpush1.msra.mxu0 %v530
  %2148 = vmatprep.subr.mxu0 %v528
  %2149 = vmatpush1.msra.mxu0 %v527
  %2150 = vmatprep.subr.mxu0 %v525
  %2151 = vmatpush1.msra.mxu0 %v524
  %2152 = vmatprep.subr.mxu0 %v522
  %2153 = vmatpush1.msra.mxu0 %v521
  %2154 = vmatprep.subr.mxu0 %v519
  %2155 = vmatpush1.msra.mxu0 %v518
  %2156 = vmatprep.subr.mxu0 %v516
  %2157 = vmatpush1.msra.mxu0 %v515
  %2158 = vmatprep.subr.mxu0 %v513
  %2159 = vmatpush1.msra.mxu0 %v512
  %2160 = vmatprep.subr.mxu0 %v510
  %2161 = vmatpush1.msra.mxu0 %v509
  %2162 = vmatprep.subr.mxu0 %v507
  %2163 = vmatpush1.msra.mxu0 %v506
  %2164 = vmatprep.subr.mxu0 %v504
  %2165 = vmatpush1.msra.mxu0 %v503
  %2166 = vmatprep.subr.mxu0 %v501
  %2167 = vmatpush1.msra.mxu0 %v500
  %2168 = vmatprep.subr.mxu0 %v498
  %2169 = vmatpush1.msra.mxu0 %v497
  %2170 = vmatprep.subr.mxu0 %v495
  %2171 = vmatpush1.msra.mxu0 %v494
  %2172 = vmatprep.subr.mxu0 %v492
  %2173 = vmatpush1.msra.mxu0 %v491
  %2174 = vmatprep.subr.mxu0 %v489
  %2175 = vmatpush1.msra.mxu0 %v488
  %2176 = vmatprep.subr.mxu0 %v486
  %2177 = vmatpush1.msra.mxu0 %v485
  %2178 = vmatprep.subr.mxu0 0.0
  %2179 = vmatpush2.msra.mxu0 0.0
  %2180 = vmatprep.subr.mxu0 0.0
  %2181 = vmatpush2.msra.mxu0 0.0
  %2182 = vmatprep.subr.mxu0 0.0
  %2183 = vmatpush2.msra.mxu0 0.0
  %2184 = vmatprep.subr.mxu0 0.0
  %2185 = vmatpush2.msra.mxu0 0.0
  %2186 = vmatprep.subr.mxu0 0.0
  %2187 = vmatpush2.msra.mxu0 0.0
  %2188 = vmatprep.subr.mxu0 0.0
  %2189 = vmatpush2.msra.mxu0 0.0
  %2190 = vmatprep.subr.mxu0 0.0
  %2191 = vmatpush2.msra.mxu0 0.0
  %2192 = vmatprep.subr.mxu0 0.0
  %2193 = vmatpush2.msra.mxu0 0.0
  %2194 = vmatprep.subr.mxu0 0.0
  %2195 = vmatpush2.msra.mxu0 0.0
  %2196 = vmatprep.subr.mxu0 0.0
  %2197 = vmatpush2.msra.mxu0 0.0
  %2198 = vmatprep.subr.mxu0 0.0
  %2199 = vmatpush2.msra.mxu0 0.0
  %2200 = vmatprep.subr.mxu0 0.0
  %2201 = vmatpush2.msra.mxu0 0.0
  %2202 = vmatprep.subr.mxu0 0.0
  %2203 = vmatpush2.msra.mxu0 0.0
  %2204 = vmatprep.subr.mxu0 0.0
  %2205 = vmatpush2.msra.mxu0 0.0
  %2206 = vmatprep.subr.mxu0 0.0
  %2207 = vmatpush2.msra.mxu0 0.0
  %2208 = vmatprep.subr.mxu0 0.0
  %2209 = vmatpush2.msra.mxu0 0.0
  %2210 = vmatprep.mubr.f32.mxu0 0.0
  %2211 = vmatmul.mubr.f32.gmra.mxu0 %v1970
  %v2212 = vpop.f32.mrf.mxu0
  %v2213 = vadd.f32 0.0, %v2212
  %v2214 = vpop.f32.mrf.mxu0
  %v2215 = vadd.f32 0.0, %v2214
  %2216 = vdwg.mxu0
  %2217 = vmatprep.subr.mxu0 0.0
  %2218 = vmatpush1.msra.mxu0 %v532
  %2219 = vmatprep.subr.mxu0 0.0
  %2220 = vmatpush1.msra.mxu0 %v529
  %2221 = vmatprep.subr.mxu0 0.0
  %2222 = vmatpush1.msra.mxu0 %v526
  %2223 = vmatprep.subr.mxu0 0.0
  %2224 = vmatpush1.msra.mxu0 %v523
  %2225 = vmatprep.subr.mxu0 0.0
  %2226 = vmatpush1.msra.mxu0 %v520
  %2227 = vmatprep.subr.mxu0 0.0
  %2228 = vmatpush1.msra.mxu0 %v517
  %2229 = vmatprep.subr.mxu0 0.0
  %2230 = vmatpush1.msra.mxu0 %v514
  %2231 = vmatprep.subr.mxu0 0.0
  %2232 = vmatpush1.msra.mxu0 %v511
  %2233 = vmatprep.subr.mxu0 0.0
  %2234 = vmatpush1.msra.mxu0 %v508
  %2235 = vmatprep.subr.mxu0 0.0
  %2236 = vmatpush1.msra.mxu0 %v505
  %2237 = vmatprep.subr.mxu0 0.0
  %2238 = vmatpush1.msra.mxu0 %v502
  %2239 = vmatprep.subr.mxu0 0.0
  %2240 = vmatpush1.msra.mxu0 %v499
  %2241 = vmatprep.subr.mxu0 0.0
  %2242 = vmatpush1.msra.mxu0 %v496
  %2243 = vmatprep.subr.mxu0 0.0
  %2244 = vmatpush1.msra.mxu0 %v493
  %2245 = vmatprep.subr.mxu0 0.0
  %2246 = vmatpush1.msra.mxu0 %v490
  %2247 = vmatprep.subr.mxu0 0.0
  %2248 = vmatpush1.msra.mxu0 %v487
  %2249 = vmatprep.subr.mxu0 0.0
  %2250 = vmatpush2.msra.mxu0 0.0
  %2251 = vmatprep.subr.mxu0 0.0
  %2252 = vmatpush2.msra.mxu0 0.0
  %2253 = vmatprep.subr.mxu0 0.0
  %2254 = vmatpush2.msra.mxu0 0.0
  %2255 = vmatprep.subr.mxu0 0.0
  %2256 = vmatpush2.msra.mxu0 0.0
  %2257 = vmatprep.subr.mxu0 0.0
  %2258 = vmatpush2.msra.mxu0 0.0
  %2259 = vmatprep.subr.mxu0 0.0
  %2260 = vmatpush2.msra.mxu0 0.0
  %2261 = vmatprep.subr.mxu0 0.0
  %2262 = vmatpush2.msra.mxu0 0.0
  %2263 = vmatprep.subr.mxu0 0.0
  %2264 = vmatpush2.msra.mxu0 0.0
  %2265 = vmatprep.subr.mxu0 0.0
  %2266 = vmatpush2.msra.mxu0 0.0
  %2267 = vmatprep.subr.mxu0 0.0
  %2268 = vmatpush2.msra.mxu0 0.0
  %2269 = vmatprep.subr.mxu0 0.0
  %2270 = vmatpush2.msra.mxu0 0.0
  %2271 = vmatprep.subr.mxu0 0.0
  %2272 = vmatpush2.msra.mxu0 0.0
  %2273 = vmatprep.subr.mxu0 0.0
  %2274 = vmatpush2.msra.mxu0 0.0
  %2275 = vmatprep.subr.mxu0 0.0
  %2276 = vmatpush2.msra.mxu0 0.0
  %2277 = vmatprep.subr.mxu0 0.0
  %2278 = vmatpush2.msra.mxu0 0.0
  %2279 = vmatprep.subr.mxu0 0.0
  %2280 = vmatpush2.msra.mxu0 0.0
  %2281 = vmatprep.mubr.f32.mxu0 0.0
  %2282 = vmatmul.mubr.f32.gmra.mxu0 %v1970
  %v2283 = vpop.f32.mrf.mxu0
  %v2284 = vadd.f32 0.0, %v2283
  %v2285 = vpop.f32.mrf.mxu0
  %2286 = vdwg.mxu0
  %v2288 = vrot.slane %v2213, 6
  %v2290 = vadd.f32 %v347, %v2288
  %v2291 = vxor.u32 %v2290, 2147483648
  %v2292 = vmul.f32 %v2291, 1.442695
  %v2293 = vpow.pop %v2292
  %v2294 = vadd.f32 %v2293, 1.0
  %v2295 = vrcp.pop %v2294
  %v2296 = vmul.f32 1.0, %v2295
  %v2298 = vrot.slane %v2215, 6
  %v2300 = vadd.f32 %v349, %v2298
  %v2301 = vxor.u32 %v2300, 2147483648
  %v2302 = vmul.f32 %v2301, 1.442695
  %v2303 = vpow.pop %v2302
  %v2304 = vadd.f32 %v2303, 1.0
  %v2305 = vrcp.pop %v2304
  %v2306 = vmul.f32 1.0, %v2305
  %v2307 = vadd.f32 %v2284, %v545
  %v2309 = vrot.slane %v2307, 6
  %v2311 = vmul.f32 %v2296, %v2309
  %v2312 = vadd.f32 %v429, %v2311
  %v2313 = vtanh.pop %v2312
  %v2314 = vsub.f32 1.0, %v2306
  %v2315 = vmul.f32 %v2314, %v2313
  %v2317 = vrot.slane %v1970, 6
  %v2319 = vmul.f32 %v2306, %v2317
  %v2320 = vadd.f32 %v2315, %v2319
  %v2322 = vrot.slane %v2145, 2
  %2324 = vmatprep.subr.mxu0 %v483
  %2325 = vmatpush1.msra.mxu0 %v482
  %2326 = vmatprep.subr.mxu0 %v480
  %2327 = vmatpush1.msra.mxu0 %v479
  %2328 = vmatprep.subr.mxu0 %v477
  %2329 = vmatpush1.msra.mxu0 %v476
  %2330 = vmatprep.subr.mxu0 %v474
  %2331 = vmatpush1.msra.mxu0 %v473
  %2332 = vmatprep.subr.mxu0 %v471
  %2333 = vmatpush1.msra.mxu0 %v470
  %2334 = vmatprep.subr.mxu0 %v468
  %2335 = vmatpush1.msra.mxu0 %v467
  %2336 = vmatprep.subr.mxu0 %v465
  %2337 = vmatpush1.msra.mxu0 %v464
  %2338 = vmatprep.subr.mxu0 %v462
  %2339 = vmatpush1.msra.mxu0 %v461
  %2340 = vmatprep.subr.mxu0 %v459
  %2341 = vmatpush1.msra.mxu0 %v458
  %2342 = vmatprep.subr.mxu0 %v456
  %2343 = vmatpush1.msra.mxu0 %v455
  %2344 = vmatprep.subr.mxu0 %v453
  %2345 = vmatpush1.msra.mxu0 %v452
  %2346 = vmatprep.subr.mxu0 %v450
  %2347 = vmatpush1.msra.mxu0 %v449
  %2348 = vmatprep.subr.mxu0 %v447
  %2349 = vmatpush1.msra.mxu0 %v446
  %2350 = vmatprep.subr.mxu0 %v444
  %2351 = vmatpush1.msra.mxu0 %v443
  %2352 = vmatprep.subr.mxu0 %v441
  %2353 = vmatpush1.msra.mxu0 %v440
  %2354 = vmatprep.subr.mxu0 %v438
  %2355 = vmatpush1.msra.mxu0 %v437
  %2356 = vmatprep.subr.mxu0 0.0
  %2357 = vmatpush2.msra.mxu0 0.0
  %2358 = vmatprep.subr.mxu0 0.0
  %2359 = vmatpush2.msra.mxu0 0.0
  %2360 = vmatprep.subr.mxu0 0.0
  %2361 = vmatpush2.msra.mxu0 0.0
  %2362 = vmatprep.subr.mxu0 0.0
  %2363 = vmatpush2.msra.mxu0 0.0
  %2364 = vmatprep.subr.mxu0 0.0
  %2365 = vmatpush2.msra.mxu0 0.0
  %2366 = vmatprep.subr.mxu0 0.0
  %2367 = vmatpush2.msra.mxu0 0.0
  %2368 = vmatprep.subr.mxu0 0.0
  %2369 = vmatpush2.msra.mxu0 0.0
  %2370 = vmatprep.subr.mxu0 0.0
  %2371 = vmatpush2.msra.mxu0 0.0
  %2372 = vmatprep.subr.mxu0 0.0
  %2373 = vmatpush2.msra.mxu0 0.0
  %2374 = vmatprep.subr.mxu0 0.0
  %2375 = vmatpush2.msra.mxu0 0.0
  %2376 = vmatprep.subr.mxu0 0.0
  %2377 = vmatpush2.msra.mxu0 0.0
  %2378 = vmatprep.subr.mxu0 0.0
  %2379 = vmatpush2.msra.mxu0 0.0
  %2380 = vmatprep.subr.mxu0 0.0
  %2381 = vmatpush2.msra.mxu0 0.0
  %2382 = vmatprep.subr.mxu0 0.0
  %2383 = vmatpush2.msra.mxu0 0.0
  %2384 = vmatprep.subr.mxu0 0.0
  %2385 = vmatpush2.msra.mxu0 0.0
  %2386 = vmatprep.subr.mxu0 0.0
  %2387 = vmatpush2.msra.mxu0 0.0
  %2388 = vmatprep.mubr.f32.mxu0 0.0
  %2389 = vmatmul.mubr.f32.gmra.mxu0 %v2322
  %v2390 = vpop.f32.mrf.mxu0
  %v2391 = vadd.f32 0.0, %v2390
  %v2392 = vpop.f32.mrf.mxu0
  %v2393 = vadd.f32 0.0, %v2392
  %2394 = vdwg.mxu0
  %2395 = vmatprep.subr.mxu0 0.0
  %2396 = vmatpush1.msra.mxu0 %v484
  %2397 = vmatprep.subr.mxu0 0.0
  %2398 = vmatpush1.msra.mxu0 %v481
  %2399 = vmatprep.subr.mxu0 0.0
  %2400 = vmatpush1.msra.mxu0 %v478
  %2401 = vmatprep.subr.mxu0 0.0
  %2402 = vmatpush1.msra.mxu0 %v475
  %2403 = vmatprep.subr.mxu0 0.0
  %2404 = vmatpush1.msra.mxu0 %v472
  %2405 = vmatprep.subr.mxu0 0.0
  %2406 = vmatpush1.msra.mxu0 %v469
  %2407 = vmatprep.subr.mxu0 0.0
  %2408 = vmatpush1.msra.mxu0 %v466
  %2409 = vmatprep.subr.mxu0 0.0
  %2410 = vmatpush1.msra.mxu0 %v463
  %2411 = vmatprep.subr.mxu0 0.0
  %2412 = vmatpush1.msra.mxu0 %v460
  %2413 = vmatprep.subr.mxu0 0.0
  %2414 = vmatpush1.msra.mxu0 %v457
  %2415 = vmatprep.subr.mxu0 0.0
  %2416 = vmatpush1.msra.mxu0 %v454
  %2417 = vmatprep.subr.mxu0 0.0
  %2418 = vmatpush1.msra.mxu0 %v451
  %2419 = vmatprep.subr.mxu0 0.0
  %2420 = vmatpush1.msra.mxu0 %v448
  %2421 = vmatprep.subr.mxu0 0.0
  %2422 = vmatpush1.msra.mxu0 %v445
  %2423 = vmatprep.subr.mxu0 0.0
  %2424 = vmatpush1.msra.mxu0 %v442
  %2425 = vmatprep.subr.mxu0 0.0
  %2426 = vmatpush1.msra.mxu0 %v439
  %2427 = vmatprep.subr.mxu0 0.0
  %2428 = vmatpush2.msra.mxu0 0.0
  %2429 = vmatprep.subr.mxu0 0.0
  %2430 = vmatpush2.msra.mxu0 0.0
  %2431 = vmatprep.subr.mxu0 0.0
  %2432 = vmatpush2.msra.mxu0 0.0
  %2433 = vmatprep.subr.mxu0 0.0
  %2434 = vmatpush2.msra.mxu0 0.0
  %2435 = vmatprep.subr.mxu0 0.0
  %2436 = vmatpush2.msra.mxu0 0.0
  %2437 = vmatprep.subr.mxu0 0.0
  %2438 = vmatpush2.msra.mxu0 0.0
  %2439 = vmatprep.subr.mxu0 0.0
  %2440 = vmatpush2.msra.mxu0 0.0
  %2441 = vmatprep.subr.mxu0 0.0
  %2442 = vmatpush2.msra.mxu0 0.0
  %2443 = vmatprep.subr.mxu0 0.0
  %2444 = vmatpush2.msra.mxu0 0.0
  %2445 = vmatprep.subr.mxu0 0.0
  %2446 = vmatpush2.msra.mxu0 0.0
  %2447 = vmatprep.subr.mxu0 0.0
  %2448 = vmatpush2.msra.mxu0 0.0
  %2449 = vmatprep.subr.mxu0 0.0
  %2450 = vmatpush2.msra.mxu0 0.0
  %2451 = vmatprep.subr.mxu0 0.0
  %2452 = vmatpush2.msra.mxu0 0.0
  %2453 = vmatprep.subr.mxu0 0.0
  %2454 = vmatpush2.msra.mxu0 0.0
  %2455 = vmatprep.subr.mxu0 0.0
  %2456 = vmatpush2.msra.mxu0 0.0
  %2457 = vmatprep.subr.mxu0 0.0
  %2458 = vmatpush2.msra.mxu0 0.0
  %2459 = vmatprep.mubr.f32.mxu0 0.0
  %2460 = vmatmul.mubr.f32.gmra.mxu0 %v2322
  %v2461 = vpop.f32.mrf.mxu0
  %v2462 = vadd.f32 0.0, %v2461
  %v2463 = vpop.f32.mrf.mxu0
  %2464 = vdwg.mxu0
  %v2466 = vrot.slane %v2391, 4
  %v2468 = vadd.f32 %v154, %v2466
  %v2469 = vxor.u32 %v2468, 2147483648
  %v2470 = vmul.f32 %v2469, 1.442695
  %v2471 = vpow.pop %v2470
  %v2472 = vadd.f32 %v2471, 1.0
  %v2473 = vrcp.pop %v2472
  %v2474 = vmul.f32 1.0, %v2473
  %v2476 = vrot.slane %v2393, 4
  %v2478 = vadd.f32 %v156, %v2476
  %v2479 = vxor.u32 %v2478, 2147483648
  %v2480 = vmul.f32 %v2479, 1.442695
  %v2481 = vpow.pop %v2480
  %v2482 = vadd.f32 %v2481, 1.0
  %v2483 = vrcp.pop %v2482
  %v2484 = vmul.f32 1.0, %v2483
  %v2485 = vadd.f32 %v2462, %v538
  %v2487 = vrot.slane %v2485, 4
  %v2489 = vmul.f32 %v2474, %v2487
  %v2490 = vadd.f32 %v230, %v2489
  %v2491 = vtanh.pop %v2490
  %v2492 = vsub.f32 1.0, %v2484
  %v2493 = vmul.f32 %v2492, %v2491
  %v2494 = vrot.slane %v2145, 6
  %v2496 = vmul.f32 %v2484, %v2494
  %v2497 = vadd.f32 %v2493, %v2496
  %v2499 = vrot.slane %v2320, 2
  %2501 = vmatprep.subr.mxu0 %v531
  %2502 = vmatpush1.msra.mxu0 %v530
  %2503 = vmatprep.subr.mxu0 %v528
  %2504 = vmatpush1.msra.mxu0 %v527
  %2505 = vmatprep.subr.mxu0 %v525
  %2506 = vmatpush1.msra.mxu0 %v524
  %2507 = vmatprep.subr.mxu0 %v522
  %2508 = vmatpush1.msra.mxu0 %v521
  %2509 = vmatprep.subr.mxu0 %v519
  %2510 = vmatpush1.msra.mxu0 %v518
  %2511 = vmatprep.subr.mxu0 %v516
  %2512 = vmatpush1.msra.mxu0 %v515
  %2513 = vmatprep.subr.mxu0 %v513
  %2514 = vmatpush1.msra.mxu0 %v512
  %2515 = vmatprep.subr.mxu0 %v510
  %2516 = vmatpush1.msra.mxu0 %v509
  %2517 = vmatprep.subr.mxu0 %v507
  %2518 = vmatpush1.msra.mxu0 %v506
  %2519 = vmatprep.subr.mxu0 %v504
  %2520 = vmatpush1.msra.mxu0 %v503
  %2521 = vmatprep.subr.mxu0 %v501
  %2522 = vmatpush1.msra.mxu0 %v500
  %2523 = vmatprep.subr.mxu0 %v498
  %2524 = vmatpush1.msra.mxu0 %v497
  %2525 = vmatprep.subr.mxu0 %v495
  %2526 = vmatpush1.msra.mxu0 %v494
  %2527 = vmatprep.subr.mxu0 %v492
  %2528 = vmatpush1.msra.mxu0 %v491
  %2529 = vmatprep.subr.mxu0 %v489
  %2530 = vmatpush1.msra.mxu0 %v488
  %2531 = vmatprep.subr.mxu0 %v486
  %2532 = vmatpush1.msra.mxu0 %v485
  %2533 = vmatprep.subr.mxu0 0.0
  %2534 = vmatpush2.msra.mxu0 0.0
  %2535 = vmatprep.subr.mxu0 0.0
  %2536 = vmatpush2.msra.mxu0 0.0
  %2537 = vmatprep.subr.mxu0 0.0
  %2538 = vmatpush2.msra.mxu0 0.0
  %2539 = vmatprep.subr.mxu0 0.0
  %2540 = vmatpush2.msra.mxu0 0.0
  %2541 = vmatprep.subr.mxu0 0.0
  %2542 = vmatpush2.msra.mxu0 0.0
  %2543 = vmatprep.subr.mxu0 0.0
  %2544 = vmatpush2.msra.mxu0 0.0
  %2545 = vmatprep.subr.mxu0 0.0
  %2546 = vmatpush2.msra.mxu0 0.0
  %2547 = vmatprep.subr.mxu0 0.0
  %2548 = vmatpush2.msra.mxu0 0.0
  %2549 = vmatprep.subr.mxu0 0.0
  %2550 = vmatpush2.msra.mxu0 0.0
  %2551 = vmatprep.subr.mxu0 0.0
  %2552 = vmatpush2.msra.mxu0 0.0
  %2553 = vmatprep.subr.mxu0 0.0
  %2554 = vmatpush2.msra.mxu0 0.0
  %2555 = vmatprep.subr.mxu0 0.0
  %2556 = vmatpush2.msra.mxu0 0.0
  %2557 = vmatprep.subr.mxu0 0.0
  %2558 = vmatpush2.msra.mxu0 0.0
  %2559 = vmatprep.subr.mxu0 0.0
  %2560 = vmatpush2.msra.mxu0 0.0
  %2561 = vmatprep.subr.mxu0 0.0
  %2562 = vmatpush2.msra.mxu0 0.0
  %2563 = vmatprep.subr.mxu0 0.0
  %2564 = vmatpush2.msra.mxu0 0.0
  %2565 = vmatprep.mubr.f32.mxu0 0.0
  %2566 = vmatmul.mubr.f32.gmra.mxu0 %v2499
  %v2567 = vpop.f32.mrf.mxu0
  %v2568 = vadd.f32 0.0, %v2567
  %v2569 = vpop.f32.mrf.mxu0
  %v2570 = vadd.f32 0.0, %v2569
  %2571 = vdwg.mxu0
  %2572 = vmatprep.subr.mxu0 0.0
  %2573 = vmatpush1.msra.mxu0 %v532
  %2574 = vmatprep.subr.mxu0 0.0
  %2575 = vmatpush1.msra.mxu0 %v529
  %2576 = vmatprep.subr.mxu0 0.0
  %2577 = vmatpush1.msra.mxu0 %v526
  %2578 = vmatprep.subr.mxu0 0.0
  %2579 = vmatpush1.msra.mxu0 %v523
  %2580 = vmatprep.subr.mxu0 0.0
  %2581 = vmatpush1.msra.mxu0 %v520
  %2582 = vmatprep.subr.mxu0 0.0
  %2583 = vmatpush1.msra.mxu0 %v517
  %2584 = vmatprep.subr.mxu0 0.0
  %2585 = vmatpush1.msra.mxu0 %v514
  %2586 = vmatprep.subr.mxu0 0.0
  %2587 = vmatpush1.msra.mxu0 %v511
  %2588 = vmatprep.subr.mxu0 0.0
  %2589 = vmatpush1.msra.mxu0 %v508
  %2590 = vmatprep.subr.mxu0 0.0
  %2591 = vmatpush1.msra.mxu0 %v505
  %2592 = vmatprep.subr.mxu0 0.0
  %2593 = vmatpush1.msra.mxu0 %v502
  %2594 = vmatprep.subr.mxu0 0.0
  %2595 = vmatpush1.msra.mxu0 %v499
  %2596 = vmatprep.subr.mxu0 0.0
  %2597 = vmatpush1.msra.mxu0 %v496
  %2598 = vmatprep.subr.mxu0 0.0
  %2599 = vmatpush1.msra.mxu0 %v493
  %2600 = vmatprep.subr.mxu0 0.0
  %2601 = vmatpush1.msra.mxu0 %v490
  %2602 = vmatprep.subr.mxu0 0.0
  %2603 = vmatpush1.msra.mxu0 %v487
  %2604 = vmatprep.subr.mxu0 0.0
  %2605 = vmatpush2.msra.mxu0 0.0
  %2606 = vmatprep.subr.mxu0 0.0
  %2607 = vmatpush2.msra.mxu0 0.0
  %2608 = vmatprep.subr.mxu0 0.0
  %2609 = vmatpush2.msra.mxu0 0.0
  %2610 = vmatprep.subr.mxu0 0.0
  %2611 = vmatpush2.msra.mxu0 0.0
  %2612 = vmatprep.subr.mxu0 0.0
  %2613 = vmatpush2.msra.mxu0 0.0
  %2614 = vmatprep.subr.mxu0 0.0
  %2615 = vmatpush2.msra.mxu0 0.0
  %2616 = vmatprep.subr.mxu0 0.0
  %2617 = vmatpush2.msra.mxu0 0.0
  %2618 = vmatprep.subr.mxu0 0.0
  %2619 = vmatpush2.msra.mxu0 0.0
  %2620 = vmatprep.subr.mxu0 0.0
  %2621 = vmatpush2.msra.mxu0 0.0
  %2622 = vmatprep.subr.mxu0 0.0
  %2623 = vmatpush2.msra.mxu0 0.0
  %2624 = vmatprep.subr.mxu0 0.0
  %2625 = vmatpush2.msra.mxu0 0.0
  %2626 = vmatprep.subr.mxu0 0.0
  %2627 = vmatpush2.msra.mxu0 0.0
  %2628 = vmatprep.subr.mxu0 0.0
  %2629 = vmatpush2.msra.mxu0 0.0
  %2630 = vmatprep.subr.mxu0 0.0
  %2631 = vmatpush2.msra.mxu0 0.0
  %2632 = vmatprep.subr.mxu0 0.0
  %2633 = vmatpush2.msra.mxu0 0.0
  %2634 = vmatprep.subr.mxu0 0.0
  %2635 = vmatpush2.msra.mxu0 0.0
  %2636 = vmatprep.mubr.f32.mxu0 0.0
  %2637 = vmatmul.mubr.f32.gmra.mxu0 %v2499
  %v2638 = vpop.f32.mrf.mxu0
  %v2639 = vadd.f32 0.0, %v2638
  %v2640 = vpop.f32.mrf.mxu0
  %2641 = vdwg.mxu0
  %v2643 = vrot.slane %v2568, 4
  %v2645 = vadd.f32 %v347, %v2643
  %v2646 = vxor.u32 %v2645, 2147483648
  %v2647 = vmul.f32 %v2646, 1.442695
  %v2648 = vpow.pop %v2647
  %v2649 = vadd.f32 %v2648, 1.0
  %v2650 = vrcp.pop %v2649
  %v2651 = vmul.f32 1.0, %v2650
  %v2653 = vrot.slane %v2570, 4
  %v2655 = vadd.f32 %v349, %v2653
  %v2656 = vxor.u32 %v2655, 2147483648
  %v2657 = vmul.f32 %v2656, 1.442695
  %v2658 = vpow.pop %v2657
  %v2659 = vadd.f32 %v2658, 1.0
  %v2660 = vrcp.pop %v2659
  %v2661 = vmul.f32 1.0, %v2660
  %v2662 = vadd.f32 %v2639, %v545
  %v2664 = vrot.slane %v2662, 4
  %v2666 = vmul.f32 %v2651, %v2664
  %v2667 = vadd.f32 %v429, %v2666
  %v2668 = vtanh.pop %v2667
  %v2669 = vsub.f32 1.0, %v2661
  %v2670 = vmul.f32 %v2669, %v2668
  %v2671 = vrot.slane %v2320, 6
  %v2673 = vmul.f32 %v2661, %v2671
  %v2674 = vadd.f32 %v2670, %v2673
  %v2676 = vrot.slane %v2497, 4
  %2678 = vmatprep.subr.mxu0 %v483
  %2679 = vmatpush1.msra.mxu0 %v482
  %2680 = vmatprep.subr.mxu0 %v480
  %2681 = vmatpush1.msra.mxu0 %v479
  %2682 = vmatprep.subr.mxu0 %v477
  %2683 = vmatpush1.msra.mxu0 %v476
  %2684 = vmatprep.subr.mxu0 %v474
  %2685 = vmatpush1.msra.mxu0 %v473
  %2686 = vmatprep.subr.mxu0 %v471
  %2687 = vmatpush1.msra.mxu0 %v470
  %2688 = vmatprep.subr.mxu0 %v468
  %2689 = vmatpush1.msra.mxu0 %v467
  %2690 = vmatprep.subr.mxu0 %v465
  %2691 = vmatpush1.msra.mxu0 %v464
  %2692 = vmatprep.subr.mxu0 %v462
  %2693 = vmatpush1.msra.mxu0 %v461
  %2694 = vmatprep.subr.mxu0 %v459
  %2695 = vmatpush1.msra.mxu0 %v458
  %2696 = vmatprep.subr.mxu0 %v456
  %2697 = vmatpush1.msra.mxu0 %v455
  %2698 = vmatprep.subr.mxu0 %v453
  %2699 = vmatpush1.msra.mxu0 %v452
  %2700 = vmatprep.subr.mxu0 %v450
  %2701 = vmatpush1.msra.mxu0 %v449
  %2702 = vmatprep.subr.mxu0 %v447
  %2703 = vmatpush1.msra.mxu0 %v446
  %2704 = vmatprep.subr.mxu0 %v444
  %2705 = vmatpush1.msra.mxu0 %v443
  %2706 = vmatprep.subr.mxu0 %v441
  %2707 = vmatpush1.msra.mxu0 %v440
  %2708 = vmatprep.subr.mxu0 %v438
  %2709 = vmatpush1.msra.mxu0 %v437
  %2710 = vmatprep.subr.mxu0 0.0
  %2711 = vmatpush2.msra.mxu0 0.0
  %2712 = vmatprep.subr.mxu0 0.0
  %2713 = vmatpush2.msra.mxu0 0.0
  %2714 = vmatprep.subr.mxu0 0.0
  %2715 = vmatpush2.msra.mxu0 0.0
  %2716 = vmatprep.subr.mxu0 0.0
  %2717 = vmatpush2.msra.mxu0 0.0
  %2718 = vmatprep.subr.mxu0 0.0
  %2719 = vmatpush2.msra.mxu0 0.0
  %2720 = vmatprep.subr.mxu0 0.0
  %2721 = vmatpush2.msra.mxu0 0.0
  %2722 = vmatprep.subr.mxu0 0.0
  %2723 = vmatpush2.msra.mxu0 0.0
  %2724 = vmatprep.subr.mxu0 0.0
  %2725 = vmatpush2.msra.mxu0 0.0
  %2726 = vmatprep.subr.mxu0 0.0
  %2727 = vmatpush2.msra.mxu0 0.0
  %2728 = vmatprep.subr.mxu0 0.0
  %2729 = vmatpush2.msra.mxu0 0.0
  %2730 = vmatprep.subr.mxu0 0.0
  %2731 = vmatpush2.msra.mxu0 0.0
  %2732 = vmatprep.subr.mxu0 0.0
  %2733 = vmatpush2.msra.mxu0 0.0
  %2734 = vmatprep.subr.mxu0 0.0
  %2735 = vmatpush2.msra.mxu0 0.0
  %2736 = vmatprep.subr.mxu0 0.0
  %2737 = vmatpush2.msra.mxu0 0.0
  %2738 = vmatprep.subr.mxu0 0.0
  %2739 = vmatpush2.msra.mxu0 0.0
  %2740 = vmatprep.subr.mxu0 0.0
  %2741 = vmatpush2.msra.mxu0 0.0
  %2742 = vmatprep.mubr.f32.mxu0 0.0
  %2743 = vmatmul.mubr.f32.gmra.mxu0 %v2676
  %v2744 = vpop.f32.mrf.mxu0
  %v2745 = vadd.f32 0.0, %v2744
  %v2746 = vpop.f32.mrf.mxu0
  %v2747 = vadd.f32 0.0, %v2746
  %2748 = vdwg.mxu0
  %2749 = vmatprep.subr.mxu0 0.0
  %2750 = vmatpush1.msra.mxu0 %v484
  %2751 = vmatprep.subr.mxu0 0.0
  %2752 = vmatpush1.msra.mxu0 %v481
  %2753 = vmatprep.subr.mxu0 0.0
  %2754 = vmatpush1.msra.mxu0 %v478
  %2755 = vmatprep.subr.mxu0 0.0
  %2756 = vmatpush1.msra.mxu0 %v475
  %2757 = vmatprep.subr.mxu0 0.0
  %2758 = vmatpush1.msra.mxu0 %v472
  %2759 = vmatprep.subr.mxu0 0.0
  %2760 = vmatpush1.msra.mxu0 %v469
  %2761 = vmatprep.subr.mxu0 0.0
  %2762 = vmatpush1.msra.mxu0 %v466
  %2763 = vmatprep.subr.mxu0 0.0
  %2764 = vmatpush1.msra.mxu0 %v463
  %2765 = vmatprep.subr.mxu0 0.0
  %2766 = vmatpush1.msra.mxu0 %v460
  %2767 = vmatprep.subr.mxu0 0.0
  %2768 = vmatpush1.msra.mxu0 %v457
  %2769 = vmatprep.subr.mxu0 0.0
  %2770 = vmatpush1.msra.mxu0 %v454
  %2771 = vmatprep.subr.mxu0 0.0
  %2772 = vmatpush1.msra.mxu0 %v451
  %2773 = vmatprep.subr.mxu0 0.0
  %2774 = vmatpush1.msra.mxu0 %v448
  %2775 = vmatprep.subr.mxu0 0.0
  %2776 = vmatpush1.msra.mxu0 %v445
  %2777 = vmatprep.subr.mxu0 0.0
  %2778 = vmatpush1.msra.mxu0 %v442
  %2779 = vmatprep.subr.mxu0 0.0
  %2780 = vmatpush1.msra.mxu0 %v439
  %2781 = vmatprep.subr.mxu0 0.0
  %2782 = vmatpush2.msra.mxu0 0.0
  %2783 = vmatprep.subr.mxu0 0.0
  %2784 = vmatpush2.msra.mxu0 0.0
  %2785 = vmatprep.subr.mxu0 0.0
  %2786 = vmatpush2.msra.mxu0 0.0
  %2787 = vmatprep.subr.mxu0 0.0
  %2788 = vmatpush2.msra.mxu0 0.0
  %2789 = vmatprep.subr.mxu0 0.0
  %2790 = vmatpush2.msra.mxu0 0.0
  %2791 = vmatprep.subr.mxu0 0.0
  %2792 = vmatpush2.msra.mxu0 0.0
  %2793 = vmatprep.subr.mxu0 0.0
  %2794 = vmatpush2.msra.mxu0 0.0
  %2795 = vmatprep.subr.mxu0 0.0
  %2796 = vmatpush2.msra.mxu0 0.0
  %2797 = vmatprep.subr.mxu0 0.0
  %2798 = vmatpush2.msra.mxu0 0.0
  %2799 = vmatprep.subr.mxu0 0.0
  %2800 = vmatpush2.msra.mxu0 0.0
  %2801 = vmatprep.subr.mxu0 0.0
  %2802 = vmatpush2.msra.mxu0 0.0
  %2803 = vmatprep.subr.mxu0 0.0
  %2804 = vmatpush2.msra.mxu0 0.0
  %2805 = vmatprep.subr.mxu0 0.0
  %2806 = vmatpush2.msra.mxu0 0.0
  %2807 = vmatprep.subr.mxu0 0.0
  %2808 = vmatpush2.msra.mxu0 0.0
  %2809 = vmatprep.subr.mxu0 0.0
  %2810 = vmatpush2.msra.mxu0 0.0
  %2811 = vmatprep.subr.mxu0 0.0
  %2812 = vmatpush2.msra.mxu0 0.0
  %2813 = vmatprep.mubr.f32.mxu0 0.0
  %2814 = vmatmul.mubr.f32.gmra.mxu0 %v2676
  %v2815 = vpop.f32.mrf.mxu0
  %v2816 = vadd.f32 0.0, %v2815
  %v2817 = vpop.f32.mrf.mxu0
  %2818 = vdwg.mxu0
  %v2820 = vrot.slane %v2745, 2
  %v2822 = vadd.f32 %v154, %v2820
  %v2823 = vxor.u32 %v2822, 2147483648
  %v2824 = vmul.f32 %v2823, 1.442695
  %v2825 = vpow.pop %v2824
  %v2826 = vadd.f32 %v2825, 1.0
  %v2827 = vrcp.pop %v2826
  %v2828 = vmul.f32 1.0, %v2827
  %v2830 = vrot.slane %v2747, 2
  %v2832 = vadd.f32 %v156, %v2830
  %v2833 = vxor.u32 %v2832, 2147483648
  %v2834 = vmul.f32 %v2833, 1.442695
  %v2835 = vpow.pop %v2834
  %v2836 = vadd.f32 %v2835, 1.0
  %v2837 = vrcp.pop %v2836
  %v2838 = vmul.f32 1.0, %v2837
  %v2839 = vadd.f32 %v2816, %v538
  %v2841 = vrot.slane %v2839, 2
  %v2843 = vmul.f32 %v2828, %v2841
  %v2844 = vadd.f32 %v230, %v2843
  %v2845 = vtanh.pop %v2844
  %v2846 = vsub.f32 1.0, %v2838
  %v2847 = vmul.f32 %v2846, %v2845
  %v2848 = vrot.slane %v2497, 6
  %v2850 = vmul.f32 %v2838, %v2848
  %v2851 = vadd.f32 %v2847, %v2850
  %v2853 = vrot.slane %v2674, 4
  %2855 = vmatprep.subr.mxu0 %v531
  %2856 = vmatpush1.msra.mxu0 %v530
  %2857 = vmatprep.subr.mxu0 %v528
  %2858 = vmatpush1.msra.mxu0 %v527
  %2859 = vmatprep.subr.mxu0 %v525
  %2860 = vmatpush1.msra.mxu0 %v524
  %2861 = vmatprep.subr.mxu0 %v522
  %2862 = vmatpush1.msra.mxu0 %v521
  %2863 = vmatprep.subr.mxu0 %v519
  %2864 = vmatpush1.msra.mxu0 %v518
  %2865 = vmatprep.subr.mxu0 %v516
  %2866 = vmatpush1.msra.mxu0 %v515
  %2867 = vmatprep.subr.mxu0 %v513
  %2868 = vmatpush1.msra.mxu0 %v512
  %2869 = vmatprep.subr.mxu0 %v510
  %2870 = vmatpush1.msra.mxu0 %v509
  %2871 = vmatprep.subr.mxu0 %v507
  %2872 = vmatpush1.msra.mxu0 %v506
  %2873 = vmatprep.subr.mxu0 %v504
  %2874 = vmatpush1.msra.mxu0 %v503
  %2875 = vmatprep.subr.mxu0 %v501
  %2876 = vmatpush1.msra.mxu0 %v500
  %2877 = vmatprep.subr.mxu0 %v498
  %2878 = vmatpush1.msra.mxu0 %v497
  %2879 = vmatprep.subr.mxu0 %v495
  %2880 = vmatpush1.msra.mxu0 %v494
  %2881 = vmatprep.subr.mxu0 %v492
  %2882 = vmatpush1.msra.mxu0 %v491
  %2883 = vmatprep.subr.mxu0 %v489
  %2884 = vmatpush1.msra.mxu0 %v488
  %2885 = vmatprep.subr.mxu0 %v486
  %2886 = vmatpush1.msra.mxu0 %v485
  %2887 = vmatprep.subr.mxu0 0.0
  %2888 = vmatpush2.msra.mxu0 0.0
  %2889 = vmatprep.subr.mxu0 0.0
  %2890 = vmatpush2.msra.mxu0 0.0
  %2891 = vmatprep.subr.mxu0 0.0
  %2892 = vmatpush2.msra.mxu0 0.0
  %2893 = vmatprep.subr.mxu0 0.0
  %2894 = vmatpush2.msra.mxu0 0.0
  %2895 = vmatprep.subr.mxu0 0.0
  %2896 = vmatpush2.msra.mxu0 0.0
  %2897 = vmatprep.subr.mxu0 0.0
  %2898 = vmatpush2.msra.mxu0 0.0
  %2899 = vmatprep.subr.mxu0 0.0
  %2900 = vmatpush2.msra.mxu0 0.0
  %2901 = vmatprep.subr.mxu0 0.0
  %2902 = vmatpush2.msra.mxu0 0.0
  %2903 = vmatprep.subr.mxu0 0.0
  %2904 = vmatpush2.msra.mxu0 0.0
  %2905 = vmatprep.subr.mxu0 0.0
  %2906 = vmatpush2.msra.mxu0 0.0
  %2907 = vmatprep.subr.mxu0 0.0
  %2908 = vmatpush2.msra.mxu0 0.0
  %2909 = vmatprep.subr.mxu0 0.0
  %2910 = vmatpush2.msra.mxu0 0.0
  %2911 = vmatprep.subr.mxu0 0.0
  %2912 = vmatpush2.msra.mxu0 0.0
  %2913 = vmatprep.subr.mxu0 0.0
  %2914 = vmatpush2.msra.mxu0 0.0
  %2915 = vmatprep.subr.mxu0 0.0
  %2916 = vmatpush2.msra.mxu0 0.0
  %2917 = vmatprep.subr.mxu0 0.0
  %2918 = vmatpush2.msra.mxu0 0.0
  %2919 = vmatprep.mubr.f32.mxu0 0.0
  %2920 = vmatmul.mubr.f32.gmra.mxu0 %v2853
  %v2921 = vpop.f32.mrf.mxu0
  %v2922 = vadd.f32 0.0, %v2921
  %v2923 = vpop.f32.mrf.mxu0
  %v2924 = vadd.f32 0.0, %v2923
  %2925 = vdwg.mxu0
  %2926 = vmatprep.subr.mxu0 0.0
  %2927 = vmatpush1.msra.mxu0 %v532
  %2928 = vmatprep.subr.mxu0 0.0
  %2929 = vmatpush1.msra.mxu0 %v529
  %2930 = vmatprep.subr.mxu0 0.0
  %2931 = vmatpush1.msra.mxu0 %v526
  %2932 = vmatprep.subr.mxu0 0.0
  %2933 = vmatpush1.msra.mxu0 %v523
  %2934 = vmatprep.subr.mxu0 0.0
  %2935 = vmatpush1.msra.mxu0 %v520
  %2936 = vmatprep.subr.mxu0 0.0
  %2937 = vmatpush1.msra.mxu0 %v517
  %2938 = vmatprep.subr.mxu0 0.0
  %2939 = vmatpush1.msra.mxu0 %v514
  %2940 = vmatprep.subr.mxu0 0.0
  %2941 = vmatpush1.msra.mxu0 %v511
  %2942 = vmatprep.subr.mxu0 0.0
  %2943 = vmatpush1.msra.mxu0 %v508
  %2944 = vmatprep.subr.mxu0 0.0
  %2945 = vmatpush1.msra.mxu0 %v505
  %2946 = vmatprep.subr.mxu0 0.0
  %2947 = vmatpush1.msra.mxu0 %v502
  %2948 = vmatprep.subr.mxu0 0.0
  %2949 = vmatpush1.msra.mxu0 %v499
  %2950 = vmatprep.subr.mxu0 0.0
  %2951 = vmatpush1.msra.mxu0 %v496
  %2952 = vmatprep.subr.mxu0 0.0
  %2953 = vmatpush1.msra.mxu0 %v493
  %2954 = vmatprep.subr.mxu0 0.0
  %2955 = vmatpush1.msra.mxu0 %v490
  %2956 = vmatprep.subr.mxu0 0.0
  %2957 = vmatpush1.msra.mxu0 %v487
  %2958 = vmatprep.subr.mxu0 0.0
  %2959 = vmatpush2.msra.mxu0 0.0
  %2960 = vmatprep.subr.mxu0 0.0
  %2961 = vmatpush2.msra.mxu0 0.0
  %2962 = vmatprep.subr.mxu0 0.0
  %2963 = vmatpush2.msra.mxu0 0.0
  %2964 = vmatprep.subr.mxu0 0.0
  %2965 = vmatpush2.msra.mxu0 0.0
  %2966 = vmatprep.subr.mxu0 0.0
  %2967 = vmatpush2.msra.mxu0 0.0
  %2968 = vmatprep.subr.mxu0 0.0
  %2969 = vmatpush2.msra.mxu0 0.0
  %2970 = vmatprep.subr.mxu0 0.0
  %2971 = vmatpush2.msra.mxu0 0.0
  %2972 = vmatprep.subr.mxu0 0.0
  %2973 = vmatpush2.msra.mxu0 0.0
  %2974 = vmatprep.subr.mxu0 0.0
  %2975 = vmatpush2.msra.mxu0 0.0
  %2976 = vmatprep.subr.mxu0 0.0
  %2977 = vmatpush2.msra.mxu0 0.0
  %2978 = vmatprep.subr.mxu0 0.0
  %2979 = vmatpush2.msra.mxu0 0.0
  %2980 = vmatprep.subr.mxu0 0.0
  %2981 = vmatpush2.msra.mxu0 0.0
  %2982 = vmatprep.subr.mxu0 0.0
  %2983 = vmatpush2.msra.mxu0 0.0
  %2984 = vmatprep.subr.mxu0 0.0
  %2985 = vmatpush2.msra.mxu0 0.0
  %2986 = vmatprep.subr.mxu0 0.0
  %2987 = vmatpush2.msra.mxu0 0.0
  %2988 = vmatprep.subr.mxu0 0.0
  %2989 = vmatpush2.msra.mxu0 0.0
  %2990 = vmatprep.mubr.f32.mxu0 0.0
  %2991 = vmatmul.mubr.f32.gmra.mxu0 %v2853
  %v2992 = vpop.f32.mrf.mxu0
  %v2993 = vadd.f32 0.0, %v2992
  %v2994 = vpop.f32.mrf.mxu0
  %2995 = vdwg.mxu0
  %v2997 = vrot.slane %v2922, 2
  %v2999 = vadd.f32 %v347, %v2997
  %v3000 = vxor.u32 %v2999, 2147483648
  %v3001 = vmul.f32 %v3000, 1.442695
  %v3002 = vpow.pop %v3001
  %v3003 = vadd.f32 %v3002, 1.0
  %v3004 = vrcp.pop %v3003
  %v3005 = vmul.f32 1.0, %v3004
  %v3007 = vrot.slane %v2924, 2
  %v3009 = vadd.f32 %v349, %v3007
  %v3010 = vxor.u32 %v3009, 2147483648
  %v3011 = vmul.f32 %v3010, 1.442695
  %v3012 = vpow.pop %v3011
  %v3013 = vadd.f32 %v3012, 1.0
  %v3014 = vrcp.pop %v3013
  %v3015 = vmul.f32 1.0, %v3014
  %v3016 = vadd.f32 %v2993, %v545
  %v3018 = vrot.slane %v3016, 2
  %v3020 = vmul.f32 %v3005, %v3018
  %v3021 = vadd.f32 %v429, %v3020
  %v3022 = vtanh.pop %v3021
  %v3023 = vsub.f32 1.0, %v3015
  %v3024 = vmul.f32 %v3023, %v3022
  %v3025 = vrot.slane %v2674, 6
  %v3027 = vmul.f32 %v3015, %v3025
  %v3028 = vadd.f32 %v3024, %v3027
  %v3030 = vrot.slane %v3028, 6
  %3032 = vmatprep.subr.mxu0 %v531
  %3033 = vmatpush1.msra.mxu0 %v530
  %3034 = vmatprep.subr.mxu0 %v528
  %3035 = vmatpush1.msra.mxu0 %v527
  %3036 = vmatprep.subr.mxu0 %v525
  %3037 = vmatpush1.msra.mxu0 %v524
  %3038 = vmatprep.subr.mxu0 %v522
  %3039 = vmatpush1.msra.mxu0 %v521
  %3040 = vmatprep.subr.mxu0 %v519
  %3041 = vmatpush1.msra.mxu0 %v518
  %3042 = vmatprep.subr.mxu0 %v516
  %3043 = vmatpush1.msra.mxu0 %v515
  %3044 = vmatprep.subr.mxu0 %v513
  %3045 = vmatpush1.msra.mxu0 %v512
  %3046 = vmatprep.subr.mxu0 %v510
  %3047 = vmatpush1.msra.mxu0 %v509
  %3048 = vmatprep.subr.mxu0 %v507
  %3049 = vmatpush1.msra.mxu0 %v506
  %3050 = vmatprep.subr.mxu0 %v504
  %3051 = vmatpush1.msra.mxu0 %v503
  %3052 = vmatprep.subr.mxu0 %v501
  %3053 = vmatpush1.msra.mxu0 %v500
  %3054 = vmatprep.subr.mxu0 %v498
  %3055 = vmatpush1.msra.mxu0 %v497
  %3056 = vmatprep.subr.mxu0 %v495
  %3057 = vmatpush1.msra.mxu0 %v494
  %3058 = vmatprep.subr.mxu0 %v492
  %3059 = vmatpush1.msra.mxu0 %v491
  %3060 = vmatprep.subr.mxu0 %v489
  %3061 = vmatpush1.msra.mxu0 %v488
  %3062 = vmatprep.subr.mxu0 %v486
  %3063 = vmatpush1.msra.mxu0 %v485
  %3064 = vmatprep.subr.mxu0 0.0
  %3065 = vmatpush2.msra.mxu0 0.0
  %3066 = vmatprep.subr.mxu0 0.0
  %3067 = vmatpush2.msra.mxu0 0.0
  %3068 = vmatprep.subr.mxu0 0.0
  %3069 = vmatpush2.msra.mxu0 0.0
  %3070 = vmatprep.subr.mxu0 0.0
  %3071 = vmatpush2.msra.mxu0 0.0
  %3072 = vmatprep.subr.mxu0 0.0
  %3073 = vmatpush2.msra.mxu0 0.0
  %3074 = vmatprep.subr.mxu0 0.0
  %3075 = vmatpush2.msra.mxu0 0.0
  %3076 = vmatprep.subr.mxu0 0.0
  %3077 = vmatpush2.msra.mxu0 0.0
  %3078 = vmatprep.subr.mxu0 0.0
  %3079 = vmatpush2.msra.mxu0 0.0
  %3080 = vmatprep.subr.mxu0 0.0
  %3081 = vmatpush2.msra.mxu0 0.0
  %3082 = vmatprep.subr.mxu0 0.0
  %3083 = vmatpush2.msra.mxu0 0.0
  %3084 = vmatprep.subr.mxu0 0.0
  %3085 = vmatpush2.msra.mxu0 0.0
  %3086 = vmatprep.subr.mxu0 0.0
  %3087 = vmatpush2.msra.mxu0 0.0
  %3088 = vmatprep.subr.mxu0 0.0
  %3089 = vmatpush2.msra.mxu0 0.0
  %3090 = vmatprep.subr.mxu0 0.0
  %3091 = vmatpush2.msra.mxu0 0.0
  %3092 = vmatprep.subr.mxu0 0.0
  %3093 = vmatpush2.msra.mxu0 0.0
  %3094 = vmatprep.subr.mxu0 0.0
  %3095 = vmatpush2.msra.mxu0 0.0
  %3096 = vmatprep.mubr.f32.mxu0 0.0
  %3097 = vmatmul.mubr.f32.gmra.mxu0 %v3030
  %v3098 = vpop.f32.mrf.mxu0
  %v3099 = vadd.f32 0.0, %v3098
  %v3100 = vpop.f32.mrf.mxu0
  %v3101 = vadd.f32 0.0, %v3100
  %3102 = vdwg.mxu0
  %3103 = vmatprep.subr.mxu0 0.0
  %3104 = vmatpush1.msra.mxu0 %v532
  %3105 = vmatprep.subr.mxu0 0.0
  %3106 = vmatpush1.msra.mxu0 %v529
  %3107 = vmatprep.subr.mxu0 0.0
  %3108 = vmatpush1.msra.mxu0 %v526
  %3109 = vmatprep.subr.mxu0 0.0
  %3110 = vmatpush1.msra.mxu0 %v523
  %3111 = vmatprep.subr.mxu0 0.0
  %3112 = vmatpush1.msra.mxu0 %v520
  %3113 = vmatprep.subr.mxu0 0.0
  %3114 = vmatpush1.msra.mxu0 %v517
  %3115 = vmatprep.subr.mxu0 0.0
  %3116 = vmatpush1.msra.mxu0 %v514
  %3117 = vmatprep.subr.mxu0 0.0
  %3118 = vmatpush1.msra.mxu0 %v511
  %3119 = vmatprep.subr.mxu0 0.0
  %3120 = vmatpush1.msra.mxu0 %v508
  %3121 = vmatprep.subr.mxu0 0.0
  %3122 = vmatpush1.msra.mxu0 %v505
  %3123 = vmatprep.subr.mxu0 0.0
  %3124 = vmatpush1.msra.mxu0 %v502
  %3125 = vmatprep.subr.mxu0 0.0
  %3126 = vmatpush1.msra.mxu0 %v499
  %3127 = vmatprep.subr.mxu0 0.0
  %3128 = vmatpush1.msra.mxu0 %v496
  %3129 = vmatprep.subr.mxu0 0.0
  %3130 = vmatpush1.msra.mxu0 %v493
  %3131 = vmatprep.subr.mxu0 0.0
  %3132 = vmatpush1.msra.mxu0 %v490
  %3133 = vmatprep.subr.mxu0 0.0
  %3134 = vmatpush1.msra.mxu0 %v487
  %3135 = vmatprep.subr.mxu0 0.0
  %3136 = vmatpush2.msra.mxu0 0.0
  %3137 = vmatprep.subr.mxu0 0.0
  %3138 = vmatpush2.msra.mxu0 0.0
  %3139 = vmatprep.subr.mxu0 0.0
  %3140 = vmatpush2.msra.mxu0 0.0
  %3141 = vmatprep.subr.mxu0 0.0
  %3142 = vmatpush2.msra.mxu0 0.0
  %3143 = vmatprep.subr.mxu0 0.0
  %3144 = vmatpush2.msra.mxu0 0.0
  %3145 = vmatprep.subr.mxu0 0.0
  %3146 = vmatpush2.msra.mxu0 0.0
  %3147 = vmatprep.subr.mxu0 0.0
  %3148 = vmatpush2.msra.mxu0 0.0
  %3149 = vmatprep.subr.mxu0 0.0
  %3150 = vmatpush2.msra.mxu0 0.0
  %3151 = vmatprep.subr.mxu0 0.0
  %3152 = vmatpush2.msra.mxu0 0.0
  %3153 = vmatprep.subr.mxu0 0.0
  %3154 = vmatpush2.msra.mxu0 0.0
  %3155 = vmatprep.subr.mxu0 0.0
  %3156 = vmatpush2.msra.mxu0 0.0
  %3157 = vmatprep.subr.mxu0 0.0
  %3158 = vmatpush2.msra.mxu0 0.0
  %3159 = vmatprep.subr.mxu0 0.0
  %3160 = vmatpush2.msra.mxu0 0.0
  %3161 = vmatprep.subr.mxu0 0.0
  %3162 = vmatpush2.msra.mxu0 0.0
  %3163 = vmatprep.subr.mxu0 0.0
  %3164 = vmatpush2.msra.mxu0 0.0
  %3165 = vmatprep.subr.mxu0 0.0
  %3166 = vmatpush2.msra.mxu0 0.0
  %3167 = vmatprep.mubr.f32.mxu0 0.0
  %3168 = vmatmul.mubr.f32.gmra.mxu0 %v3030
  %v3169 = vpop.f32.mrf.mxu0
  %v3170 = vadd.f32 0.0, %v3169
  %v3171 = vpop.f32.mrf.mxu0
  %3172 = vdwg.mxu0
  %v3173 = vadd.f32 %v353, %v3099
  %v3174 = vxor.u32 %v3173, 2147483648
  %v3175 = vmul.f32 %v3174, 1.442695
  %v3176 = vpow.pop %v3175
  %v3177 = vadd.f32 %v3176, 1.0
  %v3178 = vrcp.pop %v3177
  %v3179 = vmul.f32 1.0, %v3178
  %v3180 = vadd.f32 %v355, %v3101
  %v3181 = vxor.u32 %v3180, 2147483648
  %v3182 = vmul.f32 %v3181, 1.442695
  %v3183 = vpow.pop %v3182
  %v3184 = vadd.f32 %v3183, 1.0
  %v3185 = vrcp.pop %v3184
  %v3186 = vmul.f32 1.0, %v3185
  %v3187 = vadd.f32 %v3170, %v545
  %v3188 = vmul.f32 %v3179, %v3187
  %v3189 = vadd.f32 %v434, %v3188
  %v3190 = vtanh.pop %v3189
  %v3191 = vsub.f32 1.0, %v3186
  %v3192 = vmul.f32 %v3191, %v3190
  %v3193 = vmul.f32 %v3186, %v3030
  %v3194 = vadd.f32 %v3192, %v3193
  %3195 = vmatprep.subr.mxu0 %v531
  %3196 = vmatpush1.msra.mxu0 %v530
  %3197 = vmatprep.subr.mxu0 %v528
  %3198 = vmatpush1.msra.mxu0 %v527
  %3199 = vmatprep.subr.mxu0 %v525
  %3200 = vmatpush1.msra.mxu0 %v524
  %3201 = vmatprep.subr.mxu0 %v522
  %3202 = vmatpush1.msra.mxu0 %v521
  %3203 = vmatprep.subr.mxu0 %v519
  %3204 = vmatpush1.msra.mxu0 %v518
  %3205 = vmatprep.subr.mxu0 %v516
  %3206 = vmatpush1.msra.mxu0 %v515
  %3207 = vmatprep.subr.mxu0 %v513
  %3208 = vmatpush1.msra.mxu0 %v512
  %3209 = vmatprep.subr.mxu0 %v510
  %3210 = vmatpush1.msra.mxu0 %v509
  %3211 = vmatprep.subr.mxu0 %v507
  %3212 = vmatpush1.msra.mxu0 %v506
  %3213 = vmatprep.subr.mxu0 %v504
  %3214 = vmatpush1.msra.mxu0 %v503
  %3215 = vmatprep.subr.mxu0 %v501
  %3216 = vmatpush1.msra.mxu0 %v500
  %3217 = vmatprep.subr.mxu0 %v498
  %3218 = vmatpush1.msra.mxu0 %v497
  %3219 = vmatprep.subr.mxu0 %v495
  %3220 = vmatpush1.msra.mxu0 %v494
  %3221 = vmatprep.subr.mxu0 %v492
  %3222 = vmatpush1.msra.mxu0 %v491
  %3223 = vmatprep.subr.mxu0 %v489
  %3224 = vmatpush1.msra.mxu0 %v488
  %3225 = vmatprep.subr.mxu0 %v486
  %3226 = vmatpush1.msra.mxu0 %v485
  %3227 = vmatprep.subr.mxu0 0.0
  %3228 = vmatpush2.msra.mxu0 0.0
  %3229 = vmatprep.subr.mxu0 0.0
  %3230 = vmatpush2.msra.mxu0 0.0
  %3231 = vmatprep.subr.mxu0 0.0
  %3232 = vmatpush2.msra.mxu0 0.0
  %3233 = vmatprep.subr.mxu0 0.0
  %3234 = vmatpush2.msra.mxu0 0.0
  %3235 = vmatprep.subr.mxu0 0.0
  %3236 = vmatpush2.msra.mxu0 0.0
  %3237 = vmatprep.subr.mxu0 0.0
  %3238 = vmatpush2.msra.mxu0 0.0
  %3239 = vmatprep.subr.mxu0 0.0
  %3240 = vmatpush2.msra.mxu0 0.0
  %3241 = vmatprep.subr.mxu0 0.0
  %3242 = vmatpush2.msra.mxu0 0.0
  %3243 = vmatprep.subr.mxu0 0.0
  %3244 = vmatpush2.msra.mxu0 0.0
  %3245 = vmatprep.subr.mxu0 0.0
  %3246 = vmatpush2.msra.mxu0 0.0
  %3247 = vmatprep.subr.mxu0 0.0
  %3248 = vmatpush2.msra.mxu0 0.0
  %3249 = vmatprep.subr.mxu0 0.0
  %3250 = vmatpush2.msra.mxu0 0.0
  %3251 = vmatprep.subr.mxu0 0.0
  %3252 = vmatpush2.msra.mxu0 0.0
  %3253 = vmatprep.subr.mxu0 0.0
  %3254 = vmatpush2.msra.mxu0 0.0
  %3255 = vmatprep.subr.mxu0 0.0
  %3256 = vmatpush2.msra.mxu0 0.0
  %3257 = vmatprep.subr.mxu0 0.0
  %3258 = vmatpush2.msra.mxu0 0.0
  %3259 = vmatprep.mubr.f32.mxu0 0.0
  %3260 = vmatmul.mubr.f32.gmra.mxu0 %v3194
  %v3261 = vpop.f32.mrf.mxu0
  %v3262 = vadd.f32 0.0, %v3261
  %v3263 = vpop.f32.mrf.mxu0
  %v3264 = vadd.f32 0.0, %v3263
  %3265 = vdwg.mxu0
  %3266 = vmatprep.subr.mxu0 0.0
  %3267 = vmatpush1.msra.mxu0 %v532
  %3268 = vmatprep.subr.mxu0 0.0
  %3269 = vmatpush1.msra.mxu0 %v529
  %3270 = vmatprep.subr.mxu0 0.0
  %3271 = vmatpush1.msra.mxu0 %v526
  %3272 = vmatprep.subr.mxu0 0.0
  %3273 = vmatpush1.msra.mxu0 %v523
  %3274 = vmatprep.subr.mxu0 0.0
  %3275 = vmatpush1.msra.mxu0 %v520
  %3276 = vmatprep.subr.mxu0 0.0
  %3277 = vmatpush1.msra.mxu0 %v517
  %3278 = vmatprep.subr.mxu0 0.0
  %3279 = vmatpush1.msra.mxu0 %v514
  %3280 = vmatprep.subr.mxu0 0.0
  %3281 = vmatpush1.msra.mxu0 %v511
  %3282 = vmatprep.subr.mxu0 0.0
  %3283 = vmatpush1.msra.mxu0 %v508
  %3284 = vmatprep.subr.mxu0 0.0
  %3285 = vmatpush1.msra.mxu0 %v505
  %3286 = vmatprep.subr.mxu0 0.0
  %3287 = vmatpush1.msra.mxu0 %v502
  %3288 = vmatprep.subr.mxu0 0.0
  %3289 = vmatpush1.msra.mxu0 %v499
  %3290 = vmatprep.subr.mxu0 0.0
  %3291 = vmatpush1.msra.mxu0 %v496
  %3292 = vmatprep.subr.mxu0 0.0
  %3293 = vmatpush1.msra.mxu0 %v493
  %3294 = vmatprep.subr.mxu0 0.0
  %3295 = vmatpush1.msra.mxu0 %v490
  %3296 = vmatprep.subr.mxu0 0.0
  %3297 = vmatpush1.msra.mxu0 %v487
  %3298 = vmatprep.subr.mxu0 0.0
  %3299 = vmatpush2.msra.mxu0 0.0
  %3300 = vmatprep.subr.mxu0 0.0
  %3301 = vmatpush2.msra.mxu0 0.0
  %3302 = vmatprep.subr.mxu0 0.0
  %3303 = vmatpush2.msra.mxu0 0.0
  %3304 = vmatprep.subr.mxu0 0.0
  %3305 = vmatpush2.msra.mxu0 0.0
  %3306 = vmatprep.subr.mxu0 0.0
  %3307 = vmatpush2.msra.mxu0 0.0
  %3308 = vmatprep.subr.mxu0 0.0
  %3309 = vmatpush2.msra.mxu0 0.0
  %3310 = vmatprep.subr.mxu0 0.0
  %3311 = vmatpush2.msra.mxu0 0.0
  %3312 = vmatprep.subr.mxu0 0.0
  %3313 = vmatpush2.msra.mxu0 0.0
  %3314 = vmatprep.subr.mxu0 0.0
  %3315 = vmatpush2.msra.mxu0 0.0
  %3316 = vmatprep.subr.mxu0 0.0
  %3317 = vmatpush2.msra.mxu0 0.0
  %3318 = vmatprep.subr.mxu0 0.0
  %3319 = vmatpush2.msra.mxu0 0.0
  %3320 = vmatprep.subr.mxu0 0.0
  %3321 = vmatpush2.msra.mxu0 0.0
  %3322 = vmatprep.subr.mxu0 0.0
  %3323 = vmatpush2.msra.mxu0 0.0
  %3324 = vmatprep.subr.mxu0 0.0
  %3325 = vmatpush2.msra.mxu0 0.0
  %3326 = vmatprep.subr.mxu0 0.0
  %3327 = vmatpush2.msra.mxu0 0.0
  %3328 = vmatprep.subr.mxu0 0.0
  %3329 = vmatpush2.msra.mxu0 0.0
  %3330 = vmatprep.mubr.f32.mxu0 0.0
  %3331 = vmatmul.mubr.f32.gmra.mxu0 %v3194
  %v3332 = vpop.f32.mrf.mxu0
  %v3333 = vadd.f32 0.0, %v3332
  %v3334 = vpop.f32.mrf.mxu0
  %3335 = vdwg.mxu0
  %v3337 = vrot.slane %v3262, 6
  %v3339 = vadd.f32 %v353, %v3337
  %v3340 = vxor.u32 %v3339, 2147483648
  %v3341 = vmul.f32 %v3340, 1.442695
  %v3342 = vpow.pop %v3341
  %v3343 = vadd.f32 %v3342, 1.0
  %v3344 = vrcp.pop %v3343
  %v3345 = vmul.f32 1.0, %v3344
  %v3347 = vrot.slane %v3264, 6
  %v3349 = vadd.f32 %v355, %v3347
  %v3350 = vxor.u32 %v3349, 2147483648
  %v3351 = vmul.f32 %v3350, 1.442695
  %v3352 = vpow.pop %v3351
  %v3353 = vadd.f32 %v3352, 1.0
  %v3354 = vrcp.pop %v3353
  %v3355 = vmul.f32 1.0, %v3354
  %v3356 = vadd.f32 %v3333, %v545
  %v3358 = vrot.slane %v3356, 6
  %v3360 = vmul.f32 %v3345, %v3358
  %v3361 = vadd.f32 %v434, %v3360
  %v3362 = vtanh.pop %v3361
  %v3363 = vsub.f32 1.0, %v3355
  %v3364 = vmul.f32 %v3363, %v3362
  %v3366 = vrot.slane %v3194, 6
  %v3368 = vmul.f32 %v3355, %v3366
  %v3369 = vadd.f32 %v3364, %v3368
  %v3371 = vrot.slane %v3369, 2
  %3373 = vmatprep.subr.mxu0 %v531
  %3374 = vmatpush1.msra.mxu0 %v530
  %3375 = vmatprep.subr.mxu0 %v528
  %3376 = vmatpush1.msra.mxu0 %v527
  %3377 = vmatprep.subr.mxu0 %v525
  %3378 = vmatpush1.msra.mxu0 %v524
  %3379 = vmatprep.subr.mxu0 %v522
  %3380 = vmatpush1.msra.mxu0 %v521
  %3381 = vmatprep.subr.mxu0 %v519
  %3382 = vmatpush1.msra.mxu0 %v518
  %3383 = vmatprep.subr.mxu0 %v516
  %3384 = vmatpush1.msra.mxu0 %v515
  %3385 = vmatprep.subr.mxu0 %v513
  %3386 = vmatpush1.msra.mxu0 %v512
  %3387 = vmatprep.subr.mxu0 %v510
  %3388 = vmatpush1.msra.mxu0 %v509
  %3389 = vmatprep.subr.mxu0 %v507
  %3390 = vmatpush1.msra.mxu0 %v506
  %3391 = vmatprep.subr.mxu0 %v504
  %3392 = vmatpush1.msra.mxu0 %v503
  %3393 = vmatprep.subr.mxu0 %v501
  %3394 = vmatpush1.msra.mxu0 %v500
  %3395 = vmatprep.subr.mxu0 %v498
  %3396 = vmatpush1.msra.mxu0 %v497
  %3397 = vmatprep.subr.mxu0 %v495
  %3398 = vmatpush1.msra.mxu0 %v494
  %3399 = vmatprep.subr.mxu0 %v492
  %3400 = vmatpush1.msra.mxu0 %v491
  %3401 = vmatprep.subr.mxu0 %v489
  %3402 = vmatpush1.msra.mxu0 %v488
  %3403 = vmatprep.subr.mxu0 %v486
  %3404 = vmatpush1.msra.mxu0 %v485
  %3405 = vmatprep.subr.mxu0 0.0
  %3406 = vmatpush2.msra.mxu0 0.0
  %3407 = vmatprep.subr.mxu0 0.0
  %3408 = vmatpush2.msra.mxu0 0.0
  %3409 = vmatprep.subr.mxu0 0.0
  %3410 = vmatpush2.msra.mxu0 0.0
  %3411 = vmatprep.subr.mxu0 0.0
  %3412 = vmatpush2.msra.mxu0 0.0
  %3413 = vmatprep.subr.mxu0 0.0
  %3414 = vmatpush2.msra.mxu0 0.0
  %3415 = vmatprep.subr.mxu0 0.0
  %3416 = vmatpush2.msra.mxu0 0.0
  %3417 = vmatprep.subr.mxu0 0.0
  %3418 = vmatpush2.msra.mxu0 0.0
  %3419 = vmatprep.subr.mxu0 0.0
  %3420 = vmatpush2.msra.mxu0 0.0
  %3421 = vmatprep.subr.mxu0 0.0
  %3422 = vmatpush2.msra.mxu0 0.0
  %3423 = vmatprep.subr.mxu0 0.0
  %3424 = vmatpush2.msra.mxu0 0.0
  %3425 = vmatprep.subr.mxu0 0.0
  %3426 = vmatpush2.msra.mxu0 0.0
  %3427 = vmatprep.subr.mxu0 0.0
  %3428 = vmatpush2.msra.mxu0 0.0
  %3429 = vmatprep.subr.mxu0 0.0
  %3430 = vmatpush2.msra.mxu0 0.0
  %3431 = vmatprep.subr.mxu0 0.0
  %3432 = vmatpush2.msra.mxu0 0.0
  %3433 = vmatprep.subr.mxu0 0.0
  %3434 = vmatpush2.msra.mxu0 0.0
  %3435 = vmatprep.subr.mxu0 0.0
  %3436 = vmatpush2.msra.mxu0 0.0
  %3437 = vmatprep.mubr.f32.mxu0 0.0
  %3438 = vmatmul.mubr.f32.gmra.mxu0 %v3371
  %v3439 = vpop.f32.mrf.mxu0
  %v3440 = vadd.f32 0.0, %v3439
  %v3441 = vpop.f32.mrf.mxu0
  %v3442 = vadd.f32 0.0, %v3441
  %3443 = vdwg.mxu0
  %3444 = vmatprep.subr.mxu0 0.0
  %3445 = vmatpush1.msra.mxu0 %v532
  %3446 = vmatprep.subr.mxu0 0.0
  %3447 = vmatpush1.msra.mxu0 %v529
  %3448 = vmatprep.subr.mxu0 0.0
  %3449 = vmatpush1.msra.mxu0 %v526
  %3450 = vmatprep.subr.mxu0 0.0
  %3451 = vmatpush1.msra.mxu0 %v523
  %3452 = vmatprep.subr.mxu0 0.0
  %3453 = vmatpush1.msra.mxu0 %v520
  %3454 = vmatprep.subr.mxu0 0.0
  %3455 = vmatpush1.msra.mxu0 %v517
  %3456 = vmatprep.subr.mxu0 0.0
  %3457 = vmatpush1.msra.mxu0 %v514
  %3458 = vmatprep.subr.mxu0 0.0
  %3459 = vmatpush1.msra.mxu0 %v511
  %3460 = vmatprep.subr.mxu0 0.0
  %3461 = vmatpush1.msra.mxu0 %v508
  %3462 = vmatprep.subr.mxu0 0.0
  %3463 = vmatpush1.msra.mxu0 %v505
  %3464 = vmatprep.subr.mxu0 0.0
  %3465 = vmatpush1.msra.mxu0 %v502
  %3466 = vmatprep.subr.mxu0 0.0
  %3467 = vmatpush1.msra.mxu0 %v499
  %3468 = vmatprep.subr.mxu0 0.0
  %3469 = vmatpush1.msra.mxu0 %v496
  %3470 = vmatprep.subr.mxu0 0.0
  %3471 = vmatpush1.msra.mxu0 %v493
  %3472 = vmatprep.subr.mxu0 0.0
  %3473 = vmatpush1.msra.mxu0 %v490
  %3474 = vmatprep.subr.mxu0 0.0
  %3475 = vmatpush1.msra.mxu0 %v487
  %3476 = vmatprep.subr.mxu0 0.0
  %3477 = vmatpush2.msra.mxu0 0.0
  %3478 = vmatprep.subr.mxu0 0.0
  %3479 = vmatpush2.msra.mxu0 0.0
  %3480 = vmatprep.subr.mxu0 0.0
  %3481 = vmatpush2.msra.mxu0 0.0
  %3482 = vmatprep.subr.mxu0 0.0
  %3483 = vmatpush2.msra.mxu0 0.0
  %3484 = vmatprep.subr.mxu0 0.0
  %3485 = vmatpush2.msra.mxu0 0.0
  %3486 = vmatprep.subr.mxu0 0.0
  %3487 = vmatpush2.msra.mxu0 0.0
  %3488 = vmatprep.subr.mxu0 0.0
  %3489 = vmatpush2.msra.mxu0 0.0
  %3490 = vmatprep.subr.mxu0 0.0
  %3491 = vmatpush2.msra.mxu0 0.0
  %3492 = vmatprep.subr.mxu0 0.0
  %3493 = vmatpush2.msra.mxu0 0.0
  %3494 = vmatprep.subr.mxu0 0.0
  %3495 = vmatpush2.msra.mxu0 0.0
  %3496 = vmatprep.subr.mxu0 0.0
  %3497 = vmatpush2.msra.mxu0 0.0
  %3498 = vmatprep.subr.mxu0 0.0
  %3499 = vmatpush2.msra.mxu0 0.0
  %3500 = vmatprep.subr.mxu0 0.0
  %3501 = vmatpush2.msra.mxu0 0.0
  %3502 = vmatprep.subr.mxu0 0.0
  %3503 = vmatpush2.msra.mxu0 0.0
  %3504 = vmatprep.subr.mxu0 0.0
  %3505 = vmatpush2.msra.mxu0 0.0
  %3506 = vmatprep.subr.mxu0 0.0
  %3507 = vmatpush2.msra.mxu0 0.0
  %3508 = vmatprep.mubr.f32.mxu0 0.0
  %3509 = vmatmul.mubr.f32.gmra.mxu0 %v3371
  %v3510 = vpop.f32.mrf.mxu0
  %v3511 = vadd.f32 0.0, %v3510
  %v3512 = vpop.f32.mrf.mxu0
  %3513 = vdwg.mxu0
  %v3515 = vrot.slane %v3440, 4
  %v3517 = vadd.f32 %v353, %v3515
  %v3518 = vxor.u32 %v3517, 2147483648
  %v3519 = vmul.f32 %v3518, 1.442695
  %v3520 = vpow.pop %v3519
  %v3521 = vadd.f32 %v3520, 1.0
  %v3522 = vrcp.pop %v3521
  %v3523 = vmul.f32 1.0, %v3522
  %v3525 = vrot.slane %v3442, 4
  %v3527 = vadd.f32 %v355, %v3525
  %v3528 = vxor.u32 %v3527, 2147483648
  %v3529 = vmul.f32 %v3528, 1.442695
  %v3530 = vpow.pop %v3529
  %v3531 = vadd.f32 %v3530, 1.0
  %v3532 = vrcp.pop %v3531
  %v3533 = vmul.f32 1.0, %v3532
  %v3534 = vadd.f32 %v3511, %v545
  %v3536 = vrot.slane %v3534, 4
  %v3538 = vmul.f32 %v3523, %v3536
  %v3539 = vadd.f32 %v434, %v3538
  %v3540 = vtanh.pop %v3539
  %v3541 = vsub.f32 1.0, %v3533
  %v3542 = vmul.f32 %v3541, %v3540
  %v3543 = vrot.slane %v3369, 6
  %v3545 = vmul.f32 %v3533, %v3543
  %v3546 = vadd.f32 %v3542, %v3545
  %v3548 = vrot.slane %v3546, 4
  %3550 = vmatprep.subr.mxu0 %v531
  %3551 = vmatpush1.msra.mxu0 %v530
  %3552 = vmatprep.subr.mxu0 %v528
  %3553 = vmatpush1.msra.mxu0 %v527
  %3554 = vmatprep.subr.mxu0 %v525
  %3555 = vmatpush1.msra.mxu0 %v524
  %3556 = vmatprep.subr.mxu0 %v522
  %3557 = vmatpush1.msra.mxu0 %v521
  %3558 = vmatprep.subr.mxu0 %v519
  %3559 = vmatpush1.msra.mxu0 %v518
  %3560 = vmatprep.subr.mxu0 %v516
  %3561 = vmatpush1.msra.mxu0 %v515
  %3562 = vmatprep.subr.mxu0 %v513
  %3563 = vmatpush1.msra.mxu0 %v512
  %3564 = vmatprep.subr.mxu0 %v510
  %3565 = vmatpush1.msra.mxu0 %v509
  %3566 = vmatprep.subr.mxu0 %v507
  %3567 = vmatpush1.msra.mxu0 %v506
  %3568 = vmatprep.subr.mxu0 %v504
  %3569 = vmatpush1.msra.mxu0 %v503
  %3570 = vmatprep.subr.mxu0 %v501
  %3571 = vmatpush1.msra.mxu0 %v500
  %3572 = vmatprep.subr.mxu0 %v498
  %3573 = vmatpush1.msra.mxu0 %v497
  %3574 = vmatprep.subr.mxu0 %v495
  %3575 = vmatpush1.msra.mxu0 %v494
  %3576 = vmatprep.subr.mxu0 %v492
  %3577 = vmatpush1.msra.mxu0 %v491
  %3578 = vmatprep.subr.mxu0 %v489
  %3579 = vmatpush1.msra.mxu0 %v488
  %3580 = vmatprep.subr.mxu0 %v486
  %3581 = vmatpush1.msra.mxu0 %v485
  %3582 = vmatprep.subr.mxu0 0.0
  %3583 = vmatpush2.msra.mxu0 0.0
  %3584 = vmatprep.subr.mxu0 0.0
  %3585 = vmatpush2.msra.mxu0 0.0
  %3586 = vmatprep.subr.mxu0 0.0
  %3587 = vmatpush2.msra.mxu0 0.0
  %3588 = vmatprep.subr.mxu0 0.0
  %3589 = vmatpush2.msra.mxu0 0.0
  %3590 = vmatprep.subr.mxu0 0.0
  %3591 = vmatpush2.msra.mxu0 0.0
  %3592 = vmatprep.subr.mxu0 0.0
  %3593 = vmatpush2.msra.mxu0 0.0
  %3594 = vmatprep.subr.mxu0 0.0
  %3595 = vmatpush2.msra.mxu0 0.0
  %3596 = vmatprep.subr.mxu0 0.0
  %3597 = vmatpush2.msra.mxu0 0.0
  %3598 = vmatprep.subr.mxu0 0.0
  %3599 = vmatpush2.msra.mxu0 0.0
  %3600 = vmatprep.subr.mxu0 0.0
  %3601 = vmatpush2.msra.mxu0 0.0
  %3602 = vmatprep.subr.mxu0 0.0
  %3603 = vmatpush2.msra.mxu0 0.0
  %3604 = vmatprep.subr.mxu0 0.0
  %3605 = vmatpush2.msra.mxu0 0.0
  %3606 = vmatprep.subr.mxu0 0.0
  %3607 = vmatpush2.msra.mxu0 0.0
  %3608 = vmatprep.subr.mxu0 0.0
  %3609 = vmatpush2.msra.mxu0 0.0
  %3610 = vmatprep.subr.mxu0 0.0
  %3611 = vmatpush2.msra.mxu0 0.0
  %3612 = vmatprep.subr.mxu0 0.0
  %3613 = vmatpush2.msra.mxu0 0.0
  %3614 = vmatprep.mubr.f32.mxu0 0.0
  %3615 = vmatmul.mubr.f32.gmra.mxu0 %v3548
  %v3616 = vpop.f32.mrf.mxu0
  %v3617 = vadd.f32 0.0, %v3616
  %v3618 = vpop.f32.mrf.mxu0
  %v3619 = vadd.f32 0.0, %v3618
  %3620 = vdwg.mxu0
  %3621 = vmatprep.subr.mxu0 0.0
  %3622 = vmatpush1.msra.mxu0 %v532
  %3623 = vmatprep.subr.mxu0 0.0
  %3624 = vmatpush1.msra.mxu0 %v529
  %3625 = vmatprep.subr.mxu0 0.0
  %3626 = vmatpush1.msra.mxu0 %v526
  %3627 = vmatprep.subr.mxu0 0.0
  %3628 = vmatpush1.msra.mxu0 %v523
  %3629 = vmatprep.subr.mxu0 0.0
  %3630 = vmatpush1.msra.mxu0 %v520
  %3631 = vmatprep.subr.mxu0 0.0
  %3632 = vmatpush1.msra.mxu0 %v517
  %3633 = vmatprep.subr.mxu0 0.0
  %3634 = vmatpush1.msra.mxu0 %v514
  %3635 = vmatprep.subr.mxu0 0.0
  %3636 = vmatpush1.msra.mxu0 %v511
  %3637 = vmatprep.subr.mxu0 0.0
  %3638 = vmatpush1.msra.mxu0 %v508
  %3639 = vmatprep.subr.mxu0 0.0
  %3640 = vmatpush1.msra.mxu0 %v505
  %3641 = vmatprep.subr.mxu0 0.0
  %3642 = vmatpush1.msra.mxu0 %v502
  %3643 = vmatprep.subr.mxu0 0.0
  %3644 = vmatpush1.msra.mxu0 %v499
  %3645 = vmatprep.subr.mxu0 0.0
  %3646 = vmatpush1.msra.mxu0 %v496
  %3647 = vmatprep.subr.mxu0 0.0
  %3648 = vmatpush1.msra.mxu0 %v493
  %3649 = vmatprep.subr.mxu0 0.0
  %3650 = vmatpush1.msra.mxu0 %v490
  %3651 = vmatprep.subr.mxu0 0.0
  %3652 = vmatpush1.msra.mxu0 %v487
  %3653 = vmatprep.subr.mxu0 0.0
  %3654 = vmatpush2.msra.mxu0 0.0
  %3655 = vmatprep.subr.mxu0 0.0
  %3656 = vmatpush2.msra.mxu0 0.0
  %3657 = vmatprep.subr.mxu0 0.0
  %3658 = vmatpush2.msra.mxu0 0.0
  %3659 = vmatprep.subr.mxu0 0.0
  %3660 = vmatpush2.msra.mxu0 0.0
  %3661 = vmatprep.subr.mxu0 0.0
  %3662 = vmatpush2.msra.mxu0 0.0
  %3663 = vmatprep.subr.mxu0 0.0
  %3664 = vmatpush2.msra.mxu0 0.0
  %3665 = vmatprep.subr.mxu0 0.0
  %3666 = vmatpush2.msra.mxu0 0.0
  %3667 = vmatprep.subr.mxu0 0.0
  %3668 = vmatpush2.msra.mxu0 0.0
  %3669 = vmatprep.subr.mxu0 0.0
  %3670 = vmatpush2.msra.mxu0 0.0
  %3671 = vmatprep.subr.mxu0 0.0
  %3672 = vmatpush2.msra.mxu0 0.0
  %3673 = vmatprep.subr.mxu0 0.0
  %3674 = vmatpush2.msra.mxu0 0.0
  %3675 = vmatprep.subr.mxu0 0.0
  %3676 = vmatpush2.msra.mxu0 0.0
  %3677 = vmatprep.subr.mxu0 0.0
  %3678 = vmatpush2.msra.mxu0 0.0
  %3679 = vmatprep.subr.mxu0 0.0
  %3680 = vmatpush2.msra.mxu0 0.0
  %3681 = vmatprep.subr.mxu0 0.0
  %3682 = vmatpush2.msra.mxu0 0.0
  %3683 = vmatprep.subr.mxu0 0.0
  %3684 = vmatpush2.msra.mxu0 0.0
  %3685 = vmatprep.mubr.f32.mxu0 0.0
  %3686 = vmatmul.mubr.f32.gmra.mxu0 %v3548
  %v3687 = vpop.f32.mrf.mxu0
  %v3688 = vadd.f32 0.0, %v3687
  %v3689 = vpop.f32.mrf.mxu0
  %3690 = vdwg.mxu0
  %v3692 = vrot.slane %v3617, 2
  %v3694 = vadd.f32 %v353, %v3692
  %v3695 = vxor.u32 %v3694, 2147483648
  %v3696 = vmul.f32 %v3695, 1.442695
  %v3697 = vpow.pop %v3696
  %v3698 = vadd.f32 %v3697, 1.0
  %v3699 = vrcp.pop %v3698
  %v3700 = vmul.f32 1.0, %v3699
  %v3702 = vrot.slane %v3619, 2
  %v3704 = vadd.f32 %v355, %v3702
  %v3705 = vxor.u32 %v3704, 2147483648
  %v3706 = vmul.f32 %v3705, 1.442695
  %v3707 = vpow.pop %v3706
  %v3708 = vadd.f32 %v3707, 1.0
  %v3709 = vrcp.pop %v3708
  %v3710 = vmul.f32 1.0, %v3709
  %v3711 = vadd.f32 %v3688, %v545
  %v3713 = vrot.slane %v3711, 2
  %v3715 = vmul.f32 %v3700, %v3713
  %v3716 = vadd.f32 %v434, %v3715
  %v3717 = vtanh.pop %v3716
  %v3718 = vsub.f32 1.0, %v3710
  %v3719 = vmul.f32 %v3718, %v3717
  %v3720 = vrot.slane %v3546, 6
  %v3722 = vmul.f32 %v3710, %v3720
  %v3723 = vadd.f32 %v3719, %v3722
  %v3724 = vld [vmem:[%s10] sm:$0x1]
  %v3725 = vlaneseq
  %v3726 = vshrl.u32 %v3725, 7
  %v3727 = vsub.s32 0, %v3726
  %v3728 = vrot.slane %v3724, %v3727
  %v3729 = vmul.f32 %v2851, %v3728
  %vm3730 = vcmask 1047558
  %v3731 = vsel %vm3730, %v3729, 0.0
  %3732 = vadd.xlane.f32.xlu0 %v3731
  %v3733 = vpop.xlane.xlu0 %3732
  %v3734 = vld [vmem:[%s10 + $0x1] sm:$0x1]
  %v3735 = vlaneseq
  %v3736 = vshrl.u32 %v3735, 7
  %v3737 = vsub.s32 0, %v3736
  %v3738 = vrot.slane %v3734, %v3737
  %v3739 = vmul.f32 %v3723, %v3738
  %v3740 = vsel %vm3730, %v3739, 0.0
  %3741 = vadd.xlane.f32.xlu0 %v3740
  %v3742 = vpop.xlane.xlu0 %3741
  %v3743 = vadd.f32 %v3733, %v3742
  %v3744 = vld [vmem:[#allocation2] sm:$0x1]
  %v3746 = vlaneseq
  %v3747 = vshrl.u32 %v3746, 7
  %v3748 = vsub.s32 0, %v3747
  %v3749 = vrot.slane %v3744, %v3748
  %v3751 = vadd.f32 %v3743, %v3749
  %vm3752 = vcmask 7174
  %3753 = vst.msk [vmem:[%s12 - $0x6] sm:$0xc0] %vm3752, %v3751
  // Predicated region
  $region50: #{fake_news_rnn_classifier.1} parent=0 // pred_check
    _
  $region51: #{fake_news_rnn_classifier.1} parent=0 // pred_check_branch
    %3755 = sbr.rel (0) target = $region53
  $region52: #{fake_news_rnn_classifier.1} parent=0 // pred_region
    _
  $region53: #{fake_news_rnn_classifier.1} parent=0 // pred_fallthru
    _
  // Predicated region
  $region54: #{fake_news_rnn_classifier.1} parent=0 // pred_check
    _
  $region55: #{fake_news_rnn_classifier.1} parent=0 // pred_check_branch
    %3757 = sbr.rel (0) target = $region57
  $region56: #{fake_news_rnn_classifier.1} parent=0 // pred_region
    _
  $region57: #{fake_news_rnn_classifier.1} parent=0 // pred_fallthru
    _

</llo_original>
